<compile_context>
chip_gen: v7x
topology: tpu7x:2x2x1
jax: 0.10.0
libtpu: 0.0.40
codegen_flags: <defaults>
</compile_context>

<pallas_src>
import jax
import jax.numpy as jnp
from jax import lax
from jax.experimental import pallas as pl
from jax.experimental.pallas import tpu as pltpu

C_IN = 2                    # GPGraph in_channels
OUT_CH = 5                  # out_channels
OBS_LEN = 8                 # obs_seq_len
PRED_LEN = 12               # pred_seq_len
HID_GRP = 8                 # GroupGenerator hid_channels (GPGraph passes hid_channels=8)
KH = 3                      # group_cnn kernel height (time axis), padding 1
N_MIX = 3                   # original + inter-group + intra-group
F_IN = OBS_LEN * C_IN       # 16 per-node input features for the synthetic baseline
F_OUT = OUT_CH * PRED_LEN   # 60 per-node outputs
LANE = 128                  # TPU lane width; 60-wide dims are zero-padded to this


def _vmem():
    return pl.BlockSpec(memory_space=pltpu.MemorySpace.VMEM)


def _smem():
    return pl.BlockSpec(memory_space=pltpu.MemorySpace.SMEM)


# ----------------------------- fused Pallas kernel ------------------------------

def _gpgraph_kernel(th_ref, alpha_ref, xabs_ref, vrel_ref, wg_ref, bg_ref,
                    wb_ref, bb_ref, wm0_ref, wm12_ref, bm_ref,
                    out_ref, idx_ref, dist_sc):
    # th, alpha : (1,1) SMEM learned scalars (distance threshold, PReLU slope)
    # xabs      : (C, T*N)   v_abs slab, col = t*N + n
    # vrel      : (C*T, N)   v_rel slab, row = c*T + t
    # wg        : (HID, KH*C) group conv weight, col = kt*C + c ;  bg: (HID, 1)
    # wb        : (F_IN, 128) baseline weight (60 cols used)     ;  bb: (1, 128)
    # wm0/wm12  : (128, 128)  mix weight blocks (zero padded)    ;  bm: (1, 128)
    # out       : (N, 128)   lane-dense output, col = t*OUT_CH + c
    # idx       : (1, N) int32 group indices (sorted-unique remapped)
    # dist_sc   : (N, N) f32 VMEM scratch (scalar-read by the relabel loop)
    n = vrel_ref.shape[1]
    tn = xabs_ref.shape[1]                       # T * N
    th = th_ref[0, 0]
    alpha = alpha_ref[0, 0]

    # ---- GroupGenerator: Conv2d(C, HID, (3,1), padding=(1,0)) via time-shifted slabs ----
    x = xabs_ref[...]                                                   # (C, T*N)
    zpad = jnp.zeros((C_IN, n), jnp.float32)
    x_prev = jnp.concatenate([zpad, x[:, :tn - n]], axis=1)             # time t-1 (zero @ t=0)
    x_next = jnp.concatenate([x[:, n:], zpad], axis=1)                  # time t+1 (zero @ t=T-1)
    wg = wg_ref[...]
    f = (jnp.dot(wg[:, 0 * C_IN:1 * C_IN], x_prev, preferred_element_type=jnp.float32)
         + jnp.dot(wg[:, 1 * C_IN:2 * C_IN], x, preferred_element_type=jnp.float32)
         + jnp.dot(wg[:, 2 * C_IN:3 * C_IN], x_next, preferred_element_type=jnp.float32)
         + bg_ref[...])                                                 # (HID, T*N)

    # ---- dist_mat[i,j] = mean_t || f_t[:,i] - f_t[:,j] ||_2 (norms hoisted, no eye mask) --
    ff = f * f
    sq_row = jnp.sum(ff, axis=0, keepdims=True)                         # (1, T*N)
    ones_h = jnp.ones((HID_GRP, 1), jnp.float32)
    sq_col = lax.dot_general(ff, ones_h, (((0,), (0,)), ((), ())),
                             preferred_element_type=jnp.float32)        # (T*N, 1)
    acc = jnp.zeros((n, n), jnp.float32)
    for t in range(OBS_LEN):
        ft = f[:, t * n:(t + 1) * n]                                    # (HID, N)
        g = lax.dot_general(ft, ft, (((0,), (0,)), ((), ())),
                            preferred_element_type=jnp.float32)         # Gram (N, N)
        d2 = sq_col[t * n:(t + 1) * n, :] + sq_row[:, t * n:(t + 1) * n] - 2.0 * g
        acc = acc + jnp.sqrt(jnp.maximum(d2, 0.0))                      # clamp rounding
    dist_sc[...] = acc * (1.0 / OBS_LEN)

    # ---- find_group_indices: sequential relabel on the scalar unit ----
    # reference order: lower-triangular pairs, row-major (r asc, c asc), gated by
    # dist[r,c] <= th, update:  labels[labels == labels[r]] = c   (raw column index c).
    conds = {}
    for r in range(1, n):                                                # off the serial chain
        for c in range(r):
            conds[(r, c)] = dist_sc[r, c] <= th
    labels = [jnp.int32(k) for k in range(n)]
    for r in range(1, n):
        for c in range(r):
            cond = conds[(r, c)]
            lab_r = labels[r]
            labels = [jnp.where(jnp.logical_and(cond, labels[k] == lab_r),
                                jnp.int32(c), labels[k])
                      for k in range(n)]

    # ---- splat scalar labels back into vectors for the group mask + remap ----
    lane = lax.broadcasted_iota(jnp.int32, (n, n), 1)
    sub = lax.broadcasted_iota(jnp.int32, (n, n), 0)
    row_lab = jnp.zeros((n, n), jnp.int32)                               # [i, j] = labels[j]
    col_lab = jnp.zeros((n, n), jnp.int32)                               # [i, j] = labels[i]
    for k in range(n):
        row_lab = row_lab + jnp.where(lane == k, labels[k], 0)
        col_lab = col_lab + jnp.where(sub == k, labels[k], 0)

    same = (row_lab == col_lab).astype(jnp.float32)                      # same-group mask
    deg = jnp.sum(same, axis=1, keepdims=True)                           # >= 1 (diagonal)
    adj = same / deg                                                     # row-normalized

    # remap raw labels to consecutive ids in sorted-unique order:
    # final[j] = #{distinct present raw labels < labels[j]}
    eq = (row_lab == sub).astype(jnp.float32)                            # [u, j] = (labels[j]==u)
    present = jnp.minimum(jnp.sum(eq, axis=1, keepdims=True), 1.0)       # (N, 1)
    lt = (sub < row_lab).astype(jnp.float32)                             # [u, j] = u < labels[j]
    rank = jnp.sum(present * lt, axis=0, keepdims=True)                  # (1, N)
    idx_ref[...] = rank.astype(jnp.int32)

    # ---- baselines (original / inter-group / intra-group) + GroupIntegrator('mlp') ----
    out0 = lax.dot_general(vrel_ref[...], wb_ref[...], (((0,), (0,)), ((), ())),
                           preferred_element_type=jnp.float32) + bb_ref[...]     # (N, 128)
    outg = jnp.dot(adj, out0, preferred_element_type=jnp.float32)        # group-mean branch
    mean = (out0 + 2.0 * outg) * (1.0 / 3.0)                             # stack([o,g,g]).mean(0)

    # mix = Conv1x1(PReLU(cat([orig, inter, intra]))) ; inter == intra -> branches folded
    p0 = jnp.maximum(out0, 0.0) + alpha * jnp.minimum(out0, 0.0)
    pg = jnp.maximum(outg, 0.0) + alpha * jnp.minimum(outg, 0.0)
    mix = (jnp.dot(p0, wm0_ref[...], preferred_element_type=jnp.float32)
           + jnp.dot(pg, wm12_ref[...], preferred_element_type=jnp.float32)
           + bm_ref[...])
    out_ref[...] = mean + mix


# ----------------------------- forward (jit-able glue) -----------------------

def gpgraph_forward(params, v_abs, v_rel):
    assert v_abs.shape[0] == 1 and v_rel.shape[0] == 1
    n = v_rel.shape[-1]
    x_abs = v_abs.reshape(C_IN, OBS_LEN * n)            # (C, T*N),  col = t*N + n
    x_rel = v_rel.reshape(C_IN * OBS_LEN, n)            # (C*T, N),  row = c*T + t

    out_pad, idx2d = pl.pallas_call(
        _gpgraph_kernel,
        out_shape=(jax.ShapeDtypeStruct((n, LANE), jnp.float32),
                   jax.ShapeDtypeStruct((1, n), jnp.int32)),
        in_specs=[_smem(), _smem()] + [_vmem()] * 9,
        out_specs=(_vmem(), _vmem()),
        scratch_shapes=[pltpu.VMEM((n, n), jnp.float32)],
    )(params["th"], params["alpha"], x_abs, x_rel,
      params["w_grp"], params["b_grp"],
      params["w_base"], params["b_base"],
      params["w_mix0"], params["w_mix12"], params["b_mix"])

    out60 = out_pad[:, :F_OUT]                                           # (N, 60), col = t*OUT_CH + c
    v_out = jnp.transpose(out60.reshape(n, PRED_LEN, OUT_CH), (2, 1, 0))[None]   # (1,5,12,N)
    return v_out, idx2d[0]


# ----------------------------- parameters (padded / laid out ONCE) -----------

def init_params(key):
    ks = jax.random.split(key, 6)
    # Conv2d(2, 8, (3,1), padding=(1,0)) -> (HID, KH*C), col = kt*C + c
    w_conv = jax.random.normal(ks[0], (HID_GRP, C_IN, KH), jnp.float32) * 0.3
    w_grp = jnp.transpose(w_conv, (0, 2, 1)).reshape(HID_GRP, KH * C_IN)
    b_grp = (jax.random.normal(ks[1], (HID_GRP,), jnp.float32) * 0.1).reshape(HID_GRP, 1)
    # synthetic per-node affine baseline, feature rows f = c*T + t (matches v_rel.reshape)
    w_base = jax.random.normal(ks[2], (F_IN, F_OUT), jnp.float32) * 0.2
    b_base = jax.random.normal(ks[3], (F_OUT,), jnp.float32) * 0.05
    # GroupIntegrator 'mlp' 1x1 conv, (in = 3*F_OUT, out = F_OUT) layout + bias
    w_mix = jax.random.normal(ks[4], (N_MIX * F_OUT, F_OUT), jnp.float32) * 0.05
    b_mix = jax.random.normal(ks[5], (F_OUT,), jnp.float32) * 0.05

    pad_o = LANE - F_OUT
    w_base_p = jnp.pad(w_base, ((0, 0), (0, pad_o)))                         # (16, 128)
    b_base_p = jnp.pad(b_base.reshape(1, F_OUT), ((0, 0), (0, pad_o)))       # (1, 128)
    w_mix0_p = jnp.pad(w_mix[0:F_OUT], ((0, pad_o), (0, pad_o)))             # (128, 128)
    w_mix12_p = jnp.pad(w_mix[F_OUT:2 * F_OUT] + w_mix[2 * F_OUT:3 * F_OUT],
                        ((0, pad_o), (0, pad_o)))                            # folded branches
    b_mix_p = jnp.pad(b_mix.reshape(1, F_OUT), ((0, 0), (0, pad_o)))         # (1, 128)

    return {
        "w_grp": w_grp,
        "b_grp": b_grp,
        "th": jnp.full((1, 1), 1.0, jnp.float32),        # d_th='learned' -> Parameter([1])
        "alpha": jnp.full((1, 1), 0.25, jnp.float32),    # PReLU init
        "w_base": w_base_p,
        "b_base": b_base_p,
        "w_mix0": w_mix0_p,
        "w_mix12": w_mix12_p,
        "b_mix": b_mix_p,
    }


# ----------------------------- main -------------------------------------------

if __name__ == "__main__":
    key = jax.random.PRNGKey(0)
    kp, ka, kr = jax.random.split(key, 3)
    params = init_params(kp)

    N_PED = 8
    v_abs = jax.random.normal(ka, (1, C_IN, OBS_LEN, N_PED), jnp.float32)
    v_rel = jax.random.normal(kr, (1, C_IN, OBS_LEN, N_PED), jnp.float32) * 0.1

    fwd = jax.jit(gpgraph_forward)
    v_out, indices = fwd(params, v_abs, v_rel)
    v_out = jax.block_until_ready(v_out)
    indices = jax.block_until_ready(indices)

    assert v_out.shape == (1, OUT_CH, PRED_LEN, N_PED)
    assert indices.shape == (N_PED,)
    print("KERNEL_OK")
</pallas_src>

<mosaic_0001>
module attributes {stable_mosaic.version = 11 : i64} {
  func.func @_gpgraph_kernel(%arg0: memref<1x1xf32, #tpu.memory_space<smem>>, %arg1: memref<1x1xf32, #tpu.memory_space<smem>>, %arg2: memref<2x64xf32, #tpu.memory_space<vmem>>, %arg3: memref<16x8xf32, #tpu.memory_space<vmem>>, %arg4: memref<8x6xf32, #tpu.memory_space<vmem>>, %arg5: memref<8x1xf32, #tpu.memory_space<vmem>>, %arg6: memref<16x128xf32, #tpu.memory_space<vmem>>, %arg7: memref<1x128xf32, #tpu.memory_space<vmem>>, %arg8: memref<128x128xf32, #tpu.memory_space<vmem>>, %arg9: memref<128x128xf32, #tpu.memory_space<vmem>>, %arg10: memref<1x128xf32, #tpu.memory_space<vmem>>, %arg11: memref<8x128xf32, #tpu.memory_space<vmem>>, %arg12: memref<1x8xi32, #tpu.memory_space<vmem>>, %arg13: memref<8x8xf32, #tpu.memory_space<vmem>>) attributes {dimension_semantics = [], scalar_prefetch = 0 : i64, scratch_operands = 1 : i64, tpu.core_type = #tpu.core_type<tc>} {
    %c0 = arith.constant 0 : index
    %c0_0 = arith.constant 0 : index
    %0 = memref.load %arg0[%c0, %c0_0] : memref<1x1xf32, #tpu.memory_space<smem>>
    %c0_1 = arith.constant 0 : index
    %c0_2 = arith.constant 0 : index
    %1 = memref.load %arg1[%c0_1, %c0_2] : memref<1x1xf32, #tpu.memory_space<smem>>
    %c0_3 = arith.constant 0 : index
    %c0_4 = arith.constant 0 : index
    %2 = vector.load %arg2[%c0_3, %c0_4] : memref<2x64xf32, #tpu.memory_space<vmem>>, vector<2x64xf32>
    %cst = arith.constant 0.000000e+00 : f32
    %3 = vector.broadcast %cst : f32 to vector<2x8xf32>
    %4 = vector.extract_strided_slice %2 {offsets = [0, 0], sizes = [2, 56], strides = [1, 1]} : vector<2x64xf32> to vector<2x56xf32>
    %5 = tpu.concatenate %3, %4 in 1 : vector<2x8xf32>, vector<2x56xf32> -> vector<2x64xf32>
    %6 = vector.extract_strided_slice %2 {offsets = [0, 8], sizes = [2, 56], strides = [1, 1]} : vector<2x64xf32> to vector<2x56xf32>
    %7 = tpu.concatenate %6, %3 in 1 : vector<2x56xf32>, vector<2x8xf32> -> vector<2x64xf32>
    %c0_5 = arith.constant 0 : index
    %c0_6 = arith.constant 0 : index
    %8 = vector.load %arg4[%c0_5, %c0_6] : memref<8x6xf32, #tpu.memory_space<vmem>>, vector<8x6xf32>
    %9 = vector.extract_strided_slice %8 {offsets = [0, 0], sizes = [8, 2], strides = [1, 1]} : vector<8x6xf32> to vector<8x2xf32>
    %cst_7 = arith.constant dense<0.000000e+00> : vector<8x64xf32>
    %10 = tpu.matmul %9, %5, %cst_7 {dimension_numbers = #tpu.dot_dimension_numbers<[1], [0], [0], [1], [0, 0, 1, 1], [], []>} : vector<8x2xf32>, vector<2x64xf32>, vector<8x64xf32> -> vector<8x64xf32>
    %11 = vector.extract_strided_slice %8 {offsets = [0, 2], sizes = [8, 2], strides = [1, 1]} : vector<8x6xf32> to vector<8x2xf32>
    %cst_8 = arith.constant dense<0.000000e+00> : vector<8x64xf32>
    %12 = tpu.matmul %11, %2, %cst_8 {dimension_numbers = #tpu.dot_dimension_numbers<[1], [0], [0], [1], [0, 0, 1, 1], [], []>} : vector<8x2xf32>, vector<2x64xf32>, vector<8x64xf32> -> vector<8x64xf32>
    %13 = arith.addf %10, %12 : vector<8x64xf32>
    %14 = vector.extract_strided_slice %8 {offsets = [0, 4], sizes = [8, 2], strides = [1, 1]} : vector<8x6xf32> to vector<8x2xf32>
    %cst_9 = arith.constant dense<0.000000e+00> : vector<8x64xf32>
    %15 = tpu.matmul %14, %7, %cst_9 {dimension_numbers = #tpu.dot_dimension_numbers<[1], [0], [0], [1], [0, 0, 1, 1], [], []>} : vector<8x2xf32>, vector<2x64xf32>, vector<8x64xf32> -> vector<8x64xf32>
    %16 = arith.addf %13, %15 : vector<8x64xf32>
    %c0_10 = arith.constant 0 : index
    %c0_11 = arith.constant 0 : index
    %17 = vector.load %arg5[%c0_10, %c0_11] : memref<8x1xf32, #tpu.memory_space<vmem>>, vector<8x1xf32>
    %18 = vector.broadcast %17 : vector<8x1xf32> to vector<8x64xf32>
    %19 = arith.addf %16, %18 : vector<8x64xf32>
    %20 = arith.mulf %19, %19 : vector<8x64xf32>
    %cst_12 = arith.constant dense<0.000000e+00> : vector<64xf32>
    %21 = vector.multi_reduction <add>, %20, %cst_12 [0] : vector<8x64xf32> to vector<64xf32>
    %22 = vector.shape_cast %21 : vector<64xf32> to vector<1x64xf32>
    %cst_13 = arith.constant 1.000000e+00 : f32
    %23 = vector.broadcast %cst_13 : f32 to vector<8x1xf32>
    %cst_14 = arith.constant dense<0.000000e+00> : vector<64x1xf32>
    %24 = tpu.matmul %20, %23, %cst_14 {dimension_numbers = #tpu.dot_dimension_numbers<[0], [0], [1], [1], [0, 1, 1, 1], [], []>} : vector<8x64xf32>, vector<8x1xf32>, vector<64x1xf32> -> vector<64x1xf32>
    %cst_15 = arith.constant 0.000000e+00 : f32
    %25 = vector.broadcast %cst_15 : f32 to vector<8x8xf32>
    %26 = vector.extract_strided_slice %19 {offsets = [0, 0], sizes = [8, 8], strides = [1, 1]} : vector<8x64xf32> to vector<8x8xf32>
    %cst_16 = arith.constant dense<0.000000e+00> : vector<8x8xf32>
    %27 = tpu.matmul %26, %26, %cst_16 {dimension_numbers = #tpu.dot_dimension_numbers<[0], [0], [1], [1], [0, 1, 1, 1], [], []>} : vector<8x8xf32>, vector<8x8xf32>, vector<8x8xf32> -> vector<8x8xf32>
    %28 = vector.extract_strided_slice %24 {offsets = [0, 0], sizes = [8, 1], strides = [1, 1]} : vector<64x1xf32> to vector<8x1xf32>
    %29 = vector.extract_strided_slice %22 {offsets = [0, 0], sizes = [1, 8], strides = [1, 1]} : vector<1x64xf32> to vector<1x8xf32>
    %30 = vector.broadcast %28 : vector<8x1xf32> to vector<8x8xf32>
    %31 = vector.broadcast %29 : vector<1x8xf32> to vector<8x8xf32>
    %32 = arith.addf %30, %31 : vector<8x8xf32>
    %cst_17 = arith.constant 2.000000e+00 : f32
    %33 = vector.broadcast %cst_17 : f32 to vector<8x8xf32>
    %34 = arith.mulf %33, %27 : vector<8x8xf32>
    %35 = arith.subf %32, %34 : vector<8x8xf32>
    %cst_18 = arith.constant 0.000000e+00 : f32
    %36 = vector.broadcast %cst_18 : f32 to vector<8x8xf32>
    %37 = arith.maximumf %35, %36 : vector<8x8xf32>
    %38 = math.sqrt %37 : vector<8x8xf32>
    %39 = arith.addf %25, %38 : vector<8x8xf32>
    %40 = vector.extract_strided_slice %19 {offsets = [0, 8], sizes = [8, 8], strides = [1, 1]} : vector<8x64xf32> to vector<8x8xf32>
    %cst_19 = arith.constant dense<0.000000e+00> : vector<8x8xf32>
    %41 = tpu.matmul %40, %40, %cst_19 {dimension_numbers = #tpu.dot_dimension_numbers<[0], [0], [1], [1], [0, 1, 1, 1], [], []>} : vector<8x8xf32>, vector<8x8xf32>, vector<8x8xf32> -> vector<8x8xf32>
    %42 = vector.extract_strided_slice %24 {offsets = [8, 0], sizes = [8, 1], strides = [1, 1]} : vector<64x1xf32> to vector<8x1xf32>
    %43 = vector.extract_strided_slice %22 {offsets = [0, 8], sizes = [1, 8], strides = [1, 1]} : vector<1x64xf32> to vector<1x8xf32>
    %44 = vector.broadcast %42 : vector<8x1xf32> to vector<8x8xf32>
    %45 = vector.broadcast %43 : vector<1x8xf32> to vector<8x8xf32>
    %46 = arith.addf %44, %45 : vector<8x8xf32>
    %cst_20 = arith.constant 2.000000e+00 : f32
    %47 = vector.broadcast %cst_20 : f32 to vector<8x8xf32>
    %48 = arith.mulf %47, %41 : vector<8x8xf32>
    %49 = arith.subf %46, %48 : vector<8x8xf32>
    %cst_21 = arith.constant 0.000000e+00 : f32
    %50 = vector.broadcast %cst_21 : f32 to vector<8x8xf32>
    %51 = arith.maximumf %49, %50 : vector<8x8xf32>
    %52 = math.sqrt %51 : vector<8x8xf32>
    %53 = arith.addf %39, %52 : vector<8x8xf32>
    %54 = vector.extract_strided_slice %19 {offsets = [0, 16], sizes = [8, 8], strides = [1, 1]} : vector<8x64xf32> to vector<8x8xf32>
    %cst_22 = arith.constant dense<0.000000e+00> : vector<8x8xf32>
    %55 = tpu.matmul %54, %54, %cst_22 {dimension_numbers = #tpu.dot_dimension_numbers<[0], [0], [1], [1], [0, 1, 1, 1], [], []>} : vector<8x8xf32>, vector<8x8xf32>, vector<8x8xf32> -> vector<8x8xf32>
    %56 = vector.extract_strided_slice %24 {offsets = [16, 0], sizes = [8, 1], strides = [1, 1]} : vector<64x1xf32> to vector<8x1xf32>
    %57 = vector.extract_strided_slice %22 {offsets = [0, 16], sizes = [1, 8], strides = [1, 1]} : vector<1x64xf32> to vector<1x8xf32>
    %58 = vector.broadcast %56 : vector<8x1xf32> to vector<8x8xf32>
    %59 = vector.broadcast %57 : vector<1x8xf32> to vector<8x8xf32>
    %60 = arith.addf %58, %59 : vector<8x8xf32>
    %cst_23 = arith.constant 2.000000e+00 : f32
    %61 = vector.broadcast %cst_23 : f32 to vector<8x8xf32>
    %62 = arith.mulf %61, %55 : vector<8x8xf32>
    %63 = arith.subf %60, %62 : vector<8x8xf32>
    %cst_24 = arith.constant 0.000000e+00 : f32
    %64 = vector.broadcast %cst_24 : f32 to vector<8x8xf32>
    %65 = arith.maximumf %63, %64 : vector<8x8xf32>
    %66 = math.sqrt %65 : vector<8x8xf32>
    %67 = arith.addf %53, %66 : vector<8x8xf32>
    %68 = vector.extract_strided_slice %19 {offsets = [0, 24], sizes = [8, 8], strides = [1, 1]} : vector<8x64xf32> to vector<8x8xf32>
    %cst_25 = arith.constant dense<0.000000e+00> : vector<8x8xf32>
    %69 = tpu.matmul %68, %68, %cst_25 {dimension_numbers = #tpu.dot_dimension_numbers<[0], [0], [1], [1], [0, 1, 1, 1], [], []>} : vector<8x8xf32>, vector<8x8xf32>, vector<8x8xf32> -> vector<8x8xf32>
    %70 = vector.extract_strided_slice %24 {offsets = [24, 0], sizes = [8, 1], strides = [1, 1]} : vector<64x1xf32> to vector<8x1xf32>
    %71 = vector.extract_strided_slice %22 {offsets = [0, 24], sizes = [1, 8], strides = [1, 1]} : vector<1x64xf32> to vector<1x8xf32>
    %72 = vector.broadcast %70 : vector<8x1xf32> to vector<8x8xf32>
    %73 = vector.broadcast %71 : vector<1x8xf32> to vector<8x8xf32>
    %74 = arith.addf %72, %73 : vector<8x8xf32>
    %cst_26 = arith.constant 2.000000e+00 : f32
    %75 = vector.broadcast %cst_26 : f32 to vector<8x8xf32>
    %76 = arith.mulf %75, %69 : vector<8x8xf32>
    %77 = arith.subf %74, %76 : vector<8x8xf32>
    %cst_27 = arith.constant 0.000000e+00 : f32
    %78 = vector.broadcast %cst_27 : f32 to vector<8x8xf32>
    %79 = arith.maximumf %77, %78 : vector<8x8xf32>
    %80 = math.sqrt %79 : vector<8x8xf32>
    %81 = arith.addf %67, %80 : vector<8x8xf32>
    %82 = vector.extract_strided_slice %19 {offsets = [0, 32], sizes = [8, 8], strides = [1, 1]} : vector<8x64xf32> to vector<8x8xf32>
    %cst_28 = arith.constant dense<0.000000e+00> : vector<8x8xf32>
    %83 = tpu.matmul %82, %82, %cst_28 {dimension_numbers = #tpu.dot_dimension_numbers<[0], [0], [1], [1], [0, 1, 1, 1], [], []>} : vector<8x8xf32>, vector<8x8xf32>, vector<8x8xf32> -> vector<8x8xf32>
    %84 = vector.extract_strided_slice %24 {offsets = [32, 0], sizes = [8, 1], strides = [1, 1]} : vector<64x1xf32> to vector<8x1xf32>
    %85 = vector.extract_strided_slice %22 {offsets = [0, 32], sizes = [1, 8], strides = [1, 1]} : vector<1x64xf32> to vector<1x8xf32>
    %86 = vector.broadcast %84 : vector<8x1xf32> to vector<8x8xf32>
    %87 = vector.broadcast %85 : vector<1x8xf32> to vector<8x8xf32>
    %88 = arith.addf %86, %87 : vector<8x8xf32>
    %cst_29 = arith.constant 2.000000e+00 : f32
    %89 = vector.broadcast %cst_29 : f32 to vector<8x8xf32>
    %90 = arith.mulf %89, %83 : vector<8x8xf32>
    %91 = arith.subf %88, %90 : vector<8x8xf32>
    %cst_30 = arith.constant 0.000000e+00 : f32
    %92 = vector.broadcast %cst_30 : f32 to vector<8x8xf32>
    %93 = arith.maximumf %91, %92 : vector<8x8xf32>
    %94 = math.sqrt %93 : vector<8x8xf32>
    %95 = arith.addf %81, %94 : vector<8x8xf32>
    %96 = vector.extract_strided_slice %19 {offsets = [0, 40], sizes = [8, 8], strides = [1, 1]} : vector<8x64xf32> to vector<8x8xf32>
    %cst_31 = arith.constant dense<0.000000e+00> : vector<8x8xf32>
    %97 = tpu.matmul %96, %96, %cst_31 {dimension_numbers = #tpu.dot_dimension_numbers<[0], [0], [1], [1], [0, 1, 1, 1], [], []>} : vector<8x8xf32>, vector<8x8xf32>, vector<8x8xf32> -> vector<8x8xf32>
    %98 = vector.extract_strided_slice %24 {offsets = [40, 0], sizes = [8, 1], strides = [1, 1]} : vector<64x1xf32> to vector<8x1xf32>
    %99 = vector.extract_strided_slice %22 {offsets = [0, 40], sizes = [1, 8], strides = [1, 1]} : vector<1x64xf32> to vector<1x8xf32>
    %100 = vector.broadcast %98 : vector<8x1xf32> to vector<8x8xf32>
    %101 = vector.broadcast %99 : vector<1x8xf32> to vector<8x8xf32>
    %102 = arith.addf %100, %101 : vector<8x8xf32>
    %cst_32 = arith.constant 2.000000e+00 : f32
    %103 = vector.broadcast %cst_32 : f32 to vector<8x8xf32>
    %104 = arith.mulf %103, %97 : vector<8x8xf32>
    %105 = arith.subf %102, %104 : vector<8x8xf32>
    %cst_33 = arith.constant 0.000000e+00 : f32
    %106 = vector.broadcast %cst_33 : f32 to vector<8x8xf32>
    %107 = arith.maximumf %105, %106 : vector<8x8xf32>
    %108 = math.sqrt %107 : vector<8x8xf32>
    %109 = arith.addf %95, %108 : vector<8x8xf32>
    %110 = vector.extract_strided_slice %19 {offsets = [0, 48], sizes = [8, 8], strides = [1, 1]} : vector<8x64xf32> to vector<8x8xf32>
    %cst_34 = arith.constant dense<0.000000e+00> : vector<8x8xf32>
    %111 = tpu.matmul %110, %110, %cst_34 {dimension_numbers = #tpu.dot_dimension_numbers<[0], [0], [1], [1], [0, 1, 1, 1], [], []>} : vector<8x8xf32>, vector<8x8xf32>, vector<8x8xf32> -> vector<8x8xf32>
    %112 = vector.extract_strided_slice %24 {offsets = [48, 0], sizes = [8, 1], strides = [1, 1]} : vector<64x1xf32> to vector<8x1xf32>
    %113 = vector.extract_strided_slice %22 {offsets = [0, 48], sizes = [1, 8], strides = [1, 1]} : vector<1x64xf32> to vector<1x8xf32>
    %114 = vector.broadcast %112 : vector<8x1xf32> to vector<8x8xf32>
    %115 = vector.broadcast %113 : vector<1x8xf32> to vector<8x8xf32>
    %116 = arith.addf %114, %115 : vector<8x8xf32>
    %cst_35 = arith.constant 2.000000e+00 : f32
    %117 = vector.broadcast %cst_35 : f32 to vector<8x8xf32>
    %118 = arith.mulf %117, %111 : vector<8x8xf32>
    %119 = arith.subf %116, %118 : vector<8x8xf32>
    %cst_36 = arith.constant 0.000000e+00 : f32
    %120 = vector.broadcast %cst_36 : f32 to vector<8x8xf32>
    %121 = arith.maximumf %119, %120 : vector<8x8xf32>
    %122 = math.sqrt %121 : vector<8x8xf32>
    %123 = arith.addf %109, %122 : vector<8x8xf32>
    %124 = vector.extract_strided_slice %19 {offsets = [0, 56], sizes = [8, 8], strides = [1, 1]} : vector<8x64xf32> to vector<8x8xf32>
    %cst_37 = arith.constant dense<0.000000e+00> : vector<8x8xf32>
    %125 = tpu.matmul %124, %124, %cst_37 {dimension_numbers = #tpu.dot_dimension_numbers<[0], [0], [1], [1], [0, 1, 1, 1], [], []>} : vector<8x8xf32>, vector<8x8xf32>, vector<8x8xf32> -> vector<8x8xf32>
    %126 = vector.extract_strided_slice %24 {offsets = [56, 0], sizes = [8, 1], strides = [1, 1]} : vector<64x1xf32> to vector<8x1xf32>
    %127 = vector.extract_strided_slice %22 {offsets = [0, 56], sizes = [1, 8], strides = [1, 1]} : vector<1x64xf32> to vector<1x8xf32>
    %128 = vector.broadcast %126 : vector<8x1xf32> to vector<8x8xf32>
    %129 = vector.broadcast %127 : vector<1x8xf32> to vector<8x8xf32>
    %130 = arith.addf %128, %129 : vector<8x8xf32>
    %cst_38 = arith.constant 2.000000e+00 : f32
    %131 = vector.broadcast %cst_38 : f32 to vector<8x8xf32>
    %132 = arith.mulf %131, %125 : vector<8x8xf32>
    %133 = arith.subf %130, %132 : vector<8x8xf32>
    %cst_39 = arith.constant 0.000000e+00 : f32
    %134 = vector.broadcast %cst_39 : f32 to vector<8x8xf32>
    %135 = arith.maximumf %133, %134 : vector<8x8xf32>
    %136 = math.sqrt %135 : vector<8x8xf32>
    %137 = arith.addf %123, %136 : vector<8x8xf32>
    %cst_40 = arith.constant 1.250000e-01 : f32
    %138 = vector.broadcast %cst_40 : f32 to vector<8x8xf32>
    %139 = arith.mulf %137, %138 : vector<8x8xf32>
    %c0_41 = arith.constant 0 : index
    %c0_42 = arith.constant 0 : index
    %140 = vector.load %arg13[%c0_41, %c0_42] : memref<8x8xf32, #tpu.memory_space<vmem>>, vector<8x8xf32>
    tpu.vector_store %arg13[%c0_41, %c0_42], %139 {strides = array<i32>} : memref<8x8xf32, #tpu.memory_space<vmem>>, vector<8x8xf32>,
    %c1 = arith.constant 1 : index
    %c0_43 = arith.constant 0 : index
    %141 = vector.load %arg13[%c1, %c0_43] : memref<8x8xf32, #tpu.memory_space<vmem>>, vector<1x1xf32>
    %142 = vector.extract %141[0, 0] : f32 from vector<1x1xf32>
    %143 = arith.cmpf ole, %142, %0 : f32
    %c2 = arith.constant 2 : index
    %c0_44 = arith.constant 0 : index
    %144 = vector.load %arg13[%c2, %c0_44] : memref<8x8xf32, #tpu.memory_space<vmem>>, vector<1x1xf32>
    %145 = vector.extract %144[0, 0] : f32 from vector<1x1xf32>
    %146 = arith.cmpf ole, %145, %0 : f32
    %c2_45 = arith.constant 2 : index
    %c1_46 = arith.constant 1 : index
    %147 = vector.load %arg13[%c2_45, %c1_46] : memref<8x8xf32, #tpu.memory_space<vmem>>, vector<1x1xf32>
    %148 = vector.extract %147[0, 0] : f32 from vector<1x1xf32>
    %149 = arith.cmpf ole, %148, %0 : f32
    %c3 = arith.constant 3 : index
    %c0_47 = arith.constant 0 : index
    %150 = vector.load %arg13[%c3, %c0_47] : memref<8x8xf32, #tpu.memory_space<vmem>>, vector<1x1xf32>
    %151 = vector.extract %150[0, 0] : f32 from vector<1x1xf32>
    %152 = arith.cmpf ole, %151, %0 : f32
    %c3_48 = arith.constant 3 : index
    %c1_49 = arith.constant 1 : index
    %153 = vector.load %arg13[%c3_48, %c1_49] : memref<8x8xf32, #tpu.memory_space<vmem>>, vector<1x1xf32>
    %154 = vector.extract %153[0, 0] : f32 from vector<1x1xf32>
    %155 = arith.cmpf ole, %154, %0 : f32
    %c3_50 = arith.constant 3 : index
    %c2_51 = arith.constant 2 : index
    %156 = vector.load %arg13[%c3_50, %c2_51] : memref<8x8xf32, #tpu.memory_space<vmem>>, vector<1x1xf32>
    %157 = vector.extract %156[0, 0] : f32 from vector<1x1xf32>
    %158 = arith.cmpf ole, %157, %0 : f32
    %c4 = arith.constant 4 : index
    %c0_52 = arith.constant 0 : index
    %159 = vector.load %arg13[%c4, %c0_52] : memref<8x8xf32, #tpu.memory_space<vmem>>, vector<1x1xf32>
    %160 = vector.extract %159[0, 0] : f32 from vector<1x1xf32>
    %161 = arith.cmpf ole, %160, %0 : f32
    %c4_53 = arith.constant 4 : index
    %c1_54 = arith.constant 1 : index
    %162 = vector.load %arg13[%c4_53, %c1_54] : memref<8x8xf32, #tpu.memory_space<vmem>>, vector<1x1xf32>
    %163 = vector.extract %162[0, 0] : f32 from vector<1x1xf32>
    %164 = arith.cmpf ole, %163, %0 : f32
    %c4_55 = arith.constant 4 : index
    %c2_56 = arith.constant 2 : index
    %165 = vector.load %arg13[%c4_55, %c2_56] : memref<8x8xf32, #tpu.memory_space<vmem>>, vector<1x1xf32>
    %166 = vector.extract %165[0, 0] : f32 from vector<1x1xf32>
    %167 = arith.cmpf ole, %166, %0 : f32
    %c4_57 = arith.constant 4 : index
    %c3_58 = arith.constant 3 : index
    %168 = vector.load %arg13[%c4_57, %c3_58] : memref<8x8xf32, #tpu.memory_space<vmem>>, vector<1x1xf32>
    %169 = vector.extract %168[0, 0] : f32 from vector<1x1xf32>
    %170 = arith.cmpf ole, %169, %0 : f32
    %c5 = arith.constant 5 : index
    %c0_59 = arith.constant 0 : index
    %171 = vector.load %arg13[%c5, %c0_59] : memref<8x8xf32, #tpu.memory_space<vmem>>, vector<1x1xf32>
    %172 = vector.extract %171[0, 0] : f32 from vector<1x1xf32>
    %173 = arith.cmpf ole, %172, %0 : f32
    %c5_60 = arith.constant 5 : index
    %c1_61 = arith.constant 1 : index
    %174 = vector.load %arg13[%c5_60, %c1_61] : memref<8x8xf32, #tpu.memory_space<vmem>>, vector<1x1xf32>
    %175 = vector.extract %174[0, 0] : f32 from vector<1x1xf32>
    %176 = arith.cmpf ole, %175, %0 : f32
    %c5_62 = arith.constant 5 : index
    %c2_63 = arith.constant 2 : index
    %177 = vector.load %arg13[%c5_62, %c2_63] : memref<8x8xf32, #tpu.memory_space<vmem>>, vector<1x1xf32>
    %178 = vector.extract %177[0, 0] : f32 from vector<1x1xf32>
    %179 = arith.cmpf ole, %178, %0 : f32
    %c5_64 = arith.constant 5 : index
    %c3_65 = arith.constant 3 : index
    %180 = vector.load %arg13[%c5_64, %c3_65] : memref<8x8xf32, #tpu.memory_space<vmem>>, vector<1x1xf32>
    %181 = vector.extract %180[0, 0] : f32 from vector<1x1xf32>
    %182 = arith.cmpf ole, %181, %0 : f32
    %c5_66 = arith.constant 5 : index
    %c4_67 = arith.constant 4 : index
    %183 = vector.load %arg13[%c5_66, %c4_67] : memref<8x8xf32, #tpu.memory_space<vmem>>, vector<1x1xf32>
    %184 = vector.extract %183[0, 0] : f32 from vector<1x1xf32>
    %185 = arith.cmpf ole, %184, %0 : f32
    %c6 = arith.constant 6 : index
    %c0_68 = arith.constant 0 : index
    %186 = vector.load %arg13[%c6, %c0_68] : memref<8x8xf32, #tpu.memory_space<vmem>>, vector<1x1xf32>
    %187 = vector.extract %186[0, 0] : f32 from vector<1x1xf32>
    %188 = arith.cmpf ole, %187, %0 : f32
    %c6_69 = arith.constant 6 : index
    %c1_70 = arith.constant 1 : index
    %189 = vector.load %arg13[%c6_69, %c1_70] : memref<8x8xf32, #tpu.memory_space<vmem>>, vector<1x1xf32>
    %190 = vector.extract %189[0, 0] : f32 from vector<1x1xf32>
    %191 = arith.cmpf ole, %190, %0 : f32
    %c6_71 = arith.constant 6 : index
    %c2_72 = arith.constant 2 : index
    %192 = vector.load %arg13[%c6_71, %c2_72] : memref<8x8xf32, #tpu.memory_space<vmem>>, vector<1x1xf32>
    %193 = vector.extract %192[0, 0] : f32 from vector<1x1xf32>
    %194 = arith.cmpf ole, %193, %0 : f32
    %c6_73 = arith.constant 6 : index
    %c3_74 = arith.constant 3 : index
    %195 = vector.load %arg13[%c6_73, %c3_74] : memref<8x8xf32, #tpu.memory_space<vmem>>, vector<1x1xf32>
    %196 = vector.extract %195[0, 0] : f32 from vector<1x1xf32>
    %197 = arith.cmpf ole, %196, %0 : f32
    %c6_75 = arith.constant 6 : index
    %c4_76 = arith.constant 4 : index
    %198 = vector.load %arg13[%c6_75, %c4_76] : memref<8x8xf32, #tpu.memory_space<vmem>>, vector<1x1xf32>
    %199 = vector.extract %198[0, 0] : f32 from vector<1x1xf32>
    %200 = arith.cmpf ole, %199, %0 : f32
    %c6_77 = arith.constant 6 : index
    %c5_78 = arith.constant 5 : index
    %201 = vector.load %arg13[%c6_77, %c5_78] : memref<8x8xf32, #tpu.memory_space<vmem>>, vector<1x1xf32>
    %202 = vector.extract %201[0, 0] : f32 from vector<1x1xf32>
    %203 = arith.cmpf ole, %202, %0 : f32
    %c7 = arith.constant 7 : index
    %c0_79 = arith.constant 0 : index
    %204 = vector.load %arg13[%c7, %c0_79] : memref<8x8xf32, #tpu.memory_space<vmem>>, vector<1x1xf32>
    %205 = vector.extract %204[0, 0] : f32 from vector<1x1xf32>
    %206 = arith.cmpf ole, %205, %0 : f32
    %c7_80 = arith.constant 7 : index
    %c1_81 = arith.constant 1 : index
    %207 = vector.load %arg13[%c7_80, %c1_81] : memref<8x8xf32, #tpu.memory_space<vmem>>, vector<1x1xf32>
    %208 = vector.extract %207[0, 0] : f32 from vector<1x1xf32>
    %209 = arith.cmpf ole, %208, %0 : f32
    %c7_82 = arith.constant 7 : index
    %c2_83 = arith.constant 2 : index
    %210 = vector.load %arg13[%c7_82, %c2_83] : memref<8x8xf32, #tpu.memory_space<vmem>>, vector<1x1xf32>
    %211 = vector.extract %210[0, 0] : f32 from vector<1x1xf32>
    %212 = arith.cmpf ole, %211, %0 : f32
    %c7_84 = arith.constant 7 : index
    %c3_85 = arith.constant 3 : index
    %213 = vector.load %arg13[%c7_84, %c3_85] : memref<8x8xf32, #tpu.memory_space<vmem>>, vector<1x1xf32>
    %214 = vector.extract %213[0, 0] : f32 from vector<1x1xf32>
    %215 = arith.cmpf ole, %214, %0 : f32
    %c7_86 = arith.constant 7 : index
    %c4_87 = arith.constant 4 : index
    %216 = vector.load %arg13[%c7_86, %c4_87] : memref<8x8xf32, #tpu.memory_space<vmem>>, vector<1x1xf32>
    %217 = vector.extract %216[0, 0] : f32 from vector<1x1xf32>
    %218 = arith.cmpf ole, %217, %0 : f32
    %c7_88 = arith.constant 7 : index
    %c5_89 = arith.constant 5 : index
    %219 = vector.load %arg13[%c7_88, %c5_89] : memref<8x8xf32, #tpu.memory_space<vmem>>, vector<1x1xf32>
    %220 = vector.extract %219[0, 0] : f32 from vector<1x1xf32>
    %221 = arith.cmpf ole, %220, %0 : f32
    %c7_90 = arith.constant 7 : index
    %c6_91 = arith.constant 6 : index
    %222 = vector.load %arg13[%c7_90, %c6_91] : memref<8x8xf32, #tpu.memory_space<vmem>>, vector<1x1xf32>
    %223 = vector.extract %222[0, 0] : f32 from vector<1x1xf32>
    %224 = arith.cmpf ole, %223, %0 : f32
    %c0_i32 = arith.constant 0 : i32
    %c1_i32 = arith.constant 1 : i32
    %225 = arith.cmpi eq, %c0_i32, %c1_i32 : i32
    %226 = arith.andi %143, %225 : i1
    %c0_i32_92 = arith.constant 0 : i32
    %c0_i32_93 = arith.constant 0 : i32
    %227 = arith.select %226, %c0_i32_92, %c0_i32_93 : i32
    %c1_i32_94 = arith.constant 1 : i32
    %c1_i32_95 = arith.constant 1 : i32
    %228 = arith.cmpi eq, %c1_i32_94, %c1_i32_95 : i32
    %229 = arith.andi %143, %228 : i1
    %c0_i32_96 = arith.constant 0 : i32
    %c1_i32_97 = arith.constant 1 : i32
    %230 = arith.select %229, %c0_i32_96, %c1_i32_97 : i32
    %c2_i32 = arith.constant 2 : i32
    %c1_i32_98 = arith.constant 1 : i32
    %231 = arith.cmpi eq, %c2_i32, %c1_i32_98 : i32
    %232 = arith.andi %143, %231 : i1
    %c0_i32_99 = arith.constant 0 : i32
    %c2_i32_100 = arith.constant 2 : i32
    %233 = arith.select %232, %c0_i32_99, %c2_i32_100 : i32
    %c3_i32 = arith.constant 3 : i32
    %c1_i32_101 = arith.constant 1 : i32
    %234 = arith.cmpi eq, %c3_i32, %c1_i32_101 : i32
    %235 = arith.andi %143, %234 : i1
    %c0_i32_102 = arith.constant 0 : i32
    %c3_i32_103 = arith.constant 3 : i32
    %236 = arith.select %235, %c0_i32_102, %c3_i32_103 : i32
    %c4_i32 = arith.constant 4 : i32
    %c1_i32_104 = arith.constant 1 : i32
    %237 = arith.cmpi eq, %c4_i32, %c1_i32_104 : i32
    %238 = arith.andi %143, %237 : i1
    %c0_i32_105 = arith.constant 0 : i32
    %c4_i32_106 = arith.constant 4 : i32
    %239 = arith.select %238, %c0_i32_105, %c4_i32_106 : i32
    %c5_i32 = arith.constant 5 : i32
    %c1_i32_107 = arith.constant 1 : i32
    %240 = arith.cmpi eq, %c5_i32, %c1_i32_107 : i32
    %241 = arith.andi %143, %240 : i1
    %c0_i32_108 = arith.constant 0 : i32
    %c5_i32_109 = arith.constant 5 : i32
    %242 = arith.select %241, %c0_i32_108, %c5_i32_109 : i32
    %c6_i32 = arith.constant 6 : i32
    %c1_i32_110 = arith.constant 1 : i32
    %243 = arith.cmpi eq, %c6_i32, %c1_i32_110 : i32
    %244 = arith.andi %143, %243 : i1
    %c0_i32_111 = arith.constant 0 : i32
    %c6_i32_112 = arith.constant 6 : i32
    %245 = arith.select %244, %c0_i32_111, %c6_i32_112 : i32
    %c7_i32 = arith.constant 7 : i32
    %c1_i32_113 = arith.constant 1 : i32
    %246 = arith.cmpi eq, %c7_i32, %c1_i32_113 : i32
    %247 = arith.andi %143, %246 : i1
    %c0_i32_114 = arith.constant 0 : i32
    %c7_i32_115 = arith.constant 7 : i32
    %248 = arith.select %247, %c0_i32_114, %c7_i32_115 : i32
    %249 = arith.cmpi eq, %227, %233 : i32
    %250 = arith.andi %146, %249 : i1
    %c0_i32_116 = arith.constant 0 : i32
    %251 = arith.select %250, %c0_i32_116, %227 : i32
    %252 = arith.cmpi eq, %230, %233 : i32
    %253 = arith.andi %146, %252 : i1
    %c0_i32_117 = arith.constant 0 : i32
    %254 = arith.select %253, %c0_i32_117, %230 : i32
    %255 = arith.cmpi eq, %233, %233 : i32
    %256 = arith.andi %146, %255 : i1
    %c0_i32_118 = arith.constant 0 : i32
    %257 = arith.select %256, %c0_i32_118, %233 : i32
    %258 = arith.cmpi eq, %236, %233 : i32
    %259 = arith.andi %146, %258 : i1
    %c0_i32_119 = arith.constant 0 : i32
    %260 = arith.select %259, %c0_i32_119, %236 : i32
    %261 = arith.cmpi eq, %239, %233 : i32
    %262 = arith.andi %146, %261 : i1
    %c0_i32_120 = arith.constant 0 : i32
    %263 = arith.select %262, %c0_i32_120, %239 : i32
    %264 = arith.cmpi eq, %242, %233 : i32
    %265 = arith.andi %146, %264 : i1
    %c0_i32_121 = arith.constant 0 : i32
    %266 = arith.select %265, %c0_i32_121, %242 : i32
    %267 = arith.cmpi eq, %245, %233 : i32
    %268 = arith.andi %146, %267 : i1
    %c0_i32_122 = arith.constant 0 : i32
    %269 = arith.select %268, %c0_i32_122, %245 : i32
    %270 = arith.cmpi eq, %248, %233 : i32
    %271 = arith.andi %146, %270 : i1
    %c0_i32_123 = arith.constant 0 : i32
    %272 = arith.select %271, %c0_i32_123, %248 : i32
    %273 = arith.cmpi eq, %251, %257 : i32
    %274 = arith.andi %149, %273 : i1
    %c1_i32_124 = arith.constant 1 : i32
    %275 = arith.select %274, %c1_i32_124, %251 : i32
    %276 = arith.cmpi eq, %254, %257 : i32
    %277 = arith.andi %149, %276 : i1
    %c1_i32_125 = arith.constant 1 : i32
    %278 = arith.select %277, %c1_i32_125, %254 : i32
    %279 = arith.cmpi eq, %257, %257 : i32
    %280 = arith.andi %149, %279 : i1
    %c1_i32_126 = arith.constant 1 : i32
    %281 = arith.select %280, %c1_i32_126, %257 : i32
    %282 = arith.cmpi eq, %260, %257 : i32
    %283 = arith.andi %149, %282 : i1
    %c1_i32_127 = arith.constant 1 : i32
    %284 = arith.select %283, %c1_i32_127, %260 : i32
    %285 = arith.cmpi eq, %263, %257 : i32
    %286 = arith.andi %149, %285 : i1
    %c1_i32_128 = arith.constant 1 : i32
    %287 = arith.select %286, %c1_i32_128, %263 : i32
    %288 = arith.cmpi eq, %266, %257 : i32
    %289 = arith.andi %149, %288 : i1
    %c1_i32_129 = arith.constant 1 : i32
    %290 = arith.select %289, %c1_i32_129, %266 : i32
    %291 = arith.cmpi eq, %269, %257 : i32
    %292 = arith.andi %149, %291 : i1
    %c1_i32_130 = arith.constant 1 : i32
    %293 = arith.select %292, %c1_i32_130, %269 : i32
    %294 = arith.cmpi eq, %272, %257 : i32
    %295 = arith.andi %149, %294 : i1
    %c1_i32_131 = arith.constant 1 : i32
    %296 = arith.select %295, %c1_i32_131, %272 : i32
    %297 = arith.cmpi eq, %275, %284 : i32
    %298 = arith.andi %152, %297 : i1
    %c0_i32_132 = arith.constant 0 : i32
    %299 = arith.select %298, %c0_i32_132, %275 : i32
    %300 = arith.cmpi eq, %278, %284 : i32
    %301 = arith.andi %152, %300 : i1
    %c0_i32_133 = arith.constant 0 : i32
    %302 = arith.select %301, %c0_i32_133, %278 : i32
    %303 = arith.cmpi eq, %281, %284 : i32
    %304 = arith.andi %152, %303 : i1
    %c0_i32_134 = arith.constant 0 : i32
    %305 = arith.select %304, %c0_i32_134, %281 : i32
    %306 = arith.cmpi eq, %284, %284 : i32
    %307 = arith.andi %152, %306 : i1
    %c0_i32_135 = arith.constant 0 : i32
    %308 = arith.select %307, %c0_i32_135, %284 : i32
    %309 = arith.cmpi eq, %287, %284 : i32
    %310 = arith.andi %152, %309 : i1
    %c0_i32_136 = arith.constant 0 : i32
    %311 = arith.select %310, %c0_i32_136, %287 : i32
    %312 = arith.cmpi eq, %290, %284 : i32
    %313 = arith.andi %152, %312 : i1
    %c0_i32_137 = arith.constant 0 : i32
    %314 = arith.select %313, %c0_i32_137, %290 : i32
    %315 = arith.cmpi eq, %293, %284 : i32
    %316 = arith.andi %152, %315 : i1
    %c0_i32_138 = arith.constant 0 : i32
    %317 = arith.select %316, %c0_i32_138, %293 : i32
    %318 = arith.cmpi eq, %296, %284 : i32
    %319 = arith.andi %152, %318 : i1
    %c0_i32_139 = arith.constant 0 : i32
    %320 = arith.select %319, %c0_i32_139, %296 : i32
    %321 = arith.cmpi eq, %299, %308 : i32
    %322 = arith.andi %155, %321 : i1
    %c1_i32_140 = arith.constant 1 : i32
    %323 = arith.select %322, %c1_i32_140, %299 : i32
    %324 = arith.cmpi eq, %302, %308 : i32
    %325 = arith.andi %155, %324 : i1
    %c1_i32_141 = arith.constant 1 : i32
    %326 = arith.select %325, %c1_i32_141, %302 : i32
    %327 = arith.cmpi eq, %305, %308 : i32
    %328 = arith.andi %155, %327 : i1
    %c1_i32_142 = arith.constant 1 : i32
    %329 = arith.select %328, %c1_i32_142, %305 : i32
    %330 = arith.cmpi eq, %308, %308 : i32
    %331 = arith.andi %155, %330 : i1
    %c1_i32_143 = arith.constant 1 : i32
    %332 = arith.select %331, %c1_i32_143, %308 : i32
    %333 = arith.cmpi eq, %311, %308 : i32
    %334 = arith.andi %155, %333 : i1
    %c1_i32_144 = arith.constant 1 : i32
    %335 = arith.select %334, %c1_i32_144, %311 : i32
    %336 = arith.cmpi eq, %314, %308 : i32
    %337 = arith.andi %155, %336 : i1
    %c1_i32_145 = arith.constant 1 : i32
    %338 = arith.select %337, %c1_i32_145, %314 : i32
    %339 = arith.cmpi eq, %317, %308 : i32
    %340 = arith.andi %155, %339 : i1
    %c1_i32_146 = arith.constant 1 : i32
    %341 = arith.select %340, %c1_i32_146, %317 : i32
    %342 = arith.cmpi eq, %320, %308 : i32
    %343 = arith.andi %155, %342 : i1
    %c1_i32_147 = arith.constant 1 : i32
    %344 = arith.select %343, %c1_i32_147, %320 : i32
    %345 = arith.cmpi eq, %323, %332 : i32
    %346 = arith.andi %158, %345 : i1
    %c2_i32_148 = arith.constant 2 : i32
    %347 = arith.select %346, %c2_i32_148, %323 : i32
    %348 = arith.cmpi eq, %326, %332 : i32
    %349 = arith.andi %158, %348 : i1
    %c2_i32_149 = arith.constant 2 : i32
    %350 = arith.select %349, %c2_i32_149, %326 : i32
    %351 = arith.cmpi eq, %329, %332 : i32
    %352 = arith.andi %158, %351 : i1
    %c2_i32_150 = arith.constant 2 : i32
    %353 = arith.select %352, %c2_i32_150, %329 : i32
    %354 = arith.cmpi eq, %332, %332 : i32
    %355 = arith.andi %158, %354 : i1
    %c2_i32_151 = arith.constant 2 : i32
    %356 = arith.select %355, %c2_i32_151, %332 : i32
    %357 = arith.cmpi eq, %335, %332 : i32
    %358 = arith.andi %158, %357 : i1
    %c2_i32_152 = arith.constant 2 : i32
    %359 = arith.select %358, %c2_i32_152, %335 : i32
    %360 = arith.cmpi eq, %338, %332 : i32
    %361 = arith.andi %158, %360 : i1
    %c2_i32_153 = arith.constant 2 : i32
    %362 = arith.select %361, %c2_i32_153, %338 : i32
    %363 = arith.cmpi eq, %341, %332 : i32
    %364 = arith.andi %158, %363 : i1
    %c2_i32_154 = arith.constant 2 : i32
    %365 = arith.select %364, %c2_i32_154, %341 : i32
    %366 = arith.cmpi eq, %344, %332 : i32
    %367 = arith.andi %158, %366 : i1
    %c2_i32_155 = arith.constant 2 : i32
    %368 = arith.select %367, %c2_i32_155, %344 : i32
    %369 = arith.cmpi eq, %347, %359 : i32
    %370 = arith.andi %161, %369 : i1
    %c0_i32_156 = arith.constant 0 : i32
    %371 = arith.select %370, %c0_i32_156, %347 : i32
    %372 = arith.cmpi eq, %350, %359 : i32
    %373 = arith.andi %161, %372 : i1
    %c0_i32_157 = arith.constant 0 : i32
    %374 = arith.select %373, %c0_i32_157, %350 : i32
    %375 = arith.cmpi eq, %353, %359 : i32
    %376 = arith.andi %161, %375 : i1
    %c0_i32_158 = arith.constant 0 : i32
    %377 = arith.select %376, %c0_i32_158, %353 : i32
    %378 = arith.cmpi eq, %356, %359 : i32
    %379 = arith.andi %161, %378 : i1
    %c0_i32_159 = arith.constant 0 : i32
    %380 = arith.select %379, %c0_i32_159, %356 : i32
    %381 = arith.cmpi eq, %359, %359 : i32
    %382 = arith.andi %161, %381 : i1
    %c0_i32_160 = arith.constant 0 : i32
    %383 = arith.select %382, %c0_i32_160, %359 : i32
    %384 = arith.cmpi eq, %362, %359 : i32
    %385 = arith.andi %161, %384 : i1
    %c0_i32_161 = arith.constant 0 : i32
    %386 = arith.select %385, %c0_i32_161, %362 : i32
    %387 = arith.cmpi eq, %365, %359 : i32
    %388 = arith.andi %161, %387 : i1
    %c0_i32_162 = arith.constant 0 : i32
    %389 = arith.select %388, %c0_i32_162, %365 : i32
    %390 = arith.cmpi eq, %368, %359 : i32
    %391 = arith.andi %161, %390 : i1
    %c0_i32_163 = arith.constant 0 : i32
    %392 = arith.select %391, %c0_i32_163, %368 : i32
    %393 = arith.cmpi eq, %371, %383 : i32
    %394 = arith.andi %164, %393 : i1
    %c1_i32_164 = arith.constant 1 : i32
    %395 = arith.select %394, %c1_i32_164, %371 : i32
    %396 = arith.cmpi eq, %374, %383 : i32
    %397 = arith.andi %164, %396 : i1
    %c1_i32_165 = arith.constant 1 : i32
    %398 = arith.select %397, %c1_i32_165, %374 : i32
    %399 = arith.cmpi eq, %377, %383 : i32
    %400 = arith.andi %164, %399 : i1
    %c1_i32_166 = arith.constant 1 : i32
    %401 = arith.select %400, %c1_i32_166, %377 : i32
    %402 = arith.cmpi eq, %380, %383 : i32
    %403 = arith.andi %164, %402 : i1
    %c1_i32_167 = arith.constant 1 : i32
    %404 = arith.select %403, %c1_i32_167, %380 : i32
    %405 = arith.cmpi eq, %383, %383 : i32
    %406 = arith.andi %164, %405 : i1
    %c1_i32_168 = arith.constant 1 : i32
    %407 = arith.select %406, %c1_i32_168, %383 : i32
    %408 = arith.cmpi eq, %386, %383 : i32
    %409 = arith.andi %164, %408 : i1
    %c1_i32_169 = arith.constant 1 : i32
    %410 = arith.select %409, %c1_i32_169, %386 : i32
    %411 = arith.cmpi eq, %389, %383 : i32
    %412 = arith.andi %164, %411 : i1
    %c1_i32_170 = arith.constant 1 : i32
    %413 = arith.select %412, %c1_i32_170, %389 : i32
    %414 = arith.cmpi eq, %392, %383 : i32
    %415 = arith.andi %164, %414 : i1
    %c1_i32_171 = arith.constant 1 : i32
    %416 = arith.select %415, %c1_i32_171, %392 : i32
    %417 = arith.cmpi eq, %395, %407 : i32
    %418 = arith.andi %167, %417 : i1
    %c2_i32_172 = arith.constant 2 : i32
    %419 = arith.select %418, %c2_i32_172, %395 : i32
    %420 = arith.cmpi eq, %398, %407 : i32
    %421 = arith.andi %167, %420 : i1
    %c2_i32_173 = arith.constant 2 : i32
    %422 = arith.select %421, %c2_i32_173, %398 : i32
    %423 = arith.cmpi eq, %401, %407 : i32
    %424 = arith.andi %167, %423 : i1
    %c2_i32_174 = arith.constant 2 : i32
    %425 = arith.select %424, %c2_i32_174, %401 : i32
    %426 = arith.cmpi eq, %404, %407 : i32
    %427 = arith.andi %167, %426 : i1
    %c2_i32_175 = arith.constant 2 : i32
    %428 = arith.select %427, %c2_i32_175, %404 : i32
    %429 = arith.cmpi eq, %407, %407 : i32
    %430 = arith.andi %167, %429 : i1
    %c2_i32_176 = arith.constant 2 : i32
    %431 = arith.select %430, %c2_i32_176, %407 : i32
    %432 = arith.cmpi eq, %410, %407 : i32
    %433 = arith.andi %167, %432 : i1
    %c2_i32_177 = arith.constant 2 : i32
    %434 = arith.select %433, %c2_i32_177, %410 : i32
    %435 = arith.cmpi eq, %413, %407 : i32
    %436 = arith.andi %167, %435 : i1
    %c2_i32_178 = arith.constant 2 : i32
    %437 = arith.select %436, %c2_i32_178, %413 : i32
    %438 = arith.cmpi eq, %416, %407 : i32
    %439 = arith.andi %167, %438 : i1
    %c2_i32_179 = arith.constant 2 : i32
    %440 = arith.select %439, %c2_i32_179, %416 : i32
    %441 = arith.cmpi eq, %419, %431 : i32
    %442 = arith.andi %170, %441 : i1
    %c3_i32_180 = arith.constant 3 : i32
    %443 = arith.select %442, %c3_i32_180, %419 : i32
    %444 = arith.cmpi eq, %422, %431 : i32
    %445 = arith.andi %170, %444 : i1
    %c3_i32_181 = arith.constant 3 : i32
    %446 = arith.select %445, %c3_i32_181, %422 : i32
    %447 = arith.cmpi eq, %425, %431 : i32
    %448 = arith.andi %170, %447 : i1
    %c3_i32_182 = arith.constant 3 : i32
    %449 = arith.select %448, %c3_i32_182, %425 : i32
    %450 = arith.cmpi eq, %428, %431 : i32
    %451 = arith.andi %170, %450 : i1
    %c3_i32_183 = arith.constant 3 : i32
    %452 = arith.select %451, %c3_i32_183, %428 : i32
    %453 = arith.cmpi eq, %431, %431 : i32
    %454 = arith.andi %170, %453 : i1
    %c3_i32_184 = arith.constant 3 : i32
    %455 = arith.select %454, %c3_i32_184, %431 : i32
    %456 = arith.cmpi eq, %434, %431 : i32
    %457 = arith.andi %170, %456 : i1
    %c3_i32_185 = arith.constant 3 : i32
    %458 = arith.select %457, %c3_i32_185, %434 : i32
    %459 = arith.cmpi eq, %437, %431 : i32
    %460 = arith.andi %170, %459 : i1
    %c3_i32_186 = arith.constant 3 : i32
    %461 = arith.select %460, %c3_i32_186, %437 : i32
    %462 = arith.cmpi eq, %440, %431 : i32
    %463 = arith.andi %170, %462 : i1
    %c3_i32_187 = arith.constant 3 : i32
    %464 = arith.select %463, %c3_i32_187, %440 : i32
    %465 = arith.cmpi eq, %443, %458 : i32
    %466 = arith.andi %173, %465 : i1
    %c0_i32_188 = arith.constant 0 : i32
    %467 = arith.select %466, %c0_i32_188, %443 : i32
    %468 = arith.cmpi eq, %446, %458 : i32
    %469 = arith.andi %173, %468 : i1
    %c0_i32_189 = arith.constant 0 : i32
    %470 = arith.select %469, %c0_i32_189, %446 : i32
    %471 = arith.cmpi eq, %449, %458 : i32
    %472 = arith.andi %173, %471 : i1
    %c0_i32_190 = arith.constant 0 : i32
    %473 = arith.select %472, %c0_i32_190, %449 : i32
    %474 = arith.cmpi eq, %452, %458 : i32
    %475 = arith.andi %173, %474 : i1
    %c0_i32_191 = arith.constant 0 : i32
    %476 = arith.select %475, %c0_i32_191, %452 : i32
    %477 = arith.cmpi eq, %455, %458 : i32
    %478 = arith.andi %173, %477 : i1
    %c0_i32_192 = arith.constant 0 : i32
    %479 = arith.select %478, %c0_i32_192, %455 : i32
    %480 = arith.cmpi eq, %458, %458 : i32
    %481 = arith.andi %173, %480 : i1
    %c0_i32_193 = arith.constant 0 : i32
    %482 = arith.select %481, %c0_i32_193, %458 : i32
    %483 = arith.cmpi eq, %461, %458 : i32
    %484 = arith.andi %173, %483 : i1
    %c0_i32_194 = arith.constant 0 : i32
    %485 = arith.select %484, %c0_i32_194, %461 : i32
    %486 = arith.cmpi eq, %464, %458 : i32
    %487 = arith.andi %173, %486 : i1
    %c0_i32_195 = arith.constant 0 : i32
    %488 = arith.select %487, %c0_i32_195, %464 : i32
    %489 = arith.cmpi eq, %467, %482 : i32
    %490 = arith.andi %176, %489 : i1
    %c1_i32_196 = arith.constant 1 : i32
    %491 = arith.select %490, %c1_i32_196, %467 : i32
    %492 = arith.cmpi eq, %470, %482 : i32
    %493 = arith.andi %176, %492 : i1
    %c1_i32_197 = arith.constant 1 : i32
    %494 = arith.select %493, %c1_i32_197, %470 : i32
    %495 = arith.cmpi eq, %473, %482 : i32
    %496 = arith.andi %176, %495 : i1
    %c1_i32_198 = arith.constant 1 : i32
    %497 = arith.select %496, %c1_i32_198, %473 : i32
    %498 = arith.cmpi eq, %476, %482 : i32
    %499 = arith.andi %176, %498 : i1
    %c1_i32_199 = arith.constant 1 : i32
    %500 = arith.select %499, %c1_i32_199, %476 : i32
    %501 = arith.cmpi eq, %479, %482 : i32
    %502 = arith.andi %176, %501 : i1
    %c1_i32_200 = arith.constant 1 : i32
    %503 = arith.select %502, %c1_i32_200, %479 : i32
    %504 = arith.cmpi eq, %482, %482 : i32
    %505 = arith.andi %176, %504 : i1
    %c1_i32_201 = arith.constant 1 : i32
    %506 = arith.select %505, %c1_i32_201, %482 : i32
    %507 = arith.cmpi eq, %485, %482 : i32
    %508 = arith.andi %176, %507 : i1
    %c1_i32_202 = arith.constant 1 : i32
    %509 = arith.select %508, %c1_i32_202, %485 : i32
    %510 = arith.cmpi eq, %488, %482 : i32
    %511 = arith.andi %176, %510 : i1
    %c1_i32_203 = arith.constant 1 : i32
    %512 = arith.select %511, %c1_i32_203, %488 : i32
    %513 = arith.cmpi eq, %491, %506 : i32
    %514 = arith.andi %179, %513 : i1
    %c2_i32_204 = arith.constant 2 : i32
    %515 = arith.select %514, %c2_i32_204, %491 : i32
    %516 = arith.cmpi eq, %494, %506 : i32
    %517 = arith.andi %179, %516 : i1
    %c2_i32_205 = arith.constant 2 : i32
    %518 = arith.select %517, %c2_i32_205, %494 : i32
    %519 = arith.cmpi eq, %497, %506 : i32
    %520 = arith.andi %179, %519 : i1
    %c2_i32_206 = arith.constant 2 : i32
    %521 = arith.select %520, %c2_i32_206, %497 : i32
    %522 = arith.cmpi eq, %500, %506 : i32
    %523 = arith.andi %179, %522 : i1
    %c2_i32_207 = arith.constant 2 : i32
    %524 = arith.select %523, %c2_i32_207, %500 : i32
    %525 = arith.cmpi eq, %503, %506 : i32
    %526 = arith.andi %179, %525 : i1
    %c2_i32_208 = arith.constant 2 : i32
    %527 = arith.select %526, %c2_i32_208, %503 : i32
    %528 = arith.cmpi eq, %506, %506 : i32
    %529 = arith.andi %179, %528 : i1
    %c2_i32_209 = arith.constant 2 : i32
    %530 = arith.select %529, %c2_i32_209, %506 : i32
    %531 = arith.cmpi eq, %509, %506 : i32
    %532 = arith.andi %179, %531 : i1
    %c2_i32_210 = arith.constant 2 : i32
    %533 = arith.select %532, %c2_i32_210, %509 : i32
    %534 = arith.cmpi eq, %512, %506 : i32
    %535 = arith.andi %179, %534 : i1
    %c2_i32_211 = arith.constant 2 : i32
    %536 = arith.select %535, %c2_i32_211, %512 : i32
    %537 = arith.cmpi eq, %515, %530 : i32
    %538 = arith.andi %182, %537 : i1
    %c3_i32_212 = arith.constant 3 : i32
    %539 = arith.select %538, %c3_i32_212, %515 : i32
    %540 = arith.cmpi eq, %518, %530 : i32
    %541 = arith.andi %182, %540 : i1
    %c3_i32_213 = arith.constant 3 : i32
    %542 = arith.select %541, %c3_i32_213, %518 : i32
    %543 = arith.cmpi eq, %521, %530 : i32
    %544 = arith.andi %182, %543 : i1
    %c3_i32_214 = arith.constant 3 : i32
    %545 = arith.select %544, %c3_i32_214, %521 : i32
    %546 = arith.cmpi eq, %524, %530 : i32
    %547 = arith.andi %182, %546 : i1
    %c3_i32_215 = arith.constant 3 : i32
    %548 = arith.select %547, %c3_i32_215, %524 : i32
    %549 = arith.cmpi eq, %527, %530 : i32
    %550 = arith.andi %182, %549 : i1
    %c3_i32_216 = arith.constant 3 : i32
    %551 = arith.select %550, %c3_i32_216, %527 : i32
    %552 = arith.cmpi eq, %530, %530 : i32
    %553 = arith.andi %182, %552 : i1
    %c3_i32_217 = arith.constant 3 : i32
    %554 = arith.select %553, %c3_i32_217, %530 : i32
    %555 = arith.cmpi eq, %533, %530 : i32
    %556 = arith.andi %182, %555 : i1
    %c3_i32_218 = arith.constant 3 : i32
    %557 = arith.select %556, %c3_i32_218, %533 : i32
    %558 = arith.cmpi eq, %536, %530 : i32
    %559 = arith.andi %182, %558 : i1
    %c3_i32_219 = arith.constant 3 : i32
    %560 = arith.select %559, %c3_i32_219, %536 : i32
    %561 = arith.cmpi eq, %539, %554 : i32
    %562 = arith.andi %185, %561 : i1
    %c4_i32_220 = arith.constant 4 : i32
    %563 = arith.select %562, %c4_i32_220, %539 : i32
    %564 = arith.cmpi eq, %542, %554 : i32
    %565 = arith.andi %185, %564 : i1
    %c4_i32_221 = arith.constant 4 : i32
    %566 = arith.select %565, %c4_i32_221, %542 : i32
    %567 = arith.cmpi eq, %545, %554 : i32
    %568 = arith.andi %185, %567 : i1
    %c4_i32_222 = arith.constant 4 : i32
    %569 = arith.select %568, %c4_i32_222, %545 : i32
    %570 = arith.cmpi eq, %548, %554 : i32
    %571 = arith.andi %185, %570 : i1
    %c4_i32_223 = arith.constant 4 : i32
    %572 = arith.select %571, %c4_i32_223, %548 : i32
    %573 = arith.cmpi eq, %551, %554 : i32
    %574 = arith.andi %185, %573 : i1
    %c4_i32_224 = arith.constant 4 : i32
    %575 = arith.select %574, %c4_i32_224, %551 : i32
    %576 = arith.cmpi eq, %554, %554 : i32
    %577 = arith.andi %185, %576 : i1
    %c4_i32_225 = arith.constant 4 : i32
    %578 = arith.select %577, %c4_i32_225, %554 : i32
    %579 = arith.cmpi eq, %557, %554 : i32
    %580 = arith.andi %185, %579 : i1
    %c4_i32_226 = arith.constant 4 : i32
    %581 = arith.select %580, %c4_i32_226, %557 : i32
    %582 = arith.cmpi eq, %560, %554 : i32
    %583 = arith.andi %185, %582 : i1
    %c4_i32_227 = arith.constant 4 : i32
    %584 = arith.select %583, %c4_i32_227, %560 : i32
    %585 = arith.cmpi eq, %563, %581 : i32
    %586 = arith.andi %188, %585 : i1
    %c0_i32_228 = arith.constant 0 : i32
    %587 = arith.select %586, %c0_i32_228, %563 : i32
    %588 = arith.cmpi eq, %566, %581 : i32
    %589 = arith.andi %188, %588 : i1
    %c0_i32_229 = arith.constant 0 : i32
    %590 = arith.select %589, %c0_i32_229, %566 : i32
    %591 = arith.cmpi eq, %569, %581 : i32
    %592 = arith.andi %188, %591 : i1
    %c0_i32_230 = arith.constant 0 : i32
    %593 = arith.select %592, %c0_i32_230, %569 : i32
    %594 = arith.cmpi eq, %572, %581 : i32
    %595 = arith.andi %188, %594 : i1
    %c0_i32_231 = arith.constant 0 : i32
    %596 = arith.select %595, %c0_i32_231, %572 : i32
    %597 = arith.cmpi eq, %575, %581 : i32
    %598 = arith.andi %188, %597 : i1
    %c0_i32_232 = arith.constant 0 : i32
    %599 = arith.select %598, %c0_i32_232, %575 : i32
    %600 = arith.cmpi eq, %578, %581 : i32
    %601 = arith.andi %188, %600 : i1
    %c0_i32_233 = arith.constant 0 : i32
    %602 = arith.select %601, %c0_i32_233, %578 : i32
    %603 = arith.cmpi eq, %581, %581 : i32
    %604 = arith.andi %188, %603 : i1
    %c0_i32_234 = arith.constant 0 : i32
    %605 = arith.select %604, %c0_i32_234, %581 : i32
    %606 = arith.cmpi eq, %584, %581 : i32
    %607 = arith.andi %188, %606 : i1
    %c0_i32_235 = arith.constant 0 : i32
    %608 = arith.select %607, %c0_i32_235, %584 : i32
    %609 = arith.cmpi eq, %587, %605 : i32
    %610 = arith.andi %191, %609 : i1
    %c1_i32_236 = arith.constant 1 : i32
    %611 = arith.select %610, %c1_i32_236, %587 : i32
    %612 = arith.cmpi eq, %590, %605 : i32
    %613 = arith.andi %191, %612 : i1
    %c1_i32_237 = arith.constant 1 : i32
    %614 = arith.select %613, %c1_i32_237, %590 : i32
    %615 = arith.cmpi eq, %593, %605 : i32
    %616 = arith.andi %191, %615 : i1
    %c1_i32_238 = arith.constant 1 : i32
    %617 = arith.select %616, %c1_i32_238, %593 : i32
    %618 = arith.cmpi eq, %596, %605 : i32
    %619 = arith.andi %191, %618 : i1
    %c1_i32_239 = arith.constant 1 : i32
    %620 = arith.select %619, %c1_i32_239, %596 : i32
    %621 = arith.cmpi eq, %599, %605 : i32
    %622 = arith.andi %191, %621 : i1
    %c1_i32_240 = arith.constant 1 : i32
    %623 = arith.select %622, %c1_i32_240, %599 : i32
    %624 = arith.cmpi eq, %602, %605 : i32
    %625 = arith.andi %191, %624 : i1
    %c1_i32_241 = arith.constant 1 : i32
    %626 = arith.select %625, %c1_i32_241, %602 : i32
    %627 = arith.cmpi eq, %605, %605 : i32
    %628 = arith.andi %191, %627 : i1
    %c1_i32_242 = arith.constant 1 : i32
    %629 = arith.select %628, %c1_i32_242, %605 : i32
    %630 = arith.cmpi eq, %608, %605 : i32
    %631 = arith.andi %191, %630 : i1
    %c1_i32_243 = arith.constant 1 : i32
    %632 = arith.select %631, %c1_i32_243, %608 : i32
    %633 = arith.cmpi eq, %611, %629 : i32
    %634 = arith.andi %194, %633 : i1
    %c2_i32_244 = arith.constant 2 : i32
    %635 = arith.select %634, %c2_i32_244, %611 : i32
    %636 = arith.cmpi eq, %614, %629 : i32
    %637 = arith.andi %194, %636 : i1
    %c2_i32_245 = arith.constant 2 : i32
    %638 = arith.select %637, %c2_i32_245, %614 : i32
    %639 = arith.cmpi eq, %617, %629 : i32
    %640 = arith.andi %194, %639 : i1
    %c2_i32_246 = arith.constant 2 : i32
    %641 = arith.select %640, %c2_i32_246, %617 : i32
    %642 = arith.cmpi eq, %620, %629 : i32
    %643 = arith.andi %194, %642 : i1
    %c2_i32_247 = arith.constant 2 : i32
    %644 = arith.select %643, %c2_i32_247, %620 : i32
    %645 = arith.cmpi eq, %623, %629 : i32
    %646 = arith.andi %194, %645 : i1
    %c2_i32_248 = arith.constant 2 : i32
    %647 = arith.select %646, %c2_i32_248, %623 : i32
    %648 = arith.cmpi eq, %626, %629 : i32
    %649 = arith.andi %194, %648 : i1
    %c2_i32_249 = arith.constant 2 : i32
    %650 = arith.select %649, %c2_i32_249, %626 : i32
    %651 = arith.cmpi eq, %629, %629 : i32
    %652 = arith.andi %194, %651 : i1
    %c2_i32_250 = arith.constant 2 : i32
    %653 = arith.select %652, %c2_i32_250, %629 : i32
    %654 = arith.cmpi eq, %632, %629 : i32
    %655 = arith.andi %194, %654 : i1
    %c2_i32_251 = arith.constant 2 : i32
    %656 = arith.select %655, %c2_i32_251, %632 : i32
    %657 = arith.cmpi eq, %635, %653 : i32
    %658 = arith.andi %197, %657 : i1
    %c3_i32_252 = arith.constant 3 : i32
    %659 = arith.select %658, %c3_i32_252, %635 : i32
    %660 = arith.cmpi eq, %638, %653 : i32
    %661 = arith.andi %197, %660 : i1
    %c3_i32_253 = arith.constant 3 : i32
    %662 = arith.select %661, %c3_i32_253, %638 : i32
    %663 = arith.cmpi eq, %641, %653 : i32
    %664 = arith.andi %197, %663 : i1
    %c3_i32_254 = arith.constant 3 : i32
    %665 = arith.select %664, %c3_i32_254, %641 : i32
    %666 = arith.cmpi eq, %644, %653 : i32
    %667 = arith.andi %197, %666 : i1
    %c3_i32_255 = arith.constant 3 : i32
    %668 = arith.select %667, %c3_i32_255, %644 : i32
    %669 = arith.cmpi eq, %647, %653 : i32
    %670 = arith.andi %197, %669 : i1
    %c3_i32_256 = arith.constant 3 : i32
    %671 = arith.select %670, %c3_i32_256, %647 : i32
    %672 = arith.cmpi eq, %650, %653 : i32
    %673 = arith.andi %197, %672 : i1
    %c3_i32_257 = arith.constant 3 : i32
    %674 = arith.select %673, %c3_i32_257, %650 : i32
    %675 = arith.cmpi eq, %653, %653 : i32
    %676 = arith.andi %197, %675 : i1
    %c3_i32_258 = arith.constant 3 : i32
    %677 = arith.select %676, %c3_i32_258, %653 : i32
    %678 = arith.cmpi eq, %656, %653 : i32
    %679 = arith.andi %197, %678 : i1
    %c3_i32_259 = arith.constant 3 : i32
    %680 = arith.select %679, %c3_i32_259, %656 : i32
    %681 = arith.cmpi eq, %659, %677 : i32
    %682 = arith.andi %200, %681 : i1
    %c4_i32_260 = arith.constant 4 : i32
    %683 = arith.select %682, %c4_i32_260, %659 : i32
    %684 = arith.cmpi eq, %662, %677 : i32
    %685 = arith.andi %200, %684 : i1
    %c4_i32_261 = arith.constant 4 : i32
    %686 = arith.select %685, %c4_i32_261, %662 : i32
    %687 = arith.cmpi eq, %665, %677 : i32
    %688 = arith.andi %200, %687 : i1
    %c4_i32_262 = arith.constant 4 : i32
    %689 = arith.select %688, %c4_i32_262, %665 : i32
    %690 = arith.cmpi eq, %668, %677 : i32
    %691 = arith.andi %200, %690 : i1
    %c4_i32_263 = arith.constant 4 : i32
    %692 = arith.select %691, %c4_i32_263, %668 : i32
    %693 = arith.cmpi eq, %671, %677 : i32
    %694 = arith.andi %200, %693 : i1
    %c4_i32_264 = arith.constant 4 : i32
    %695 = arith.select %694, %c4_i32_264, %671 : i32
    %696 = arith.cmpi eq, %674, %677 : i32
    %697 = arith.andi %200, %696 : i1
    %c4_i32_265 = arith.constant 4 : i32
    %698 = arith.select %697, %c4_i32_265, %674 : i32
    %699 = arith.cmpi eq, %677, %677 : i32
    %700 = arith.andi %200, %699 : i1
    %c4_i32_266 = arith.constant 4 : i32
    %701 = arith.select %700, %c4_i32_266, %677 : i32
    %702 = arith.cmpi eq, %680, %677 : i32
    %703 = arith.andi %200, %702 : i1
    %c4_i32_267 = arith.constant 4 : i32
    %704 = arith.select %703, %c4_i32_267, %680 : i32
    %705 = arith.cmpi eq, %683, %701 : i32
    %706 = arith.andi %203, %705 : i1
    %c5_i32_268 = arith.constant 5 : i32
    %707 = arith.select %706, %c5_i32_268, %683 : i32
    %708 = arith.cmpi eq, %686, %701 : i32
    %709 = arith.andi %203, %708 : i1
    %c5_i32_269 = arith.constant 5 : i32
    %710 = arith.select %709, %c5_i32_269, %686 : i32
    %711 = arith.cmpi eq, %689, %701 : i32
    %712 = arith.andi %203, %711 : i1
    %c5_i32_270 = arith.constant 5 : i32
    %713 = arith.select %712, %c5_i32_270, %689 : i32
    %714 = arith.cmpi eq, %692, %701 : i32
    %715 = arith.andi %203, %714 : i1
    %c5_i32_271 = arith.constant 5 : i32
    %716 = arith.select %715, %c5_i32_271, %692 : i32
    %717 = arith.cmpi eq, %695, %701 : i32
    %718 = arith.andi %203, %717 : i1
    %c5_i32_272 = arith.constant 5 : i32
    %719 = arith.select %718, %c5_i32_272, %695 : i32
    %720 = arith.cmpi eq, %698, %701 : i32
    %721 = arith.andi %203, %720 : i1
    %c5_i32_273 = arith.constant 5 : i32
    %722 = arith.select %721, %c5_i32_273, %698 : i32
    %723 = arith.cmpi eq, %701, %701 : i32
    %724 = arith.andi %203, %723 : i1
    %c5_i32_274 = arith.constant 5 : i32
    %725 = arith.select %724, %c5_i32_274, %701 : i32
    %726 = arith.cmpi eq, %704, %701 : i32
    %727 = arith.andi %203, %726 : i1
    %c5_i32_275 = arith.constant 5 : i32
    %728 = arith.select %727, %c5_i32_275, %704 : i32
    %729 = arith.cmpi eq, %707, %728 : i32
    %730 = arith.andi %206, %729 : i1
    %c0_i32_276 = arith.constant 0 : i32
    %731 = arith.select %730, %c0_i32_276, %707 : i32
    %732 = arith.cmpi eq, %710, %728 : i32
    %733 = arith.andi %206, %732 : i1
    %c0_i32_277 = arith.constant 0 : i32
    %734 = arith.select %733, %c0_i32_277, %710 : i32
    %735 = arith.cmpi eq, %713, %728 : i32
    %736 = arith.andi %206, %735 : i1
    %c0_i32_278 = arith.constant 0 : i32
    %737 = arith.select %736, %c0_i32_278, %713 : i32
    %738 = arith.cmpi eq, %716, %728 : i32
    %739 = arith.andi %206, %738 : i1
    %c0_i32_279 = arith.constant 0 : i32
    %740 = arith.select %739, %c0_i32_279, %716 : i32
    %741 = arith.cmpi eq, %719, %728 : i32
    %742 = arith.andi %206, %741 : i1
    %c0_i32_280 = arith.constant 0 : i32
    %743 = arith.select %742, %c0_i32_280, %719 : i32
    %744 = arith.cmpi eq, %722, %728 : i32
    %745 = arith.andi %206, %744 : i1
    %c0_i32_281 = arith.constant 0 : i32
    %746 = arith.select %745, %c0_i32_281, %722 : i32
    %747 = arith.cmpi eq, %725, %728 : i32
    %748 = arith.andi %206, %747 : i1
    %c0_i32_282 = arith.constant 0 : i32
    %749 = arith.select %748, %c0_i32_282, %725 : i32
    %750 = arith.cmpi eq, %728, %728 : i32
    %751 = arith.andi %206, %750 : i1
    %c0_i32_283 = arith.constant 0 : i32
    %752 = arith.select %751, %c0_i32_283, %728 : i32
    %753 = arith.cmpi eq, %731, %752 : i32
    %754 = arith.andi %209, %753 : i1
    %c1_i32_284 = arith.constant 1 : i32
    %755 = arith.select %754, %c1_i32_284, %731 : i32
    %756 = arith.cmpi eq, %734, %752 : i32
    %757 = arith.andi %209, %756 : i1
    %c1_i32_285 = arith.constant 1 : i32
    %758 = arith.select %757, %c1_i32_285, %734 : i32
    %759 = arith.cmpi eq, %737, %752 : i32
    %760 = arith.andi %209, %759 : i1
    %c1_i32_286 = arith.constant 1 : i32
    %761 = arith.select %760, %c1_i32_286, %737 : i32
    %762 = arith.cmpi eq, %740, %752 : i32
    %763 = arith.andi %209, %762 : i1
    %c1_i32_287 = arith.constant 1 : i32
    %764 = arith.select %763, %c1_i32_287, %740 : i32
    %765 = arith.cmpi eq, %743, %752 : i32
    %766 = arith.andi %209, %765 : i1
    %c1_i32_288 = arith.constant 1 : i32
    %767 = arith.select %766, %c1_i32_288, %743 : i32
    %768 = arith.cmpi eq, %746, %752 : i32
    %769 = arith.andi %209, %768 : i1
    %c1_i32_289 = arith.constant 1 : i32
    %770 = arith.select %769, %c1_i32_289, %746 : i32
    %771 = arith.cmpi eq, %749, %752 : i32
    %772 = arith.andi %209, %771 : i1
    %c1_i32_290 = arith.constant 1 : i32
    %773 = arith.select %772, %c1_i32_290, %749 : i32
    %774 = arith.cmpi eq, %752, %752 : i32
    %775 = arith.andi %209, %774 : i1
    %c1_i32_291 = arith.constant 1 : i32
    %776 = arith.select %775, %c1_i32_291, %752 : i32
    %777 = arith.cmpi eq, %755, %776 : i32
    %778 = arith.andi %212, %777 : i1
    %c2_i32_292 = arith.constant 2 : i32
    %779 = arith.select %778, %c2_i32_292, %755 : i32
    %780 = arith.cmpi eq, %758, %776 : i32
    %781 = arith.andi %212, %780 : i1
    %c2_i32_293 = arith.constant 2 : i32
    %782 = arith.select %781, %c2_i32_293, %758 : i32
    %783 = arith.cmpi eq, %761, %776 : i32
    %784 = arith.andi %212, %783 : i1
    %c2_i32_294 = arith.constant 2 : i32
    %785 = arith.select %784, %c2_i32_294, %761 : i32
    %786 = arith.cmpi eq, %764, %776 : i32
    %787 = arith.andi %212, %786 : i1
    %c2_i32_295 = arith.constant 2 : i32
    %788 = arith.select %787, %c2_i32_295, %764 : i32
    %789 = arith.cmpi eq, %767, %776 : i32
    %790 = arith.andi %212, %789 : i1
    %c2_i32_296 = arith.constant 2 : i32
    %791 = arith.select %790, %c2_i32_296, %767 : i32
    %792 = arith.cmpi eq, %770, %776 : i32
    %793 = arith.andi %212, %792 : i1
    %c2_i32_297 = arith.constant 2 : i32
    %794 = arith.select %793, %c2_i32_297, %770 : i32
    %795 = arith.cmpi eq, %773, %776 : i32
    %796 = arith.andi %212, %795 : i1
    %c2_i32_298 = arith.constant 2 : i32
    %797 = arith.select %796, %c2_i32_298, %773 : i32
    %798 = arith.cmpi eq, %776, %776 : i32
    %799 = arith.andi %212, %798 : i1
    %c2_i32_299 = arith.constant 2 : i32
    %800 = arith.select %799, %c2_i32_299, %776 : i32
    %801 = arith.cmpi eq, %779, %800 : i32
    %802 = arith.andi %215, %801 : i1
    %c3_i32_300 = arith.constant 3 : i32
    %803 = arith.select %802, %c3_i32_300, %779 : i32
    %804 = arith.cmpi eq, %782, %800 : i32
    %805 = arith.andi %215, %804 : i1
    %c3_i32_301 = arith.constant 3 : i32
    %806 = arith.select %805, %c3_i32_301, %782 : i32
    %807 = arith.cmpi eq, %785, %800 : i32
    %808 = arith.andi %215, %807 : i1
    %c3_i32_302 = arith.constant 3 : i32
    %809 = arith.select %808, %c3_i32_302, %785 : i32
    %810 = arith.cmpi eq, %788, %800 : i32
    %811 = arith.andi %215, %810 : i1
    %c3_i32_303 = arith.constant 3 : i32
    %812 = arith.select %811, %c3_i32_303, %788 : i32
    %813 = arith.cmpi eq, %791, %800 : i32
    %814 = arith.andi %215, %813 : i1
    %c3_i32_304 = arith.constant 3 : i32
    %815 = arith.select %814, %c3_i32_304, %791 : i32
    %816 = arith.cmpi eq, %794, %800 : i32
    %817 = arith.andi %215, %816 : i1
    %c3_i32_305 = arith.constant 3 : i32
    %818 = arith.select %817, %c3_i32_305, %794 : i32
    %819 = arith.cmpi eq, %797, %800 : i32
    %820 = arith.andi %215, %819 : i1
    %c3_i32_306 = arith.constant 3 : i32
    %821 = arith.select %820, %c3_i32_306, %797 : i32
    %822 = arith.cmpi eq, %800, %800 : i32
    %823 = arith.andi %215, %822 : i1
    %c3_i32_307 = arith.constant 3 : i32
    %824 = arith.select %823, %c3_i32_307, %800 : i32
    %825 = arith.cmpi eq, %803, %824 : i32
    %826 = arith.andi %218, %825 : i1
    %c4_i32_308 = arith.constant 4 : i32
    %827 = arith.select %826, %c4_i32_308, %803 : i32
    %828 = arith.cmpi eq, %806, %824 : i32
    %829 = arith.andi %218, %828 : i1
    %c4_i32_309 = arith.constant 4 : i32
    %830 = arith.select %829, %c4_i32_309, %806 : i32
    %831 = arith.cmpi eq, %809, %824 : i32
    %832 = arith.andi %218, %831 : i1
    %c4_i32_310 = arith.constant 4 : i32
    %833 = arith.select %832, %c4_i32_310, %809 : i32
    %834 = arith.cmpi eq, %812, %824 : i32
    %835 = arith.andi %218, %834 : i1
    %c4_i32_311 = arith.constant 4 : i32
    %836 = arith.select %835, %c4_i32_311, %812 : i32
    %837 = arith.cmpi eq, %815, %824 : i32
    %838 = arith.andi %218, %837 : i1
    %c4_i32_312 = arith.constant 4 : i32
    %839 = arith.select %838, %c4_i32_312, %815 : i32
    %840 = arith.cmpi eq, %818, %824 : i32
    %841 = arith.andi %218, %840 : i1
    %c4_i32_313 = arith.constant 4 : i32
    %842 = arith.select %841, %c4_i32_313, %818 : i32
    %843 = arith.cmpi eq, %821, %824 : i32
    %844 = arith.andi %218, %843 : i1
    %c4_i32_314 = arith.constant 4 : i32
    %845 = arith.select %844, %c4_i32_314, %821 : i32
    %846 = arith.cmpi eq, %824, %824 : i32
    %847 = arith.andi %218, %846 : i1
    %c4_i32_315 = arith.constant 4 : i32
    %848 = arith.select %847, %c4_i32_315, %824 : i32
    %849 = arith.cmpi eq, %827, %848 : i32
    %850 = arith.andi %221, %849 : i1
    %c5_i32_316 = arith.constant 5 : i32
    %851 = arith.select %850, %c5_i32_316, %827 : i32
    %852 = arith.cmpi eq, %830, %848 : i32
    %853 = arith.andi %221, %852 : i1
    %c5_i32_317 = arith.constant 5 : i32
    %854 = arith.select %853, %c5_i32_317, %830 : i32
    %855 = arith.cmpi eq, %833, %848 : i32
    %856 = arith.andi %221, %855 : i1
    %c5_i32_318 = arith.constant 5 : i32
    %857 = arith.select %856, %c5_i32_318, %833 : i32
    %858 = arith.cmpi eq, %836, %848 : i32
    %859 = arith.andi %221, %858 : i1
    %c5_i32_319 = arith.constant 5 : i32
    %860 = arith.select %859, %c5_i32_319, %836 : i32
    %861 = arith.cmpi eq, %839, %848 : i32
    %862 = arith.andi %221, %861 : i1
    %c5_i32_320 = arith.constant 5 : i32
    %863 = arith.select %862, %c5_i32_320, %839 : i32
    %864 = arith.cmpi eq, %842, %848 : i32
    %865 = arith.andi %221, %864 : i1
    %c5_i32_321 = arith.constant 5 : i32
    %866 = arith.select %865, %c5_i32_321, %842 : i32
    %867 = arith.cmpi eq, %845, %848 : i32
    %868 = arith.andi %221, %867 : i1
    %c5_i32_322 = arith.constant 5 : i32
    %869 = arith.select %868, %c5_i32_322, %845 : i32
    %870 = arith.cmpi eq, %848, %848 : i32
    %871 = arith.andi %221, %870 : i1
    %c5_i32_323 = arith.constant 5 : i32
    %872 = arith.select %871, %c5_i32_323, %848 : i32
    %873 = arith.cmpi eq, %851, %872 : i32
    %874 = arith.andi %224, %873 : i1
    %c6_i32_324 = arith.constant 6 : i32
    %875 = arith.select %874, %c6_i32_324, %851 : i32
    %876 = arith.cmpi eq, %854, %872 : i32
    %877 = arith.andi %224, %876 : i1
    %c6_i32_325 = arith.constant 6 : i32
    %878 = arith.select %877, %c6_i32_325, %854 : i32
    %879 = arith.cmpi eq, %857, %872 : i32
    %880 = arith.andi %224, %879 : i1
    %c6_i32_326 = arith.constant 6 : i32
    %881 = arith.select %880, %c6_i32_326, %857 : i32
    %882 = arith.cmpi eq, %860, %872 : i32
    %883 = arith.andi %224, %882 : i1
    %c6_i32_327 = arith.constant 6 : i32
    %884 = arith.select %883, %c6_i32_327, %860 : i32
    %885 = arith.cmpi eq, %863, %872 : i32
    %886 = arith.andi %224, %885 : i1
    %c6_i32_328 = arith.constant 6 : i32
    %887 = arith.select %886, %c6_i32_328, %863 : i32
    %888 = arith.cmpi eq, %866, %872 : i32
    %889 = arith.andi %224, %888 : i1
    %c6_i32_329 = arith.constant 6 : i32
    %890 = arith.select %889, %c6_i32_329, %866 : i32
    %891 = arith.cmpi eq, %869, %872 : i32
    %892 = arith.andi %224, %891 : i1
    %c6_i32_330 = arith.constant 6 : i32
    %893 = arith.select %892, %c6_i32_330, %869 : i32
    %894 = arith.cmpi eq, %872, %872 : i32
    %895 = arith.andi %224, %894 : i1
    %c6_i32_331 = arith.constant 6 : i32
    %896 = arith.select %895, %c6_i32_331, %872 : i32
    %897 = tpu.iota {dimensions = array<i32: 1>} : vector<8x8xi32>
    %898 = tpu.iota {dimensions = array<i32: 0>} : vector<8x8xi32>
    %c0_i32_332 = arith.constant 0 : i32
    %899 = vector.broadcast %c0_i32_332 : i32 to vector<8x8xi32>
    %c0_i32_333 = arith.constant 0 : i32
    %900 = vector.broadcast %c0_i32_333 : i32 to vector<8x8xi32>
    %c0_i32_334 = arith.constant 0 : i32
    %901 = vector.broadcast %c0_i32_334 : i32 to vector<8x8xi32>
    %902 = arith.cmpi eq, %897, %901 : vector<8x8xi32>
    %c0_i32_335 = arith.constant 0 : i32
    %903 = vector.broadcast %875 : i32 to vector<8x8xi32>
    %904 = vector.broadcast %c0_i32_335 : i32 to vector<8x8xi32>
    %905 = arith.select %902, %903, %904 : vector<8x8xi1>, vector<8x8xi32>
    %906 = arith.addi %899, %905 : vector<8x8xi32>
    %c0_i32_336 = arith.constant 0 : i32
    %907 = vector.broadcast %c0_i32_336 : i32 to vector<8x8xi32>
    %908 = arith.cmpi eq, %898, %907 : vector<8x8xi32>
    %c0_i32_337 = arith.constant 0 : i32
    %909 = vector.broadcast %875 : i32 to vector<8x8xi32>
    %910 = vector.broadcast %c0_i32_337 : i32 to vector<8x8xi32>
    %911 = arith.select %908, %909, %910 : vector<8x8xi1>, vector<8x8xi32>
    %912 = arith.addi %900, %911 : vector<8x8xi32>
    %c1_i32_338 = arith.constant 1 : i32
    %913 = vector.broadcast %c1_i32_338 : i32 to vector<8x8xi32>
    %914 = arith.cmpi eq, %897, %913 : vector<8x8xi32>
    %c0_i32_339 = arith.constant 0 : i32
    %915 = vector.broadcast %878 : i32 to vector<8x8xi32>
    %916 = vector.broadcast %c0_i32_339 : i32 to vector<8x8xi32>
    %917 = arith.select %914, %915, %916 : vector<8x8xi1>, vector<8x8xi32>
    %918 = arith.addi %906, %917 : vector<8x8xi32>
    %c1_i32_340 = arith.constant 1 : i32
    %919 = vector.broadcast %c1_i32_340 : i32 to vector<8x8xi32>
    %920 = arith.cmpi eq, %898, %919 : vector<8x8xi32>
    %c0_i32_341 = arith.constant 0 : i32
    %921 = vector.broadcast %878 : i32 to vector<8x8xi32>
    %922 = vector.broadcast %c0_i32_341 : i32 to vector<8x8xi32>
    %923 = arith.select %920, %921, %922 : vector<8x8xi1>, vector<8x8xi32>
    %924 = arith.addi %912, %923 : vector<8x8xi32>
    %c2_i32_342 = arith.constant 2 : i32
    %925 = vector.broadcast %c2_i32_342 : i32 to vector<8x8xi32>
    %926 = arith.cmpi eq, %897, %925 : vector<8x8xi32>
    %c0_i32_343 = arith.constant 0 : i32
    %927 = vector.broadcast %881 : i32 to vector<8x8xi32>
    %928 = vector.broadcast %c0_i32_343 : i32 to vector<8x8xi32>
    %929 = arith.select %926, %927, %928 : vector<8x8xi1>, vector<8x8xi32>
    %930 = arith.addi %918, %929 : vector<8x8xi32>
    %c2_i32_344 = arith.constant 2 : i32
    %931 = vector.broadcast %c2_i32_344 : i32 to vector<8x8xi32>
    %932 = arith.cmpi eq, %898, %931 : vector<8x8xi32>
    %c0_i32_345 = arith.constant 0 : i32
    %933 = vector.broadcast %881 : i32 to vector<8x8xi32>
    %934 = vector.broadcast %c0_i32_345 : i32 to vector<8x8xi32>
    %935 = arith.select %932, %933, %934 : vector<8x8xi1>, vector<8x8xi32>
    %936 = arith.addi %924, %935 : vector<8x8xi32>
    %c3_i32_346 = arith.constant 3 : i32
    %937 = vector.broadcast %c3_i32_346 : i32 to vector<8x8xi32>
    %938 = arith.cmpi eq, %897, %937 : vector<8x8xi32>
    %c0_i32_347 = arith.constant 0 : i32
    %939 = vector.broadcast %884 : i32 to vector<8x8xi32>
    %940 = vector.broadcast %c0_i32_347 : i32 to vector<8x8xi32>
    %941 = arith.select %938, %939, %940 : vector<8x8xi1>, vector<8x8xi32>
    %942 = arith.addi %930, %941 : vector<8x8xi32>
    %c3_i32_348 = arith.constant 3 : i32
    %943 = vector.broadcast %c3_i32_348 : i32 to vector<8x8xi32>
    %944 = arith.cmpi eq, %898, %943 : vector<8x8xi32>
    %c0_i32_349 = arith.constant 0 : i32
    %945 = vector.broadcast %884 : i32 to vector<8x8xi32>
    %946 = vector.broadcast %c0_i32_349 : i32 to vector<8x8xi32>
    %947 = arith.select %944, %945, %946 : vector<8x8xi1>, vector<8x8xi32>
    %948 = arith.addi %936, %947 : vector<8x8xi32>
    %c4_i32_350 = arith.constant 4 : i32
    %949 = vector.broadcast %c4_i32_350 : i32 to vector<8x8xi32>
    %950 = arith.cmpi eq, %897, %949 : vector<8x8xi32>
    %c0_i32_351 = arith.constant 0 : i32
    %951 = vector.broadcast %887 : i32 to vector<8x8xi32>
    %952 = vector.broadcast %c0_i32_351 : i32 to vector<8x8xi32>
    %953 = arith.select %950, %951, %952 : vector<8x8xi1>, vector<8x8xi32>
    %954 = arith.addi %942, %953 : vector<8x8xi32>
    %c4_i32_352 = arith.constant 4 : i32
    %955 = vector.broadcast %c4_i32_352 : i32 to vector<8x8xi32>
    %956 = arith.cmpi eq, %898, %955 : vector<8x8xi32>
    %c0_i32_353 = arith.constant 0 : i32
    %957 = vector.broadcast %887 : i32 to vector<8x8xi32>
    %958 = vector.broadcast %c0_i32_353 : i32 to vector<8x8xi32>
    %959 = arith.select %956, %957, %958 : vector<8x8xi1>, vector<8x8xi32>
    %960 = arith.addi %948, %959 : vector<8x8xi32>
    %c5_i32_354 = arith.constant 5 : i32
    %961 = vector.broadcast %c5_i32_354 : i32 to vector<8x8xi32>
    %962 = arith.cmpi eq, %897, %961 : vector<8x8xi32>
    %c0_i32_355 = arith.constant 0 : i32
    %963 = vector.broadcast %890 : i32 to vector<8x8xi32>
    %964 = vector.broadcast %c0_i32_355 : i32 to vector<8x8xi32>
    %965 = arith.select %962, %963, %964 : vector<8x8xi1>, vector<8x8xi32>
    %966 = arith.addi %954, %965 : vector<8x8xi32>
    %c5_i32_356 = arith.constant 5 : i32
    %967 = vector.broadcast %c5_i32_356 : i32 to vector<8x8xi32>
    %968 = arith.cmpi eq, %898, %967 : vector<8x8xi32>
    %c0_i32_357 = arith.constant 0 : i32
    %969 = vector.broadcast %890 : i32 to vector<8x8xi32>
    %970 = vector.broadcast %c0_i32_357 : i32 to vector<8x8xi32>
    %971 = arith.select %968, %969, %970 : vector<8x8xi1>, vector<8x8xi32>
    %972 = arith.addi %960, %971 : vector<8x8xi32>
    %c6_i32_358 = arith.constant 6 : i32
    %973 = vector.broadcast %c6_i32_358 : i32 to vector<8x8xi32>
    %974 = arith.cmpi eq, %897, %973 : vector<8x8xi32>
    %c0_i32_359 = arith.constant 0 : i32
    %975 = vector.broadcast %893 : i32 to vector<8x8xi32>
    %976 = vector.broadcast %c0_i32_359 : i32 to vector<8x8xi32>
    %977 = arith.select %974, %975, %976 : vector<8x8xi1>, vector<8x8xi32>
    %978 = arith.addi %966, %977 : vector<8x8xi32>
    %c6_i32_360 = arith.constant 6 : i32
    %979 = vector.broadcast %c6_i32_360 : i32 to vector<8x8xi32>
    %980 = arith.cmpi eq, %898, %979 : vector<8x8xi32>
    %c0_i32_361 = arith.constant 0 : i32
    %981 = vector.broadcast %893 : i32 to vector<8x8xi32>
    %982 = vector.broadcast %c0_i32_361 : i32 to vector<8x8xi32>
    %983 = arith.select %980, %981, %982 : vector<8x8xi1>, vector<8x8xi32>
    %984 = arith.addi %972, %983 : vector<8x8xi32>
    %c7_i32_362 = arith.constant 7 : i32
    %985 = vector.broadcast %c7_i32_362 : i32 to vector<8x8xi32>
    %986 = arith.cmpi eq, %897, %985 : vector<8x8xi32>
    %c0_i32_363 = arith.constant 0 : i32
    %987 = vector.broadcast %896 : i32 to vector<8x8xi32>
    %988 = vector.broadcast %c0_i32_363 : i32 to vector<8x8xi32>
    %989 = arith.select %986, %987, %988 : vector<8x8xi1>, vector<8x8xi32>
    %990 = arith.addi %978, %989 : vector<8x8xi32>
    %c7_i32_364 = arith.constant 7 : i32
    %991 = vector.broadcast %c7_i32_364 : i32 to vector<8x8xi32>
    %992 = arith.cmpi eq, %898, %991 : vector<8x8xi32>
    %c0_i32_365 = arith.constant 0 : i32
    %993 = vector.broadcast %896 : i32 to vector<8x8xi32>
    %994 = vector.broadcast %c0_i32_365 : i32 to vector<8x8xi32>
    %995 = arith.select %992, %993, %994 : vector<8x8xi1>, vector<8x8xi32>
    %996 = arith.addi %984, %995 : vector<8x8xi32>
    %997 = arith.cmpi eq, %990, %996 : vector<8x8xi32>
    %998 = arith.extui %997 : vector<8x8xi1> to vector<8x8xi32>
    %999 = arith.sitofp %998 : vector<8x8xi32> to vector<8x8xf32>
    %cst_366 = arith.constant dense<0.000000e+00> : vector<8xf32>
    %1000 = vector.multi_reduction <add>, %999, %cst_366 [1] : vector<8x8xf32> to vector<8xf32>
    %1001 = vector.shape_cast %1000 : vector<8xf32> to vector<8x1xf32>
    %1002 = vector.broadcast %1001 : vector<8x1xf32> to vector<8x8xf32>
    %1003 = arith.divf %999, %1002 : vector<8x8xf32>
    %1004 = arith.cmpi eq, %990, %898 : vector<8x8xi32>
    %1005 = arith.extui %1004 : vector<8x8xi1> to vector<8x8xi32>
    %1006 = arith.sitofp %1005 : vector<8x8xi32> to vector<8x8xf32>
    %cst_367 = arith.constant dense<0.000000e+00> : vector<8xf32>
    %1007 = vector.multi_reduction <add>, %1006, %cst_367 [1] : vector<8x8xf32> to vector<8xf32>
    %1008 = vector.shape_cast %1007 : vector<8xf32> to vector<8x1xf32>
    %cst_368 = arith.constant 1.000000e+00 : f32
    %1009 = vector.broadcast %cst_368 : f32 to vector<8x1xf32>
    %1010 = arith.minimumf %1008, %1009 : vector<8x1xf32>
    %1011 = arith.cmpi slt, %898, %990 : vector<8x8xi32>
    %1012 = arith.extui %1011 : vector<8x8xi1> to vector<8x8xi32>
    %1013 = arith.sitofp %1012 : vector<8x8xi32> to vector<8x8xf32>
    %1014 = vector.broadcast %1010 : vector<8x1xf32> to vector<8x8xf32>
    %1015 = arith.mulf %1014, %1013 : vector<8x8xf32>
    %cst_369 = arith.constant dense<0.000000e+00> : vector<8xf32>
    %1016 = vector.multi_reduction <add>, %1015, %cst_369 [0] : vector<8x8xf32> to vector<8xf32>
    %1017 = vector.shape_cast %1016 : vector<8xf32> to vector<1x8xf32>
    %1018 = arith.fptosi %1017 : vector<1x8xf32> to vector<1x8xi32>
    %c0_370 = arith.constant 0 : index
    %c0_371 = arith.constant 0 : index
    %1019 = vector.load %arg12[%c0_370, %c0_371] : memref<1x8xi32, #tpu.memory_space<vmem>>, vector<1x8xi32>
    tpu.vector_store %arg12[%c0_370, %c0_371], %1018 {strides = array<i32>} : memref<1x8xi32, #tpu.memory_space<vmem>>, vector<1x8xi32>,
    %c0_372 = arith.constant 0 : index
    %c0_373 = arith.constant 0 : index
    %1020 = vector.load %arg3[%c0_372, %c0_373] : memref<16x8xf32, #tpu.memory_space<vmem>>, vector<16x8xf32>
    %c0_374 = arith.constant 0 : index
    %c0_375 = arith.constant 0 : index
    %1021 = vector.load %arg6[%c0_374, %c0_375] : memref<16x128xf32, #tpu.memory_space<vmem>>, vector<16x128xf32>
    %cst_376 = arith.constant dense<0.000000e+00> : vector<8x128xf32>
    %1022 = tpu.matmul %1020, %1021, %cst_376 {dimension_numbers = #tpu.dot_dimension_numbers<[0], [0], [1], [1], [0, 1, 1, 1], [], []>} : vector<16x8xf32>, vector<16x128xf32>, vector<8x128xf32> -> vector<8x128xf32>
    %c0_377 = arith.constant 0 : index
    %c0_378 = arith.constant 0 : index
    %1023 = vector.load %arg7[%c0_377, %c0_378] : memref<1x128xf32, #tpu.memory_space<vmem>>, vector<1x128xf32>
    %1024 = vector.broadcast %1023 : vector<1x128xf32> to vector<8x128xf32>
    %1025 = arith.addf %1022, %1024 : vector<8x128xf32>
    %cst_379 = arith.constant dense<0.000000e+00> : vector<8x128xf32>
    %1026 = tpu.matmul %1003, %1025, %cst_379 {dimension_numbers = #tpu.dot_dimension_numbers<[1], [0], [0], [1], [0, 0, 1, 1], [], []>} : vector<8x8xf32>, vector<8x128xf32>, vector<8x128xf32> -> vector<8x128xf32>
    %cst_380 = arith.constant 2.000000e+00 : f32
    %1027 = vector.broadcast %cst_380 : f32 to vector<8x128xf32>
    %1028 = arith.mulf %1027, %1026 : vector<8x128xf32>
    %1029 = arith.addf %1025, %1028 : vector<8x128xf32>
    %cst_381 = arith.constant 0.333333343 : f32
    %1030 = vector.broadcast %cst_381 : f32 to vector<8x128xf32>
    %1031 = arith.mulf %1029, %1030 : vector<8x128xf32>
    %cst_382 = arith.constant 0.000000e+00 : f32
    %1032 = vector.broadcast %cst_382 : f32 to vector<8x128xf32>
    %1033 = arith.maximumf %1025, %1032 : vector<8x128xf32>
    %cst_383 = arith.constant 0.000000e+00 : f32
    %1034 = vector.broadcast %cst_383 : f32 to vector<8x128xf32>
    %1035 = arith.minimumf %1025, %1034 : vector<8x128xf32>
    %1036 = vector.broadcast %1 : f32 to vector<8x128xf32>
    %1037 = arith.mulf %1036, %1035 : vector<8x128xf32>
    %1038 = arith.addf %1033, %1037 : vector<8x128xf32>
    %cst_384 = arith.constant 0.000000e+00 : f32
    %1039 = vector.broadcast %cst_384 : f32 to vector<8x128xf32>
    %1040 = arith.maximumf %1026, %1039 : vector<8x128xf32>
    %cst_385 = arith.constant 0.000000e+00 : f32
    %1041 = vector.broadcast %cst_385 : f32 to vector<8x128xf32>
    %1042 = arith.minimumf %1026, %1041 : vector<8x128xf32>
    %1043 = vector.broadcast %1 : f32 to vector<8x128xf32>
    %1044 = arith.mulf %1043, %1042 : vector<8x128xf32>
    %1045 = arith.addf %1040, %1044 : vector<8x128xf32>
    %c0_386 = arith.constant 0 : index
    %c0_387 = arith.constant 0 : index
    %1046 = vector.load %arg8[%c0_386, %c0_387] : memref<128x128xf32, #tpu.memory_space<vmem>>, vector<128x128xf32>
    %cst_388 = arith.constant dense<0.000000e+00> : vector<8x128xf32>
    %1047 = tpu.matmul %1038, %1046, %cst_388 {dimension_numbers = #tpu.dot_dimension_numbers<[1], [0], [0], [1], [0, 0, 1, 1], [], []>} : vector<8x128xf32>, vector<128x128xf32>, vector<8x128xf32> -> vector<8x128xf32>
    %c0_389 = arith.constant 0 : index
    %c0_390 = arith.constant 0 : index
    %1048 = vector.load %arg9[%c0_389, %c0_390] : memref<128x128xf32, #tpu.memory_space<vmem>>, vector<128x128xf32>
    %cst_391 = arith.constant dense<0.000000e+00> : vector<8x128xf32>
    %1049 = tpu.matmul %1045, %1048, %cst_391 {dimension_numbers = #tpu.dot_dimension_numbers<[1], [0], [0], [1], [0, 0, 1, 1], [], []>} : vector<8x128xf32>, vector<128x128xf32>, vector<8x128xf32> -> vector<8x128xf32>
    %1050 = arith.addf %1047, %1049 : vector<8x128xf32>
    %c0_392 = arith.constant 0 : index
    %c0_393 = arith.constant 0 : index
    %1051 = vector.load %arg10[%c0_392, %c0_393] : memref<1x128xf32, #tpu.memory_space<vmem>>, vector<1x128xf32>
    %1052 = vector.broadcast %1051 : vector<1x128xf32> to vector<8x128xf32>
    %1053 = arith.addf %1050, %1052 : vector<8x128xf32>
    %1054 = arith.addf %1031, %1053 : vector<8x128xf32>
    %c0_394 = arith.constant 0 : index
    %c0_395 = arith.constant 0 : index
    %1055 = vector.load %arg11[%c0_394, %c0_395] : memref<8x128xf32, #tpu.memory_space<vmem>>, vector<8x128xf32>
    tpu.vector_store %arg11[%c0_394, %c0_395], %1054 {strides = array<i32>} : memref<8x128xf32, #tpu.memory_space<vmem>>, vector<8x128xf32>,
    return
  }
}

</mosaic_0001>

<llo_original>
// kernel: gpgraph_forward.1
$region0: #{gpgraph_forward.1}
  #allocation0 [shape = 'u32[]', space=smem, size = 0x4, offset = 0x4, fixed_abs, tag = 'smem constant byte address 0x4 - core index']
  #allocation1 [shape = 'u32[144,128]{1,0:T(1,128)}', space=vmem, size = 0x12000, scoped, tag = 'internal scratch']
  #allocation2 [shape = 'f32[8,8]{1,0:T(8,128)}', space=vmem, size = 0x1000, scoped, tag = 'scratch operand']
  #allocation3 [shape = 'f32[1,1]{1,0:T(1,128)S(6)}', space=smem, size = 0x200, scoped, tag = 'scoped memory for gpgraph_forward.1']
  #allocation4 [shape = 'f32[1,1]{1,0:T(1,128)S(6)}', space=smem, size = 0x200, scoped, tag = 'scoped memory for gpgraph_forward.1']
  %s0 = inlined_call_operand.<no memory space> [shape: f32[1,1], index: 0, kind: input, shape index: {}]
  %s1 = inlined_call_operand.<no memory space> [shape: f32[1,1], index: 1, kind: input, shape index: {}]
  %s2 = inlined_call_operand.vmem [shape: f32[2,64], index: 2, kind: input, shape index: {}]
  %s3 = inlined_call_operand.vmem [shape: f32[16,8], index: 3, kind: input, shape index: {}]
  %s4 = inlined_call_operand.vmem [shape: f32[8,6], index: 4, kind: input, shape index: {}]
  %s5 = inlined_call_operand.vmem [shape: f32[8,1], index: 5, kind: input, shape index: {}]
  %s6 = inlined_call_operand.vmem [shape: f32[16,128], index: 6, kind: input, shape index: {}]
  %s7 = inlined_call_operand.vmem [shape: f32[1,128], index: 7, kind: input, shape index: {}]
  %s8 = inlined_call_operand.hbm [shape: f32[128,128], index: 8, kind: input, shape index: {}]
  %s9 = inlined_call_operand.hbm [shape: f32[128,128], index: 9, kind: input, shape index: {}]
  %s10 = inlined_call_operand.hbm [shape: f32[1,128], index: 10, kind: input, shape index: {}]
  %s11 = inlined_call_operand.vmem [shape: f32[8,128], index: 11, kind: output, shape index: {0}]
  %s12 = inlined_call_operand.hbm [shape: s32[1,8], index: 12, kind: output, shape index: {1}]
  %13 = xla_tuple %s11, %s12
  %s14 = sld [smem:[#allocation0]]
  $region74: #{gpgraph_forward.1} parent=0
    _
  %s16 = ssub.s32 1, %s14
  %s17 = scalar_select 0, %s16, %s14
  %18 = sst [smem:[#allocation3]] %s0
  %19 = sst [smem:[#allocation4]] %s1
  $region1: #{gpgraph_forward.1} parent=0
    #allocation5 [shape = 'u8[65536]{0}', space=vmem, size = 0x10000, scoped, tag = 'input window, operand 8, single buffered']
    #allocation6 [shape = 's32[1]{0}', space=sflag, size = 0x4, scoped, tag = 'scoped memory for gpgraph_forward.1']
    #allocation7 [shape = 's32[1]{0}', space=sflag, size = 0x4, scoped, tag = 'scoped memory for gpgraph_forward.1']
    #allocation8 [shape = 'u8[65536]{0}', space=vmem, size = 0x10000, scoped, tag = 'input window, operand 9, single buffered']
    #allocation9 [shape = 's32[1]{0}', space=sflag, size = 0x4, scoped, tag = 'scoped memory for gpgraph_forward.1']
    #allocation10 [shape = 'u8[512]{0}', space=vmem, size = 0x400, scoped, tag = 'input window, operand 10, single buffered']
    #allocation11 [shape = 'u8[512]{0}', space=vmem, size = 0x400, scoped, tag = 'output window, operand 1, single buffered']
    %20 = vsyncpa [#allocation6], 0
    %21 = vsyncpa [#allocation9], 0
    %22 = vsyncpa [#allocation7], 0
    // Predicated region
    $region2: #{gpgraph_forward.1} parent=1 // pred_check
      _
    $region3: #{gpgraph_forward.1} parent=1 // pred_check_branch
      %24 = sbr.rel (0) target = $region5
    $region4: #{gpgraph_forward.1} parent=1 // pred_region
      _
    $region5: #{gpgraph_forward.1} parent=1 // pred_fallthru
      _
    // Predicated region
    $region6: #{gpgraph_forward.1} parent=1 // pred_check
      _
    $region7: #{gpgraph_forward.1} parent=1 // pred_check_branch
      %26 = sbr.rel (0) target = $region9
    $region8: #{gpgraph_forward.1} parent=1 // pred_region
      _
    $region9: #{gpgraph_forward.1} parent=1 // pred_fallthru
      _
    // Predicated region
    $region10: #{gpgraph_forward.1} parent=1 // pred_check
      _
    $region11: #{gpgraph_forward.1} parent=1 // pred_check_branch
      %28 = sbr.rel (0) target = $region13
    $region12: #{gpgraph_forward.1} parent=1 // pred_region
      _
    $region13: #{gpgraph_forward.1} parent=1 // pred_fallthru
      _
    // Predicated region
    $region14: #{gpgraph_forward.1} parent=1 // pred_check
      _
    $region15: #{gpgraph_forward.1} parent=1 // pred_check_branch
      %30 = sbr.rel (0) target = $region17
    $region16: #{gpgraph_forward.1} parent=1 // pred_region
      _
    $region17: #{gpgraph_forward.1} parent=1 // pred_fallthru
      _
    // Predicated region
    $region18: #{gpgraph_forward.1} parent=1 // pred_check
      _
    $region19: #{gpgraph_forward.1} parent=1 // pred_check_branch
      %32 = sbr.rel (0) target = $region21
    $region20: #{gpgraph_forward.1} parent=1 // pred_region
      _
    $region21: #{gpgraph_forward.1} parent=1 // pred_fallthru
      _
    // Predicated region
    $region22: #{gpgraph_forward.1} parent=1 // pred_check
      _
    $region23: #{gpgraph_forward.1} parent=1 // pred_check_branch
      %34 = sbr.rel (0) target = $region25
    $region24: #{gpgraph_forward.1} parent=1 // pred_region
      _
    $region25: #{gpgraph_forward.1} parent=1 // pred_fallthru
      _
    // Predicated region
    $region26: #{gpgraph_forward.1} parent=1 // pred_check
      _
    $region27: #{gpgraph_forward.1} parent=1 // pred_check_branch
      %36 = sbr.rel (0) target = $region29
    $region28: #{gpgraph_forward.1} parent=1 // pred_region
      _
    $region29: #{gpgraph_forward.1} parent=1 // pred_fallthru
      _
    // Predicated region
    $region30: #{gpgraph_forward.1} parent=1 // pred_check
      _
    $region31: #{gpgraph_forward.1} parent=1 // pred_check_branch
      %38 = sbr.rel (0) target = $region33
    $region32: #{gpgraph_forward.1} parent=1 // pred_region
      _
    $region33: #{gpgraph_forward.1} parent=1 // pred_fallthru
      _
    // Predicated region
    $region34: #{gpgraph_forward.1} parent=1 // pred_check
      _
    $region35: #{gpgraph_forward.1} parent=1 // pred_check_branch
      %40 = sbr.rel (0) target = $region37
    $region36: #{gpgraph_forward.1} parent=1 // pred_region
      %s42 = ssub.s32 2048, 2048
      %43 = vsyncadd [#allocation6], %s42
      %s44 = sshll.u32 [#allocation5], 4
      %s45 = int_to_ptr.vmem [resolvable:$true] %s44
      %50 = dma.hbm_to_vmem [thread:$0]  %s8, 2048, %s45, [#allocation6], 128, 128, 8
    $region37: #{gpgraph_forward.1} parent=1 // pred_fallthru
      _
    // Predicated region
    $region38: #{gpgraph_forward.1} parent=1 // pred_check
      _
    $region39: #{gpgraph_forward.1} parent=1 // pred_check_branch
      %52 = sbr.rel (0) target = $region41
    $region40: #{gpgraph_forward.1} parent=1 // pred_region
      %s54 = ssub.s32 2048, 2048
      %55 = vsyncadd [#allocation9], %s54
      %s56 = sshll.u32 [#allocation8], 4
      %s57 = int_to_ptr.vmem [resolvable:$true] %s56
      %62 = dma.hbm_to_vmem [thread:$0]  %s9, 2048, %s57, [#allocation9], 128, 128, 8
    $region41: #{gpgraph_forward.1} parent=1 // pred_fallthru
      _
    // Predicated region
    $region42: #{gpgraph_forward.1} parent=1 // pred_check
      _
    $region43: #{gpgraph_forward.1} parent=1 // pred_check_branch
      %64 = sbr.rel (0) target = $region45
    $region44: #{gpgraph_forward.1} parent=1 // pred_region
      %s66 = ssub.s32 16, 16
      %67 = vsyncadd [#allocation9], %s66
      %s69 = sshll.u32 [#allocation10], 4
      %s70 = int_to_ptr.vmem [resolvable:$true] %s69
      %72 = dma.hbm_to_vmem [thread:$0]  %s10, 16, %s70, [#allocation9]
    $region45: #{gpgraph_forward.1} parent=1 // pred_fallthru
      _
    // Predicated region
    $region46: #{gpgraph_forward.1} parent=1 // pred_check
      _
    $region47: #{gpgraph_forward.1} parent=1 // pred_check_branch
      %74 = sbr.rel (0) target = $region49
    $region48: #{gpgraph_forward.1} parent=1 // pred_region
      %75 = dma.done [#allocation6], 2048
    $region49: #{gpgraph_forward.1} parent=1 // pred_fallthru
      _
    // Predicated region
    $region50: #{gpgraph_forward.1} parent=1 // pred_check
      _
    $region51: #{gpgraph_forward.1} parent=1 // pred_check_branch
      %77 = sbr.rel (0) target = $region53
    $region52: #{gpgraph_forward.1} parent=1 // pred_region
      %78 = dma.done [#allocation9], 2048
    $region53: #{gpgraph_forward.1} parent=1 // pred_fallthru
      _
    // Predicated region
    $region54: #{gpgraph_forward.1} parent=1 // pred_check
      _
    $region55: #{gpgraph_forward.1} parent=1 // pred_check_branch
      %80 = sbr.rel (0) target = $region57
    $region56: #{gpgraph_forward.1} parent=1 // pred_region
      %81 = dma.done [#allocation9], 16
    $region57: #{gpgraph_forward.1} parent=1 // pred_fallthru
      _
    %s82 = sld [smem:[#allocation3]]
    %s83 = sld [smem:[#allocation4]]
    %v84 = vld [vmem:[%s2] sm:$0x3]
    %86 = vrot.lane.b32.xlu0 %v84, 8
    %v87 = vpop.permute.xlu0 %86
    %vm89 = vcmask 64512
    %v90 = vsel %vm89, 0.0, %v87
    %91 = vrot.lane.b32.xlu0 %v84, 120
    %v92 = vpop.permute.xlu0 %91
    %vm94 = vcmask 457728
    %v95 = vsel %vm94, %v92, 0.0
    %v96 = vld [vmem:[%s4] sm:$0xff]
    %98 = vrot.lane.b32.xlu0 %v96, 126
    %v99 = vpop.permute.xlu0 %98
    %vm100 = vcmask 15360
    %v101 = vsel %vm100, %v99, 0
    %vm103 = vcmask 1041408
    %v104 = vsel %vm103, %v84, 0
    %106 = vmatprep.subr.mxu0 0.0
    %107 = vmatpush1.msra.mxu0 %v104
    %108 = vmatprep.subr.mxu0 0.0
    %109 = vmatpush1.msra.mxu0 0.0
    %110 = vmatprep.subr.mxu0 0.0
    %111 = vmatpush1.msra.mxu0 0.0
    %112 = vmatprep.subr.mxu0 0.0
    %113 = vmatpush1.msra.mxu0 0.0
    %114 = vmatprep.subr.mxu0 0.0
    %115 = vmatpush1.msra.mxu0 0.0
    %116 = vmatprep.subr.mxu0 0.0
    %117 = vmatpush1.msra.mxu0 0.0
    %118 = vmatprep.subr.mxu0 0.0
    %119 = vmatpush1.msra.mxu0 0.0
    %120 = vmatprep.subr.mxu0 0.0
    %121 = vmatpush1.msra.mxu0 0.0
    %122 = vmatprep.subr.mxu0 0.0
    %123 = vmatpush1.msra.mxu0 0.0
    %124 = vmatprep.subr.mxu0 0.0
    %125 = vmatpush1.msra.mxu0 0.0
    %126 = vmatprep.subr.mxu0 0.0
    %127 = vmatpush1.msra.mxu0 0.0
    %128 = vmatprep.subr.mxu0 0.0
    %129 = vmatpush1.msra.mxu0 0.0
    %130 = vmatprep.subr.mxu0 0.0
    %131 = vmatpush1.msra.mxu0 0.0
    %132 = vmatprep.subr.mxu0 0.0
    %133 = vmatpush1.msra.mxu0 0.0
    %134 = vmatprep.subr.mxu0 0.0
    %135 = vmatpush1.msra.mxu0 0.0
    %136 = vmatprep.subr.mxu0 0.0
    %137 = vmatpush1.msra.mxu0 0.0
    %138 = vmatprep.subr.mxu0 0.0
    %139 = vmatpush1.msra.mxu0 0.0
    %140 = vmatprep.subr.mxu0 0.0
    %141 = vmatpush1.msra.mxu0 0.0
    %142 = vmatprep.subr.mxu0 0.0
    %143 = vmatpush1.msra.mxu0 0.0
    %144 = vmatprep.subr.mxu0 0.0
    %145 = vmatpush1.msra.mxu0 0.0
    %146 = vmatprep.subr.mxu0 0.0
    %147 = vmatpush1.msra.mxu0 0.0
    %148 = vmatprep.subr.mxu0 0.0
    %149 = vmatpush1.msra.mxu0 0.0
    %150 = vmatprep.subr.mxu0 0.0
    %151 = vmatpush1.msra.mxu0 0.0
    %152 = vmatprep.subr.mxu0 0.0
    %153 = vmatpush1.msra.mxu0 0.0
    %154 = vmatprep.subr.mxu0 0.0
    %155 = vmatpush1.msra.mxu0 0.0
    %156 = vmatprep.subr.mxu0 0.0
    %157 = vmatpush1.msra.mxu0 0.0
    %158 = vmatprep.subr.mxu0 0.0
    %159 = vmatpush1.msra.mxu0 0.0
    %160 = vmatprep.subr.mxu0 0.0
    %161 = vmatpush1.msra.mxu0 0.0
    %162 = vmatprep.subr.mxu0 0.0
    %163 = vmatpush1.msra.mxu0 0.0
    %164 = vmatprep.subr.mxu0 0.0
    %165 = vmatpush1.msra.mxu0 0.0
    %166 = vmatprep.subr.mxu0 0.0
    %167 = vmatpush1.msra.mxu0 0.0
    %168 = vmatprep.subr.mxu0 0.0
    %169 = vmatpush1.msra.mxu0 0.0
    %170 = vmatprep.mubr.f32.mxu0 0.0
    %171 = vmatmul.mubr.f32.gmra.mrb[0].mxu0 %v101
    %v172 = vpop.f32.mrb[0].mxu0
    %v173 = vadd.f32 0.0, %v172
    %v174 = vpop.f32.mrb[0].mxu0
    %175 = vdwg.mxu0
    %v176 = vsel %vm100, %v96, 0
    %v179 = vsel %vm103, %v90, 0
    %181 = vmatprep.subr.mxu0 0.0
    %182 = vmatpush1.msra.mxu0 %v179
    %183 = vmatprep.subr.mxu0 0.0
    %184 = vmatpush1.msra.mxu0 0.0
    %185 = vmatprep.subr.mxu0 0.0
    %186 = vmatpush1.msra.mxu0 0.0
    %187 = vmatprep.subr.mxu0 0.0
    %188 = vmatpush1.msra.mxu0 0.0
    %189 = vmatprep.subr.mxu0 0.0
    %190 = vmatpush1.msra.mxu0 0.0
    %191 = vmatprep.subr.mxu0 0.0
    %192 = vmatpush1.msra.mxu0 0.0
    %193 = vmatprep.subr.mxu0 0.0
    %194 = vmatpush1.msra.mxu0 0.0
    %195 = vmatprep.subr.mxu0 0.0
    %196 = vmatpush1.msra.mxu0 0.0
    %197 = vmatprep.subr.mxu0 0.0
    %198 = vmatpush1.msra.mxu0 0.0
    %199 = vmatprep.subr.mxu0 0.0
    %200 = vmatpush1.msra.mxu0 0.0
    %201 = vmatprep.subr.mxu0 0.0
    %202 = vmatpush1.msra.mxu0 0.0
    %203 = vmatprep.subr.mxu0 0.0
    %204 = vmatpush1.msra.mxu0 0.0
    %205 = vmatprep.subr.mxu0 0.0
    %206 = vmatpush1.msra.mxu0 0.0
    %207 = vmatprep.subr.mxu0 0.0
    %208 = vmatpush1.msra.mxu0 0.0
    %209 = vmatprep.subr.mxu0 0.0
    %210 = vmatpush1.msra.mxu0 0.0
    %211 = vmatprep.subr.mxu0 0.0
    %212 = vmatpush1.msra.mxu0 0.0
    %213 = vmatprep.subr.mxu0 0.0
    %214 = vmatpush1.msra.mxu0 0.0
    %215 = vmatprep.subr.mxu0 0.0
    %216 = vmatpush1.msra.mxu0 0.0
    %217 = vmatprep.subr.mxu0 0.0
    %218 = vmatpush1.msra.mxu0 0.0
    %219 = vmatprep.subr.mxu0 0.0
    %220 = vmatpush1.msra.mxu0 0.0
    %221 = vmatprep.subr.mxu0 0.0
    %222 = vmatpush1.msra.mxu0 0.0
    %223 = vmatprep.subr.mxu0 0.0
    %224 = vmatpush1.msra.mxu0 0.0
    %225 = vmatprep.subr.mxu0 0.0
    %226 = vmatpush1.msra.mxu0 0.0
    %227 = vmatprep.subr.mxu0 0.0
    %228 = vmatpush1.msra.mxu0 0.0
    %229 = vmatprep.subr.mxu0 0.0
    %230 = vmatpush1.msra.mxu0 0.0
    %231 = vmatprep.subr.mxu0 0.0
    %232 = vmatpush1.msra.mxu0 0.0
    %233 = vmatprep.subr.mxu0 0.0
    %234 = vmatpush1.msra.mxu0 0.0
    %235 = vmatprep.subr.mxu0 0.0
    %236 = vmatpush1.msra.mxu0 0.0
    %237 = vmatprep.subr.mxu0 0.0
    %238 = vmatpush1.msra.mxu0 0.0
    %239 = vmatprep.subr.mxu0 0.0
    %240 = vmatpush1.msra.mxu0 0.0
    %241 = vmatprep.subr.mxu0 0.0
    %242 = vmatpush1.msra.mxu0 0.0
    %243 = vmatprep.subr.mxu0 0.0
    %244 = vmatpush1.msra.mxu0 0.0
    %245 = vmatprep.mubr.f32.mxu0 0.0
    %246 = vmatmul.mubr.f32.gmra.mrb[0].mxu0 %v176
    %v247 = vpop.f32.mrb[0].mxu0
    %v248 = vadd.f32 %v173, %v247
    %v249 = vpop.f32.mrb[0].mxu0
    %250 = vdwg.mxu0
    %251 = vrot.lane.b32.xlu0 %v96, 124
    %v252 = vpop.permute.xlu0 %251
    %v253 = vsel %vm100, %v252, 0
    %v256 = vsel %vm103, %v95, 0
    %258 = vmatprep.subr.mxu0 0.0
    %259 = vmatpush1.msra.mxu0 %v256
    %260 = vmatprep.subr.mxu0 0.0
    %261 = vmatpush1.msra.mxu0 0.0
    %262 = vmatprep.subr.mxu0 0.0
    %263 = vmatpush1.msra.mxu0 0.0
    %264 = vmatprep.subr.mxu0 0.0
    %265 = vmatpush1.msra.mxu0 0.0
    %266 = vmatprep.subr.mxu0 0.0
    %267 = vmatpush1.msra.mxu0 0.0
    %268 = vmatprep.subr.mxu0 0.0
    %269 = vmatpush1.msra.mxu0 0.0
    %270 = vmatprep.subr.mxu0 0.0
    %271 = vmatpush1.msra.mxu0 0.0
    %272 = vmatprep.subr.mxu0 0.0
    %273 = vmatpush1.msra.mxu0 0.0
    %274 = vmatprep.subr.mxu0 0.0
    %275 = vmatpush1.msra.mxu0 0.0
    %276 = vmatprep.subr.mxu0 0.0
    %277 = vmatpush1.msra.mxu0 0.0
    %278 = vmatprep.subr.mxu0 0.0
    %279 = vmatpush1.msra.mxu0 0.0
    %280 = vmatprep.subr.mxu0 0.0
    %281 = vmatpush1.msra.mxu0 0.0
    %282 = vmatprep.subr.mxu0 0.0
    %283 = vmatpush1.msra.mxu0 0.0
    %284 = vmatprep.subr.mxu0 0.0
    %285 = vmatpush1.msra.mxu0 0.0
    %286 = vmatprep.subr.mxu0 0.0
    %287 = vmatpush1.msra.mxu0 0.0
    %288 = vmatprep.subr.mxu0 0.0
    %289 = vmatpush1.msra.mxu0 0.0
    %290 = vmatprep.subr.mxu0 0.0
    %291 = vmatpush1.msra.mxu0 0.0
    %292 = vmatprep.subr.mxu0 0.0
    %293 = vmatpush1.msra.mxu0 0.0
    %294 = vmatprep.subr.mxu0 0.0
    %295 = vmatpush1.msra.mxu0 0.0
    %296 = vmatprep.subr.mxu0 0.0
    %297 = vmatpush1.msra.mxu0 0.0
    %298 = vmatprep.subr.mxu0 0.0
    %299 = vmatpush1.msra.mxu0 0.0
    %300 = vmatprep.subr.mxu0 0.0
    %301 = vmatpush1.msra.mxu0 0.0
    %302 = vmatprep.subr.mxu0 0.0
    %303 = vmatpush1.msra.mxu0 0.0
    %304 = vmatprep.subr.mxu0 0.0
    %305 = vmatpush1.msra.mxu0 0.0
    %306 = vmatprep.subr.mxu0 0.0
    %307 = vmatpush1.msra.mxu0 0.0
    %308 = vmatprep.subr.mxu0 0.0
    %309 = vmatpush1.msra.mxu0 0.0
    %310 = vmatprep.subr.mxu0 0.0
    %311 = vmatpush1.msra.mxu0 0.0
    %312 = vmatprep.subr.mxu0 0.0
    %313 = vmatpush1.msra.mxu0 0.0
    %314 = vmatprep.subr.mxu0 0.0
    %315 = vmatpush1.msra.mxu0 0.0
    %316 = vmatprep.subr.mxu0 0.0
    %317 = vmatpush1.msra.mxu0 0.0
    %318 = vmatprep.subr.mxu0 0.0
    %319 = vmatpush1.msra.mxu0 0.0
    %320 = vmatprep.subr.mxu0 0.0
    %321 = vmatpush1.msra.mxu0 0.0
    %322 = vmatprep.mubr.f32.mxu0 0.0
    %323 = vmatmul.mubr.f32.gmra.mrb[0].mxu0 %v253
    %v324 = vpop.f32.mrb[0].mxu0
    %v325 = vadd.f32 0.0, %v324
    %v326 = vpop.f32.mrb[0].mxu0
    %327 = vdwg.mxu0
    %v328 = vadd.f32 %v248, %v325
    %v329 = vld [vmem:[%s5] sm:$0xff]
    %331 = vset.pattern.permute.xlu0 0
    %332 = vperm.xlu0 %331, %v329
    %v333 = vpop.permute.xlu0 %332
    %v335 = vadd.f32 %v328, %v333
    %v336 = vmul.f32 %v335, %v335
    %vm337 = vcmask 523264
    %v338 = vsel %vm337, %v336, 0.0
    %v339 = vrot.slane %v338, 4
    %v340 = vadd.f32 %v338, %v339
    %v341 = vrot.slane %v340, 2
    %v342 = vadd.f32 %v340, %v341
    %v343 = vrot.slane %v342, 1
    %v344 = vadd.f32 %v342, %v343
    %345 = vxpose.xlu0.b32.start [1/16] %v336, 128
    %346 = vxpose.xlu0.b32.cont [2/16] 0.0, 128
    %347 = vxpose.xlu0.b32.cont [3/16] 0.0, 128
    %348 = vxpose.xlu0.b32.cont [4/16] 0.0, 128
    %349 = vxpose.xlu0.b32.cont [5/16] 0.0, 128
    %350 = vxpose.xlu0.b32.cont [6/16] 0.0, 128
    %351 = vxpose.xlu0.b32.cont [7/16] 0.0, 128
    %352 = vxpose.xlu0.b32.cont [8/16] 0.0, 128
    %353 = vxpose.xlu0.b32.cont [9/16] 0.0, 128
    %354 = vxpose.xlu0.b32.cont [10/16] 0.0, 128
    %355 = vxpose.xlu0.b32.cont [11/16] 0.0, 128
    %356 = vxpose.xlu0.b32.cont [12/16] 0.0, 128
    %357 = vxpose.xlu0.b32.cont [13/16] 0.0, 128
    %358 = vxpose.xlu0.b32.cont [14/16] 0.0, 128
    %359 = vxpose.xlu0.b32.cont [15/16] 0.0, 128
    %360 = vxpose.xlu0.b32.end [16/16] 0.0, 128
    %v361 = vpop.trf.xlu0
    %v362 = vpop.trf.xlu0
    %v363 = vpop.trf.xlu0
    %v364 = vpop.trf.xlu0
    %v365 = vpop.trf.xlu0
    %v366 = vpop.trf.xlu0
    %v367 = vpop.trf.xlu0
    %v368 = vpop.trf.xlu0
    %v369 = vpop.trf.xlu0
    %v370 = vpop.trf.xlu0
    %v371 = vpop.trf.xlu0
    %v372 = vpop.trf.xlu0
    %v373 = vpop.trf.xlu0
    %v374 = vpop.trf.xlu0
    %v375 = vpop.trf.xlu0
    %v376 = vpop.trf.xlu0
    %v378 = vsel %vm89, %v361, 0
    %v381 = vsel %vm89, %v362, 0
    %v384 = vsel %vm89, %v363, 0
    %v387 = vsel %vm89, %v364, 0
    %v390 = vsel %vm89, %v365, 0
    %v393 = vsel %vm89, %v366, 0
    %v396 = vsel %vm89, %v367, 0
    %v399 = vsel %vm89, %v368, 0
    %401 = vmatprep.subr.mxu0 0.0
    %402 = vmatpush1.msra.mxu0 1.0
    %403 = vmatprep.subr.mxu0 0.0
    %404 = vmatpush1.msra.mxu0 0.0
    %405 = vmatprep.subr.mxu0 0.0
    %406 = vmatpush1.msra.mxu0 0.0
    %407 = vmatprep.subr.mxu0 0.0
    %408 = vmatpush1.msra.mxu0 0.0
    %409 = vmatprep.subr.mxu0 0.0
    %410 = vmatpush1.msra.mxu0 0.0
    %411 = vmatprep.subr.mxu0 0.0
    %412 = vmatpush1.msra.mxu0 0.0
    %413 = vmatprep.subr.mxu0 0.0
    %414 = vmatpush1.msra.mxu0 0.0
    %415 = vmatprep.subr.mxu0 0.0
    %416 = vmatpush1.msra.mxu0 0.0
    %417 = vmatprep.subr.mxu0 0.0
    %418 = vmatpush1.msra.mxu0 0.0
    %419 = vmatprep.subr.mxu0 0.0
    %420 = vmatpush1.msra.mxu0 0.0
    %421 = vmatprep.subr.mxu0 0.0
    %422 = vmatpush1.msra.mxu0 0.0
    %423 = vmatprep.subr.mxu0 0.0
    %424 = vmatpush1.msra.mxu0 0.0
    %425 = vmatprep.subr.mxu0 0.0
    %426 = vmatpush1.msra.mxu0 0.0
    %427 = vmatprep.subr.mxu0 0.0
    %428 = vmatpush1.msra.mxu0 0.0
    %429 = vmatprep.subr.mxu0 0.0
    %430 = vmatpush1.msra.mxu0 0.0
    %431 = vmatprep.subr.mxu0 0.0
    %432 = vmatpush1.msra.mxu0 0.0
    %433 = vmatprep.subr.mxu0 0.0
    %434 = vmatpush1.msra.mxu0 0.0
    %435 = vmatprep.subr.mxu0 0.0
    %436 = vmatpush1.msra.mxu0 0.0
    %437 = vmatprep.subr.mxu0 0.0
    %438 = vmatpush1.msra.mxu0 0.0
    %439 = vmatprep.subr.mxu0 0.0
    %440 = vmatpush1.msra.mxu0 0.0
    %441 = vmatprep.subr.mxu0 0.0
    %442 = vmatpush1.msra.mxu0 0.0
    %443 = vmatprep.subr.mxu0 0.0
    %444 = vmatpush1.msra.mxu0 0.0
    %445 = vmatprep.subr.mxu0 0.0
    %446 = vmatpush1.msra.mxu0 0.0
    %447 = vmatprep.subr.mxu0 0.0
    %448 = vmatpush1.msra.mxu0 0.0
    %449 = vmatprep.subr.mxu0 0.0
    %450 = vmatpush1.msra.mxu0 0.0
    %451 = vmatprep.subr.mxu0 0.0
    %452 = vmatpush1.msra.mxu0 0.0
    %453 = vmatprep.subr.mxu0 0.0
    %454 = vmatpush1.msra.mxu0 0.0
    %455 = vmatprep.subr.mxu0 0.0
    %456 = vmatpush1.msra.mxu0 0.0
    %457 = vmatprep.subr.mxu0 0.0
    %458 = vmatpush1.msra.mxu0 0.0
    %459 = vmatprep.subr.mxu0 0.0
    %460 = vmatpush1.msra.mxu0 0.0
    %461 = vmatprep.subr.mxu0 0.0
    %462 = vmatpush1.msra.mxu0 0.0
    %463 = vmatprep.subr.mxu0 0.0
    %464 = vmatpush1.msra.mxu0 0.0
    %465 = vmatprep.mubr.f32.mxu0 0.0
    %466 = vmatmul.mubr.f32.gmra.mrb[0].mxu0 %v378
    %v467 = vpop.f32.mrb[0].mxu0
    %v468 = vadd.f32 0.0, %v467
    %v469 = vpop.f32.mrb[0].mxu0
    %470 = vmatprep.mubr.f32.mxu0 0.0
    %471 = vmatmul.mubr.f32.gmra.mrb[0].mxu0 %v381
    %v472 = vpop.f32.mrb[0].mxu0
    %v473 = vadd.f32 0.0, %v472
    %v474 = vpop.f32.mrb[0].mxu0
    %475 = vmatprep.mubr.f32.mxu0 0.0
    %476 = vmatmul.mubr.f32.gmra.mrb[0].mxu0 %v384
    %v477 = vpop.f32.mrb[0].mxu0
    %v478 = vadd.f32 0.0, %v477
    %v479 = vpop.f32.mrb[0].mxu0
    %480 = vmatprep.mubr.f32.mxu0 0.0
    %481 = vmatmul.mubr.f32.gmra.mrb[0].mxu0 %v387
    %v482 = vpop.f32.mrb[0].mxu0
    %v483 = vadd.f32 0.0, %v482
    %v484 = vpop.f32.mrb[0].mxu0
    %485 = vmatprep.mubr.f32.mxu0 0.0
    %486 = vmatmul.mubr.f32.gmra.mrb[0].mxu0 %v390
    %v487 = vpop.f32.mrb[0].mxu0
    %v488 = vadd.f32 0.0, %v487
    %v489 = vpop.f32.mrb[0].mxu0
    %490 = vmatprep.mubr.f32.mxu0 0.0
    %491 = vmatmul.mubr.f32.gmra.mrb[0].mxu0 %v393
    %v492 = vpop.f32.mrb[0].mxu0
    %v493 = vadd.f32 0.0, %v492
    %v494 = vpop.f32.mrb[0].mxu0
    %495 = vmatprep.mubr.f32.mxu0 0.0
    %496 = vmatmul.mubr.f32.gmra.mrb[0].mxu0 %v396
    %v497 = vpop.f32.mrb[0].mxu0
    %v498 = vadd.f32 0.0, %v497
    %v499 = vpop.f32.mrb[0].mxu0
    %500 = vmatprep.mubr.f32.mxu0 0.0
    %501 = vmatmul.mubr.f32.gmra.mrb[0].mxu0 %v399
    %v502 = vpop.f32.mrb[0].mxu0
    %v503 = vadd.f32 0.0, %v502
    %v504 = vpop.f32.mrb[0].mxu0
    %505 = vdwg.mxu0
    %506 = vxpose.xlu0.b32.start [1/16] %v335, 128
    %507 = vxpose.xlu0.b32.cont [2/16] 0.0, 128
    %508 = vxpose.xlu0.b32.cont [3/16] 0.0, 128
    %509 = vxpose.xlu0.b32.cont [4/16] 0.0, 128
    %510 = vxpose.xlu0.b32.cont [5/16] 0.0, 128
    %511 = vxpose.xlu0.b32.cont [6/16] 0.0, 128
    %512 = vxpose.xlu0.b32.cont [7/16] 0.0, 128
    %513 = vxpose.xlu0.b32.cont [8/16] 0.0, 128
    %514 = vxpose.xlu0.b32.cont [9/16] 0.0, 128
    %515 = vxpose.xlu0.b32.cont [10/16] 0.0, 128
    %516 = vxpose.xlu0.b32.cont [11/16] 0.0, 128
    %517 = vxpose.xlu0.b32.cont [12/16] 0.0, 128
    %518 = vxpose.xlu0.b32.cont [13/16] 0.0, 128
    %519 = vxpose.xlu0.b32.cont [14/16] 0.0, 128
    %520 = vxpose.xlu0.b32.cont [15/16] 0.0, 128
    %521 = vxpose.xlu0.b32.end [16/16] 0.0, 128
    %v522 = vpop.trf.xlu0
    %v523 = vpop.trf.xlu0
    %v524 = vpop.trf.xlu0
    %v525 = vpop.trf.xlu0
    %v526 = vpop.trf.xlu0
    %v527 = vpop.trf.xlu0
    %v528 = vpop.trf.xlu0
    %v529 = vpop.trf.xlu0
    %v530 = vpop.trf.xlu0
    %v531 = vpop.trf.xlu0
    %v532 = vpop.trf.xlu0
    %v533 = vpop.trf.xlu0
    %v534 = vpop.trf.xlu0
    %v535 = vpop.trf.xlu0
    %v536 = vpop.trf.xlu0
    %v537 = vpop.trf.xlu0
    %v539 = vsel %vm89, %v522, 0
    %541 = vmatprep.subr.mxu0 0.0
    %542 = vmatpush1.msra.mxu0 %v335
    %543 = vmatprep.subr.mxu0 0.0
    %544 = vmatpush1.msra.mxu0 0.0
    %545 = vmatprep.subr.mxu0 0.0
    %546 = vmatpush1.msra.mxu0 0.0
    %547 = vmatprep.subr.mxu0 0.0
    %548 = vmatpush1.msra.mxu0 0.0
    %549 = vmatprep.subr.mxu0 0.0
    %550 = vmatpush1.msra.mxu0 0.0
    %551 = vmatprep.subr.mxu0 0.0
    %552 = vmatpush1.msra.mxu0 0.0
    %553 = vmatprep.subr.mxu0 0.0
    %554 = vmatpush1.msra.mxu0 0.0
    %555 = vmatprep.subr.mxu0 0.0
    %556 = vmatpush1.msra.mxu0 0.0
    %557 = vmatprep.subr.mxu0 0.0
    %558 = vmatpush1.msra.mxu0 0.0
    %559 = vmatprep.subr.mxu0 0.0
    %560 = vmatpush1.msra.mxu0 0.0
    %561 = vmatprep.subr.mxu0 0.0
    %562 = vmatpush1.msra.mxu0 0.0
    %563 = vmatprep.subr.mxu0 0.0
    %564 = vmatpush1.msra.mxu0 0.0
    %565 = vmatprep.subr.mxu0 0.0
    %566 = vmatpush1.msra.mxu0 0.0
    %567 = vmatprep.subr.mxu0 0.0
    %568 = vmatpush1.msra.mxu0 0.0
    %569 = vmatprep.subr.mxu0 0.0
    %570 = vmatpush1.msra.mxu0 0.0
    %571 = vmatprep.subr.mxu0 0.0
    %572 = vmatpush1.msra.mxu0 0.0
    %573 = vmatprep.subr.mxu0 0.0
    %574 = vmatpush1.msra.mxu0 0.0
    %575 = vmatprep.subr.mxu0 0.0
    %576 = vmatpush1.msra.mxu0 0.0
    %577 = vmatprep.subr.mxu0 0.0
    %578 = vmatpush1.msra.mxu0 0.0
    %579 = vmatprep.subr.mxu0 0.0
    %580 = vmatpush1.msra.mxu0 0.0
    %581 = vmatprep.subr.mxu0 0.0
    %582 = vmatpush1.msra.mxu0 0.0
    %583 = vmatprep.subr.mxu0 0.0
    %584 = vmatpush1.msra.mxu0 0.0
    %585 = vmatprep.subr.mxu0 0.0
    %586 = vmatpush1.msra.mxu0 0.0
    %587 = vmatprep.subr.mxu0 0.0
    %588 = vmatpush1.msra.mxu0 0.0
    %589 = vmatprep.subr.mxu0 0.0
    %590 = vmatpush1.msra.mxu0 0.0
    %591 = vmatprep.subr.mxu0 0.0
    %592 = vmatpush1.msra.mxu0 0.0
    %593 = vmatprep.subr.mxu0 0.0
    %594 = vmatpush1.msra.mxu0 0.0
    %595 = vmatprep.subr.mxu0 0.0
    %596 = vmatpush1.msra.mxu0 0.0
    %597 = vmatprep.subr.mxu0 0.0
    %598 = vmatpush1.msra.mxu0 0.0
    %599 = vmatprep.subr.mxu0 0.0
    %600 = vmatpush1.msra.mxu0 0.0
    %601 = vmatprep.subr.mxu0 0.0
    %602 = vmatpush1.msra.mxu0 0.0
    %603 = vmatprep.subr.mxu0 0.0
    %604 = vmatpush1.msra.mxu0 0.0
    %605 = vmatprep.mubr.f32.mxu0 0.0
    %606 = vmatmul.mubr.f32.gmra.mrb[0].mxu0 %v539
    %v607 = vpop.f32.mrb[0].mxu0
    %v608 = vadd.f32 0.0, %v607
    %v609 = vpop.f32.mrb[0].mxu0
    %610 = vdwg.mxu0
    %612 = vset.pattern.permute.xlu0 0
    %613 = vperm.xlu0 %612, %v468
    %v614 = vpop.permute.xlu0 %613
    %v616 = vadd.f32 %v614, %v344
    %v617 = vmul.f32 %v608, 2.0
    %v618 = vsub.f32 %v616, %v617
    %v619 = vmax.f32 %v618, 0.0
    %v620 = vrsqrt.pop %v619
    %v621 = vmul.f32 %v619, %v620
    %vm622 = vcmp.eq.f32.partialorder %v619, inf
    %v623 = vsel %vm622, %v619, %v621
    %vm624 = vcmp.eq.f32.partialorder %v619, 0.0
    %v625 = vand.u32 %v619, 2147483648
    %v626 = vsel %vm624, %v625, %v623
    %v627 = vadd.f32 %v626, 0.0
    %629 = vrot.lane.b32.xlu0 %v335, 120
    %v630 = vpop.permute.xlu0 %629
    %632 = vxpose.xlu0.b32.start [1/16] %v630, 128
    %633 = vxpose.xlu0.b32.cont [2/16] 0.0, 128
    %634 = vxpose.xlu0.b32.cont [3/16] 0.0, 128
    %635 = vxpose.xlu0.b32.cont [4/16] 0.0, 128
    %636 = vxpose.xlu0.b32.cont [5/16] 0.0, 128
    %637 = vxpose.xlu0.b32.cont [6/16] 0.0, 128
    %638 = vxpose.xlu0.b32.cont [7/16] 0.0, 128
    %639 = vxpose.xlu0.b32.cont [8/16] 0.0, 128
    %640 = vxpose.xlu0.b32.cont [9/16] 0.0, 128
    %641 = vxpose.xlu0.b32.cont [10/16] 0.0, 128
    %642 = vxpose.xlu0.b32.cont [11/16] 0.0, 128
    %643 = vxpose.xlu0.b32.cont [12/16] 0.0, 128
    %644 = vxpose.xlu0.b32.cont [13/16] 0.0, 128
    %645 = vxpose.xlu0.b32.cont [14/16] 0.0, 128
    %646 = vxpose.xlu0.b32.cont [15/16] 0.0, 128
    %647 = vxpose.xlu0.b32.end [16/16] 0.0, 128
    %v648 = vpop.trf.xlu0
    %v649 = vpop.trf.xlu0
    %v650 = vpop.trf.xlu0
    %v651 = vpop.trf.xlu0
    %v652 = vpop.trf.xlu0
    %v653 = vpop.trf.xlu0
    %v654 = vpop.trf.xlu0
    %v655 = vpop.trf.xlu0
    %v656 = vpop.trf.xlu0
    %v657 = vpop.trf.xlu0
    %v658 = vpop.trf.xlu0
    %v659 = vpop.trf.xlu0
    %v660 = vpop.trf.xlu0
    %v661 = vpop.trf.xlu0
    %v662 = vpop.trf.xlu0
    %v663 = vpop.trf.xlu0
    %v665 = vsel %vm89, %v648, 0
    %667 = vmatprep.subr.mxu0 0.0
    %668 = vmatpush1.msra.mxu0 %v630
    %669 = vmatprep.subr.mxu0 0.0
    %670 = vmatpush1.msra.mxu0 0.0
    %671 = vmatprep.subr.mxu0 0.0
    %672 = vmatpush1.msra.mxu0 0.0
    %673 = vmatprep.subr.mxu0 0.0
    %674 = vmatpush1.msra.mxu0 0.0
    %675 = vmatprep.subr.mxu0 0.0
    %676 = vmatpush1.msra.mxu0 0.0
    %677 = vmatprep.subr.mxu0 0.0
    %678 = vmatpush1.msra.mxu0 0.0
    %679 = vmatprep.subr.mxu0 0.0
    %680 = vmatpush1.msra.mxu0 0.0
    %681 = vmatprep.subr.mxu0 0.0
    %682 = vmatpush1.msra.mxu0 0.0
    %683 = vmatprep.subr.mxu0 0.0
    %684 = vmatpush1.msra.mxu0 0.0
    %685 = vmatprep.subr.mxu0 0.0
    %686 = vmatpush1.msra.mxu0 0.0
    %687 = vmatprep.subr.mxu0 0.0
    %688 = vmatpush1.msra.mxu0 0.0
    %689 = vmatprep.subr.mxu0 0.0
    %690 = vmatpush1.msra.mxu0 0.0
    %691 = vmatprep.subr.mxu0 0.0
    %692 = vmatpush1.msra.mxu0 0.0
    %693 = vmatprep.subr.mxu0 0.0
    %694 = vmatpush1.msra.mxu0 0.0
    %695 = vmatprep.subr.mxu0 0.0
    %696 = vmatpush1.msra.mxu0 0.0
    %697 = vmatprep.subr.mxu0 0.0
    %698 = vmatpush1.msra.mxu0 0.0
    %699 = vmatprep.subr.mxu0 0.0
    %700 = vmatpush1.msra.mxu0 0.0
    %701 = vmatprep.subr.mxu0 0.0
    %702 = vmatpush1.msra.mxu0 0.0
    %703 = vmatprep.subr.mxu0 0.0
    %704 = vmatpush1.msra.mxu0 0.0
    %705 = vmatprep.subr.mxu0 0.0
    %706 = vmatpush1.msra.mxu0 0.0
    %707 = vmatprep.subr.mxu0 0.0
    %708 = vmatpush1.msra.mxu0 0.0
    %709 = vmatprep.subr.mxu0 0.0
    %710 = vmatpush1.msra.mxu0 0.0
    %711 = vmatprep.subr.mxu0 0.0
    %712 = vmatpush1.msra.mxu0 0.0
    %713 = vmatprep.subr.mxu0 0.0
    %714 = vmatpush1.msra.mxu0 0.0
    %715 = vmatprep.subr.mxu0 0.0
    %716 = vmatpush1.msra.mxu0 0.0
    %717 = vmatprep.subr.mxu0 0.0
    %718 = vmatpush1.msra.mxu0 0.0
    %719 = vmatprep.subr.mxu0 0.0
    %720 = vmatpush1.msra.mxu0 0.0
    %721 = vmatprep.subr.mxu0 0.0
    %722 = vmatpush1.msra.mxu0 0.0
    %723 = vmatprep.subr.mxu0 0.0
    %724 = vmatpush1.msra.mxu0 0.0
    %725 = vmatprep.subr.mxu0 0.0
    %726 = vmatpush1.msra.mxu0 0.0
    %727 = vmatprep.subr.mxu0 0.0
    %728 = vmatpush1.msra.mxu0 0.0
    %729 = vmatprep.subr.mxu0 0.0
    %730 = vmatpush1.msra.mxu0 0.0
    %731 = vmatprep.mubr.f32.mxu0 0.0
    %732 = vmatmul.mubr.f32.gmra.mrb[0].mxu0 %v665
    %v733 = vpop.f32.mrb[0].mxu0
    %v734 = vadd.f32 0.0, %v733
    %v735 = vpop.f32.mrb[0].mxu0
    %736 = vdwg.mxu0
    %738 = vset.pattern.permute.xlu0 0
    %739 = vperm.xlu0 %738, %v473
    %v740 = vpop.permute.xlu0 %739
    %v742 = vadd.f32 %v740, %v344
    %v743 = vmul.f32 %v734, 2.0
    %745 = vrot.lane.b32.xlu0 %v743, 8
    %v746 = vpop.permute.xlu0 %745
    %v748 = vsub.f32 %v742, %v746
    %v749 = vmax.f32 %v748, 0.0
    %v750 = vrsqrt.pop %v749
    %v751 = vmul.f32 %v749, %v750
    %vm752 = vcmp.eq.f32.partialorder %v749, inf
    %v753 = vsel %vm752, %v749, %v751
    %vm754 = vcmp.eq.f32.partialorder %v749, 0.0
    %v755 = vand.u32 %v749, 2147483648
    %v756 = vsel %vm754, %v755, %v753
    %758 = vrot.lane.b32.xlu0 %v756, 120
    %v759 = vpop.permute.xlu0 %758
    %v761 = vadd.f32 %v627, %v759
    %762 = vrot.lane.b32.xlu0 %v335, 112
    %v763 = vpop.permute.xlu0 %762
    %765 = vxpose.xlu0.b32.start [1/16] %v763, 128
    %766 = vxpose.xlu0.b32.cont [2/16] 0.0, 128
    %767 = vxpose.xlu0.b32.cont [3/16] 0.0, 128
    %768 = vxpose.xlu0.b32.cont [4/16] 0.0, 128
    %769 = vxpose.xlu0.b32.cont [5/16] 0.0, 128
    %770 = vxpose.xlu0.b32.cont [6/16] 0.0, 128
    %771 = vxpose.xlu0.b32.cont [7/16] 0.0, 128
    %772 = vxpose.xlu0.b32.cont [8/16] 0.0, 128
    %773 = vxpose.xlu0.b32.cont [9/16] 0.0, 128
    %774 = vxpose.xlu0.b32.cont [10/16] 0.0, 128
    %775 = vxpose.xlu0.b32.cont [11/16] 0.0, 128
    %776 = vxpose.xlu0.b32.cont [12/16] 0.0, 128
    %777 = vxpose.xlu0.b32.cont [13/16] 0.0, 128
    %778 = vxpose.xlu0.b32.cont [14/16] 0.0, 128
    %779 = vxpose.xlu0.b32.cont [15/16] 0.0, 128
    %780 = vxpose.xlu0.b32.end [16/16] 0.0, 128
    %v781 = vpop.trf.xlu0
    %v782 = vpop.trf.xlu0
    %v783 = vpop.trf.xlu0
    %v784 = vpop.trf.xlu0
    %v785 = vpop.trf.xlu0
    %v786 = vpop.trf.xlu0
    %v787 = vpop.trf.xlu0
    %v788 = vpop.trf.xlu0
    %v789 = vpop.trf.xlu0
    %v790 = vpop.trf.xlu0
    %v791 = vpop.trf.xlu0
    %v792 = vpop.trf.xlu0
    %v793 = vpop.trf.xlu0
    %v794 = vpop.trf.xlu0
    %v795 = vpop.trf.xlu0
    %v796 = vpop.trf.xlu0
    %v798 = vsel %vm89, %v781, 0
    %800 = vmatprep.subr.mxu0 0.0
    %801 = vmatpush1.msra.mxu0 %v763
    %802 = vmatprep.subr.mxu0 0.0
    %803 = vmatpush1.msra.mxu0 0.0
    %804 = vmatprep.subr.mxu0 0.0
    %805 = vmatpush1.msra.mxu0 0.0
    %806 = vmatprep.subr.mxu0 0.0
    %807 = vmatpush1.msra.mxu0 0.0
    %808 = vmatprep.subr.mxu0 0.0
    %809 = vmatpush1.msra.mxu0 0.0
    %810 = vmatprep.subr.mxu0 0.0
    %811 = vmatpush1.msra.mxu0 0.0
    %812 = vmatprep.subr.mxu0 0.0
    %813 = vmatpush1.msra.mxu0 0.0
    %814 = vmatprep.subr.mxu0 0.0
    %815 = vmatpush1.msra.mxu0 0.0
    %816 = vmatprep.subr.mxu0 0.0
    %817 = vmatpush1.msra.mxu0 0.0
    %818 = vmatprep.subr.mxu0 0.0
    %819 = vmatpush1.msra.mxu0 0.0
    %820 = vmatprep.subr.mxu0 0.0
    %821 = vmatpush1.msra.mxu0 0.0
    %822 = vmatprep.subr.mxu0 0.0
    %823 = vmatpush1.msra.mxu0 0.0
    %824 = vmatprep.subr.mxu0 0.0
    %825 = vmatpush1.msra.mxu0 0.0
    %826 = vmatprep.subr.mxu0 0.0
    %827 = vmatpush1.msra.mxu0 0.0
    %828 = vmatprep.subr.mxu0 0.0
    %829 = vmatpush1.msra.mxu0 0.0
    %830 = vmatprep.subr.mxu0 0.0
    %831 = vmatpush1.msra.mxu0 0.0
    %832 = vmatprep.subr.mxu0 0.0
    %833 = vmatpush1.msra.mxu0 0.0
    %834 = vmatprep.subr.mxu0 0.0
    %835 = vmatpush1.msra.mxu0 0.0
    %836 = vmatprep.subr.mxu0 0.0
    %837 = vmatpush1.msra.mxu0 0.0
    %838 = vmatprep.subr.mxu0 0.0
    %839 = vmatpush1.msra.mxu0 0.0
    %840 = vmatprep.subr.mxu0 0.0
    %841 = vmatpush1.msra.mxu0 0.0
    %842 = vmatprep.subr.mxu0 0.0
    %843 = vmatpush1.msra.mxu0 0.0
    %844 = vmatprep.subr.mxu0 0.0
    %845 = vmatpush1.msra.mxu0 0.0
    %846 = vmatprep.subr.mxu0 0.0
    %847 = vmatpush1.msra.mxu0 0.0
    %848 = vmatprep.subr.mxu0 0.0
    %849 = vmatpush1.msra.mxu0 0.0
    %850 = vmatprep.subr.mxu0 0.0
    %851 = vmatpush1.msra.mxu0 0.0
    %852 = vmatprep.subr.mxu0 0.0
    %853 = vmatpush1.msra.mxu0 0.0
    %854 = vmatprep.subr.mxu0 0.0
    %855 = vmatpush1.msra.mxu0 0.0
    %856 = vmatprep.subr.mxu0 0.0
    %857 = vmatpush1.msra.mxu0 0.0
    %858 = vmatprep.subr.mxu0 0.0
    %859 = vmatpush1.msra.mxu0 0.0
    %860 = vmatprep.subr.mxu0 0.0
    %861 = vmatpush1.msra.mxu0 0.0
    %862 = vmatprep.subr.mxu0 0.0
    %863 = vmatpush1.msra.mxu0 0.0
    %864 = vmatprep.mubr.f32.mxu0 0.0
    %865 = vmatmul.mubr.f32.gmra.mrb[0].mxu0 %v798
    %v866 = vpop.f32.mrb[0].mxu0
    %v867 = vadd.f32 0.0, %v866
    %v868 = vpop.f32.mrb[0].mxu0
    %869 = vdwg.mxu0
    %871 = vset.pattern.permute.xlu0 0
    %872 = vperm.xlu0 %871, %v478
    %v873 = vpop.permute.xlu0 %872
    %v875 = vadd.f32 %v873, %v344
    %v876 = vmul.f32 %v867, 2.0
    %878 = vrot.lane.b32.xlu0 %v876, 16
    %v879 = vpop.permute.xlu0 %878
    %v881 = vsub.f32 %v875, %v879
    %v882 = vmax.f32 %v881, 0.0
    %v883 = vrsqrt.pop %v882
    %v884 = vmul.f32 %v882, %v883
    %vm885 = vcmp.eq.f32.partialorder %v882, inf
    %v886 = vsel %vm885, %v882, %v884
    %vm887 = vcmp.eq.f32.partialorder %v882, 0.0
    %v888 = vand.u32 %v882, 2147483648
    %v889 = vsel %vm887, %v888, %v886
    %891 = vrot.lane.b32.xlu0 %v889, 112
    %v892 = vpop.permute.xlu0 %891
    %v894 = vadd.f32 %v761, %v892
    %895 = vrot.lane.b32.xlu0 %v335, 104
    %v896 = vpop.permute.xlu0 %895
    %898 = vxpose.xlu0.b32.start [1/16] %v896, 128
    %899 = vxpose.xlu0.b32.cont [2/16] 0.0, 128
    %900 = vxpose.xlu0.b32.cont [3/16] 0.0, 128
    %901 = vxpose.xlu0.b32.cont [4/16] 0.0, 128
    %902 = vxpose.xlu0.b32.cont [5/16] 0.0, 128
    %903 = vxpose.xlu0.b32.cont [6/16] 0.0, 128
    %904 = vxpose.xlu0.b32.cont [7/16] 0.0, 128
    %905 = vxpose.xlu0.b32.cont [8/16] 0.0, 128
    %906 = vxpose.xlu0.b32.cont [9/16] 0.0, 128
    %907 = vxpose.xlu0.b32.cont [10/16] 0.0, 128
    %908 = vxpose.xlu0.b32.cont [11/16] 0.0, 128
    %909 = vxpose.xlu0.b32.cont [12/16] 0.0, 128
    %910 = vxpose.xlu0.b32.cont [13/16] 0.0, 128
    %911 = vxpose.xlu0.b32.cont [14/16] 0.0, 128
    %912 = vxpose.xlu0.b32.cont [15/16] 0.0, 128
    %913 = vxpose.xlu0.b32.end [16/16] 0.0, 128
    %v914 = vpop.trf.xlu0
    %v915 = vpop.trf.xlu0
    %v916 = vpop.trf.xlu0
    %v917 = vpop.trf.xlu0
    %v918 = vpop.trf.xlu0
    %v919 = vpop.trf.xlu0
    %v920 = vpop.trf.xlu0
    %v921 = vpop.trf.xlu0
    %v922 = vpop.trf.xlu0
    %v923 = vpop.trf.xlu0
    %v924 = vpop.trf.xlu0
    %v925 = vpop.trf.xlu0
    %v926 = vpop.trf.xlu0
    %v927 = vpop.trf.xlu0
    %v928 = vpop.trf.xlu0
    %v929 = vpop.trf.xlu0
    %v931 = vsel %vm89, %v914, 0
    %933 = vmatprep.subr.mxu0 0.0
    %934 = vmatpush1.msra.mxu0 %v896
    %935 = vmatprep.subr.mxu0 0.0
    %936 = vmatpush1.msra.mxu0 0.0
    %937 = vmatprep.subr.mxu0 0.0
    %938 = vmatpush1.msra.mxu0 0.0
    %939 = vmatprep.subr.mxu0 0.0
    %940 = vmatpush1.msra.mxu0 0.0
    %941 = vmatprep.subr.mxu0 0.0
    %942 = vmatpush1.msra.mxu0 0.0
    %943 = vmatprep.subr.mxu0 0.0
    %944 = vmatpush1.msra.mxu0 0.0
    %945 = vmatprep.subr.mxu0 0.0
    %946 = vmatpush1.msra.mxu0 0.0
    %947 = vmatprep.subr.mxu0 0.0
    %948 = vmatpush1.msra.mxu0 0.0
    %949 = vmatprep.subr.mxu0 0.0
    %950 = vmatpush1.msra.mxu0 0.0
    %951 = vmatprep.subr.mxu0 0.0
    %952 = vmatpush1.msra.mxu0 0.0
    %953 = vmatprep.subr.mxu0 0.0
    %954 = vmatpush1.msra.mxu0 0.0
    %955 = vmatprep.subr.mxu0 0.0
    %956 = vmatpush1.msra.mxu0 0.0
    %957 = vmatprep.subr.mxu0 0.0
    %958 = vmatpush1.msra.mxu0 0.0
    %959 = vmatprep.subr.mxu0 0.0
    %960 = vmatpush1.msra.mxu0 0.0
    %961 = vmatprep.subr.mxu0 0.0
    %962 = vmatpush1.msra.mxu0 0.0
    %963 = vmatprep.subr.mxu0 0.0
    %964 = vmatpush1.msra.mxu0 0.0
    %965 = vmatprep.subr.mxu0 0.0
    %966 = vmatpush1.msra.mxu0 0.0
    %967 = vmatprep.subr.mxu0 0.0
    %968 = vmatpush1.msra.mxu0 0.0
    %969 = vmatprep.subr.mxu0 0.0
    %970 = vmatpush1.msra.mxu0 0.0
    %971 = vmatprep.subr.mxu0 0.0
    %972 = vmatpush1.msra.mxu0 0.0
    %973 = vmatprep.subr.mxu0 0.0
    %974 = vmatpush1.msra.mxu0 0.0
    %975 = vmatprep.subr.mxu0 0.0
    %976 = vmatpush1.msra.mxu0 0.0
    %977 = vmatprep.subr.mxu0 0.0
    %978 = vmatpush1.msra.mxu0 0.0
    %979 = vmatprep.subr.mxu0 0.0
    %980 = vmatpush1.msra.mxu0 0.0
    %981 = vmatprep.subr.mxu0 0.0
    %982 = vmatpush1.msra.mxu0 0.0
    %983 = vmatprep.subr.mxu0 0.0
    %984 = vmatpush1.msra.mxu0 0.0
    %985 = vmatprep.subr.mxu0 0.0
    %986 = vmatpush1.msra.mxu0 0.0
    %987 = vmatprep.subr.mxu0 0.0
    %988 = vmatpush1.msra.mxu0 0.0
    %989 = vmatprep.subr.mxu0 0.0
    %990 = vmatpush1.msra.mxu0 0.0
    %991 = vmatprep.subr.mxu0 0.0
    %992 = vmatpush1.msra.mxu0 0.0
    %993 = vmatprep.subr.mxu0 0.0
    %994 = vmatpush1.msra.mxu0 0.0
    %995 = vmatprep.subr.mxu0 0.0
    %996 = vmatpush1.msra.mxu0 0.0
    %997 = vmatprep.mubr.f32.mxu0 0.0
    %998 = vmatmul.mubr.f32.gmra.mrb[0].mxu0 %v931
    %v999 = vpop.f32.mrb[0].mxu0
    %v1000 = vadd.f32 0.0, %v999
    %v1001 = vpop.f32.mrb[0].mxu0
    %1002 = vdwg.mxu0
    %1004 = vset.pattern.permute.xlu0 0
    %1005 = vperm.xlu0 %1004, %v483
    %v1006 = vpop.permute.xlu0 %1005
    %v1008 = vadd.f32 %v1006, %v344
    %v1009 = vmul.f32 %v1000, 2.0
    %1011 = vrot.lane.b32.xlu0 %v1009, 24
    %v1012 = vpop.permute.xlu0 %1011
    %v1014 = vsub.f32 %v1008, %v1012
    %v1015 = vmax.f32 %v1014, 0.0
    %v1016 = vrsqrt.pop %v1015
    %v1017 = vmul.f32 %v1015, %v1016
    %vm1018 = vcmp.eq.f32.partialorder %v1015, inf
    %v1019 = vsel %vm1018, %v1015, %v1017
    %vm1020 = vcmp.eq.f32.partialorder %v1015, 0.0
    %v1021 = vand.u32 %v1015, 2147483648
    %v1022 = vsel %vm1020, %v1021, %v1019
    %1024 = vrot.lane.b32.xlu0 %v1022, 104
    %v1025 = vpop.permute.xlu0 %1024
    %v1027 = vadd.f32 %v894, %v1025
    %1028 = vrot.lane.b32.xlu0 %v335, 96
    %v1029 = vpop.permute.xlu0 %1028
    %1031 = vxpose.xlu0.b32.start [1/16] %v1029, 128
    %1032 = vxpose.xlu0.b32.cont [2/16] 0.0, 128
    %1033 = vxpose.xlu0.b32.cont [3/16] 0.0, 128
    %1034 = vxpose.xlu0.b32.cont [4/16] 0.0, 128
    %1035 = vxpose.xlu0.b32.cont [5/16] 0.0, 128
    %1036 = vxpose.xlu0.b32.cont [6/16] 0.0, 128
    %1037 = vxpose.xlu0.b32.cont [7/16] 0.0, 128
    %1038 = vxpose.xlu0.b32.cont [8/16] 0.0, 128
    %1039 = vxpose.xlu0.b32.cont [9/16] 0.0, 128
    %1040 = vxpose.xlu0.b32.cont [10/16] 0.0, 128
    %1041 = vxpose.xlu0.b32.cont [11/16] 0.0, 128
    %1042 = vxpose.xlu0.b32.cont [12/16] 0.0, 128
    %1043 = vxpose.xlu0.b32.cont [13/16] 0.0, 128
    %1044 = vxpose.xlu0.b32.cont [14/16] 0.0, 128
    %1045 = vxpose.xlu0.b32.cont [15/16] 0.0, 128
    %1046 = vxpose.xlu0.b32.end [16/16] 0.0, 128
    %v1047 = vpop.trf.xlu0
    %v1048 = vpop.trf.xlu0
    %v1049 = vpop.trf.xlu0
    %v1050 = vpop.trf.xlu0
    %v1051 = vpop.trf.xlu0
    %v1052 = vpop.trf.xlu0
    %v1053 = vpop.trf.xlu0
    %v1054 = vpop.trf.xlu0
    %v1055 = vpop.trf.xlu0
    %v1056 = vpop.trf.xlu0
    %v1057 = vpop.trf.xlu0
    %v1058 = vpop.trf.xlu0
    %v1059 = vpop.trf.xlu0
    %v1060 = vpop.trf.xlu0
    %v1061 = vpop.trf.xlu0
    %v1062 = vpop.trf.xlu0
    %v1064 = vsel %vm89, %v1047, 0
    %1066 = vmatprep.subr.mxu0 0.0
    %1067 = vmatpush1.msra.mxu0 %v1029
    %1068 = vmatprep.subr.mxu0 0.0
    %1069 = vmatpush1.msra.mxu0 0.0
    %1070 = vmatprep.subr.mxu0 0.0
    %1071 = vmatpush1.msra.mxu0 0.0
    %1072 = vmatprep.subr.mxu0 0.0
    %1073 = vmatpush1.msra.mxu0 0.0
    %1074 = vmatprep.subr.mxu0 0.0
    %1075 = vmatpush1.msra.mxu0 0.0
    %1076 = vmatprep.subr.mxu0 0.0
    %1077 = vmatpush1.msra.mxu0 0.0
    %1078 = vmatprep.subr.mxu0 0.0
    %1079 = vmatpush1.msra.mxu0 0.0
    %1080 = vmatprep.subr.mxu0 0.0
    %1081 = vmatpush1.msra.mxu0 0.0
    %1082 = vmatprep.subr.mxu0 0.0
    %1083 = vmatpush1.msra.mxu0 0.0
    %1084 = vmatprep.subr.mxu0 0.0
    %1085 = vmatpush1.msra.mxu0 0.0
    %1086 = vmatprep.subr.mxu0 0.0
    %1087 = vmatpush1.msra.mxu0 0.0
    %1088 = vmatprep.subr.mxu0 0.0
    %1089 = vmatpush1.msra.mxu0 0.0
    %1090 = vmatprep.subr.mxu0 0.0
    %1091 = vmatpush1.msra.mxu0 0.0
    %1092 = vmatprep.subr.mxu0 0.0
    %1093 = vmatpush1.msra.mxu0 0.0
    %1094 = vmatprep.subr.mxu0 0.0
    %1095 = vmatpush1.msra.mxu0 0.0
    %1096 = vmatprep.subr.mxu0 0.0
    %1097 = vmatpush1.msra.mxu0 0.0
    %1098 = vmatprep.subr.mxu0 0.0
    %1099 = vmatpush1.msra.mxu0 0.0
    %1100 = vmatprep.subr.mxu0 0.0
    %1101 = vmatpush1.msra.mxu0 0.0
    %1102 = vmatprep.subr.mxu0 0.0
    %1103 = vmatpush1.msra.mxu0 0.0
    %1104 = vmatprep.subr.mxu0 0.0
    %1105 = vmatpush1.msra.mxu0 0.0
    %1106 = vmatprep.subr.mxu0 0.0
    %1107 = vmatpush1.msra.mxu0 0.0
    %1108 = vmatprep.subr.mxu0 0.0
    %1109 = vmatpush1.msra.mxu0 0.0
    %1110 = vmatprep.subr.mxu0 0.0
    %1111 = vmatpush1.msra.mxu0 0.0
    %1112 = vmatprep.subr.mxu0 0.0
    %1113 = vmatpush1.msra.mxu0 0.0
    %1114 = vmatprep.subr.mxu0 0.0
    %1115 = vmatpush1.msra.mxu0 0.0
    %1116 = vmatprep.subr.mxu0 0.0
    %1117 = vmatpush1.msra.mxu0 0.0
    %1118 = vmatprep.subr.mxu0 0.0
    %1119 = vmatpush1.msra.mxu0 0.0
    %1120 = vmatprep.subr.mxu0 0.0
    %1121 = vmatpush1.msra.mxu0 0.0
    %1122 = vmatprep.subr.mxu0 0.0
    %1123 = vmatpush1.msra.mxu0 0.0
    %1124 = vmatprep.subr.mxu0 0.0
    %1125 = vmatpush1.msra.mxu0 0.0
    %1126 = vmatprep.subr.mxu0 0.0
    %1127 = vmatpush1.msra.mxu0 0.0
    %1128 = vmatprep.subr.mxu0 0.0
    %1129 = vmatpush1.msra.mxu0 0.0
    %1130 = vmatprep.mubr.f32.mxu0 0.0
    %1131 = vmatmul.mubr.f32.gmra.mrb[0].mxu0 %v1064
    %v1132 = vpop.f32.mrb[0].mxu0
    %v1133 = vadd.f32 0.0, %v1132
    %v1134 = vpop.f32.mrb[0].mxu0
    %1135 = vdwg.mxu0
    %1137 = vset.pattern.permute.xlu0 0
    %1138 = vperm.xlu0 %1137, %v488
    %v1139 = vpop.permute.xlu0 %1138
    %v1141 = vadd.f32 %v1139, %v344
    %v1142 = vmul.f32 %v1133, 2.0
    %1144 = vrot.lane.b32.xlu0 %v1142, 32
    %v1145 = vpop.permute.xlu0 %1144
    %v1147 = vsub.f32 %v1141, %v1145
    %v1148 = vmax.f32 %v1147, 0.0
    %v1149 = vrsqrt.pop %v1148
    %v1150 = vmul.f32 %v1148, %v1149
    %vm1151 = vcmp.eq.f32.partialorder %v1148, inf
    %v1152 = vsel %vm1151, %v1148, %v1150
    %vm1153 = vcmp.eq.f32.partialorder %v1148, 0.0
    %v1154 = vand.u32 %v1148, 2147483648
    %v1155 = vsel %vm1153, %v1154, %v1152
    %1157 = vrot.lane.b32.xlu0 %v1155, 96
    %v1158 = vpop.permute.xlu0 %1157
    %v1160 = vadd.f32 %v1027, %v1158
    %1161 = vrot.lane.b32.xlu0 %v335, 88
    %v1162 = vpop.permute.xlu0 %1161
    %1164 = vxpose.xlu0.b32.start [1/16] %v1162, 128
    %1165 = vxpose.xlu0.b32.cont [2/16] 0.0, 128
    %1166 = vxpose.xlu0.b32.cont [3/16] 0.0, 128
    %1167 = vxpose.xlu0.b32.cont [4/16] 0.0, 128
    %1168 = vxpose.xlu0.b32.cont [5/16] 0.0, 128
    %1169 = vxpose.xlu0.b32.cont [6/16] 0.0, 128
    %1170 = vxpose.xlu0.b32.cont [7/16] 0.0, 128
    %1171 = vxpose.xlu0.b32.cont [8/16] 0.0, 128
    %1172 = vxpose.xlu0.b32.cont [9/16] 0.0, 128
    %1173 = vxpose.xlu0.b32.cont [10/16] 0.0, 128
    %1174 = vxpose.xlu0.b32.cont [11/16] 0.0, 128
    %1175 = vxpose.xlu0.b32.cont [12/16] 0.0, 128
    %1176 = vxpose.xlu0.b32.cont [13/16] 0.0, 128
    %1177 = vxpose.xlu0.b32.cont [14/16] 0.0, 128
    %1178 = vxpose.xlu0.b32.cont [15/16] 0.0, 128
    %1179 = vxpose.xlu0.b32.end [16/16] 0.0, 128
    %v1180 = vpop.trf.xlu0
    %v1181 = vpop.trf.xlu0
    %v1182 = vpop.trf.xlu0
    %v1183 = vpop.trf.xlu0
    %v1184 = vpop.trf.xlu0
    %v1185 = vpop.trf.xlu0
    %v1186 = vpop.trf.xlu0
    %v1187 = vpop.trf.xlu0
    %v1188 = vpop.trf.xlu0
    %v1189 = vpop.trf.xlu0
    %v1190 = vpop.trf.xlu0
    %v1191 = vpop.trf.xlu0
    %v1192 = vpop.trf.xlu0
    %v1193 = vpop.trf.xlu0
    %v1194 = vpop.trf.xlu0
    %v1195 = vpop.trf.xlu0
    %v1197 = vsel %vm89, %v1180, 0
    %1199 = vmatprep.subr.mxu0 0.0
    %1200 = vmatpush1.msra.mxu0 %v1162
    %1201 = vmatprep.subr.mxu0 0.0
    %1202 = vmatpush1.msra.mxu0 0.0
    %1203 = vmatprep.subr.mxu0 0.0
    %1204 = vmatpush1.msra.mxu0 0.0
    %1205 = vmatprep.subr.mxu0 0.0
    %1206 = vmatpush1.msra.mxu0 0.0
    %1207 = vmatprep.subr.mxu0 0.0
    %1208 = vmatpush1.msra.mxu0 0.0
    %1209 = vmatprep.subr.mxu0 0.0
    %1210 = vmatpush1.msra.mxu0 0.0
    %1211 = vmatprep.subr.mxu0 0.0
    %1212 = vmatpush1.msra.mxu0 0.0
    %1213 = vmatprep.subr.mxu0 0.0
    %1214 = vmatpush1.msra.mxu0 0.0
    %1215 = vmatprep.subr.mxu0 0.0
    %1216 = vmatpush1.msra.mxu0 0.0
    %1217 = vmatprep.subr.mxu0 0.0
    %1218 = vmatpush1.msra.mxu0 0.0
    %1219 = vmatprep.subr.mxu0 0.0
    %1220 = vmatpush1.msra.mxu0 0.0
    %1221 = vmatprep.subr.mxu0 0.0
    %1222 = vmatpush1.msra.mxu0 0.0
    %1223 = vmatprep.subr.mxu0 0.0
    %1224 = vmatpush1.msra.mxu0 0.0
    %1225 = vmatprep.subr.mxu0 0.0
    %1226 = vmatpush1.msra.mxu0 0.0
    %1227 = vmatprep.subr.mxu0 0.0
    %1228 = vmatpush1.msra.mxu0 0.0
    %1229 = vmatprep.subr.mxu0 0.0
    %1230 = vmatpush1.msra.mxu0 0.0
    %1231 = vmatprep.subr.mxu0 0.0
    %1232 = vmatpush1.msra.mxu0 0.0
    %1233 = vmatprep.subr.mxu0 0.0
    %1234 = vmatpush1.msra.mxu0 0.0
    %1235 = vmatprep.subr.mxu0 0.0
    %1236 = vmatpush1.msra.mxu0 0.0
    %1237 = vmatprep.subr.mxu0 0.0
    %1238 = vmatpush1.msra.mxu0 0.0
    %1239 = vmatprep.subr.mxu0 0.0
    %1240 = vmatpush1.msra.mxu0 0.0
    %1241 = vmatprep.subr.mxu0 0.0
    %1242 = vmatpush1.msra.mxu0 0.0
    %1243 = vmatprep.subr.mxu0 0.0
    %1244 = vmatpush1.msra.mxu0 0.0
    %1245 = vmatprep.subr.mxu0 0.0
    %1246 = vmatpush1.msra.mxu0 0.0
    %1247 = vmatprep.subr.mxu0 0.0
    %1248 = vmatpush1.msra.mxu0 0.0
    %1249 = vmatprep.subr.mxu0 0.0
    %1250 = vmatpush1.msra.mxu0 0.0
    %1251 = vmatprep.subr.mxu0 0.0
    %1252 = vmatpush1.msra.mxu0 0.0
    %1253 = vmatprep.subr.mxu0 0.0
    %1254 = vmatpush1.msra.mxu0 0.0
    %1255 = vmatprep.subr.mxu0 0.0
    %1256 = vmatpush1.msra.mxu0 0.0
    %1257 = vmatprep.subr.mxu0 0.0
    %1258 = vmatpush1.msra.mxu0 0.0
    %1259 = vmatprep.subr.mxu0 0.0
    %1260 = vmatpush1.msra.mxu0 0.0
    %1261 = vmatprep.subr.mxu0 0.0
    %1262 = vmatpush1.msra.mxu0 0.0
    %1263 = vmatprep.mubr.f32.mxu0 0.0
    %1264 = vmatmul.mubr.f32.gmra.mrb[0].mxu0 %v1197
    %v1265 = vpop.f32.mrb[0].mxu0
    %v1266 = vadd.f32 0.0, %v1265
    %v1267 = vpop.f32.mrb[0].mxu0
    %1268 = vdwg.mxu0
    %1270 = vset.pattern.permute.xlu0 0
    %1271 = vperm.xlu0 %1270, %v493
    %v1272 = vpop.permute.xlu0 %1271
    %v1274 = vadd.f32 %v1272, %v344
    %v1275 = vmul.f32 %v1266, 2.0
    %1277 = vrot.lane.b32.xlu0 %v1275, 40
    %v1278 = vpop.permute.xlu0 %1277
    %v1280 = vsub.f32 %v1274, %v1278
    %v1281 = vmax.f32 %v1280, 0.0
    %v1282 = vrsqrt.pop %v1281
    %v1283 = vmul.f32 %v1281, %v1282
    %vm1284 = vcmp.eq.f32.partialorder %v1281, inf
    %v1285 = vsel %vm1284, %v1281, %v1283
    %vm1286 = vcmp.eq.f32.partialorder %v1281, 0.0
    %v1287 = vand.u32 %v1281, 2147483648
    %v1288 = vsel %vm1286, %v1287, %v1285
    %1290 = vrot.lane.b32.xlu0 %v1288, 88
    %v1291 = vpop.permute.xlu0 %1290
    %v1293 = vadd.f32 %v1160, %v1291
    %1294 = vrot.lane.b32.xlu0 %v335, 80
    %v1295 = vpop.permute.xlu0 %1294
    %1297 = vxpose.xlu0.b32.start [1/16] %v1295, 128
    %1298 = vxpose.xlu0.b32.cont [2/16] 0.0, 128
    %1299 = vxpose.xlu0.b32.cont [3/16] 0.0, 128
    %1300 = vxpose.xlu0.b32.cont [4/16] 0.0, 128
    %1301 = vxpose.xlu0.b32.cont [5/16] 0.0, 128
    %1302 = vxpose.xlu0.b32.cont [6/16] 0.0, 128
    %1303 = vxpose.xlu0.b32.cont [7/16] 0.0, 128
    %1304 = vxpose.xlu0.b32.cont [8/16] 0.0, 128
    %1305 = vxpose.xlu0.b32.cont [9/16] 0.0, 128
    %1306 = vxpose.xlu0.b32.cont [10/16] 0.0, 128
    %1307 = vxpose.xlu0.b32.cont [11/16] 0.0, 128
    %1308 = vxpose.xlu0.b32.cont [12/16] 0.0, 128
    %1309 = vxpose.xlu0.b32.cont [13/16] 0.0, 128
    %1310 = vxpose.xlu0.b32.cont [14/16] 0.0, 128
    %1311 = vxpose.xlu0.b32.cont [15/16] 0.0, 128
    %1312 = vxpose.xlu0.b32.end [16/16] 0.0, 128
    %v1313 = vpop.trf.xlu0
    %v1314 = vpop.trf.xlu0
    %v1315 = vpop.trf.xlu0
    %v1316 = vpop.trf.xlu0
    %v1317 = vpop.trf.xlu0
    %v1318 = vpop.trf.xlu0
    %v1319 = vpop.trf.xlu0
    %v1320 = vpop.trf.xlu0
    %v1321 = vpop.trf.xlu0
    %v1322 = vpop.trf.xlu0
    %v1323 = vpop.trf.xlu0
    %v1324 = vpop.trf.xlu0
    %v1325 = vpop.trf.xlu0
    %v1326 = vpop.trf.xlu0
    %v1327 = vpop.trf.xlu0
    %v1328 = vpop.trf.xlu0
    %v1330 = vsel %vm89, %v1313, 0
    %1332 = vmatprep.subr.mxu0 0.0
    %1333 = vmatpush1.msra.mxu0 %v1295
    %1334 = vmatprep.subr.mxu0 0.0
    %1335 = vmatpush1.msra.mxu0 0.0
    %1336 = vmatprep.subr.mxu0 0.0
    %1337 = vmatpush1.msra.mxu0 0.0
    %1338 = vmatprep.subr.mxu0 0.0
    %1339 = vmatpush1.msra.mxu0 0.0
    %1340 = vmatprep.subr.mxu0 0.0
    %1341 = vmatpush1.msra.mxu0 0.0
    %1342 = vmatprep.subr.mxu0 0.0
    %1343 = vmatpush1.msra.mxu0 0.0
    %1344 = vmatprep.subr.mxu0 0.0
    %1345 = vmatpush1.msra.mxu0 0.0
    %1346 = vmatprep.subr.mxu0 0.0
    %1347 = vmatpush1.msra.mxu0 0.0
    %1348 = vmatprep.subr.mxu0 0.0
    %1349 = vmatpush1.msra.mxu0 0.0
    %1350 = vmatprep.subr.mxu0 0.0
    %1351 = vmatpush1.msra.mxu0 0.0
    %1352 = vmatprep.subr.mxu0 0.0
    %1353 = vmatpush1.msra.mxu0 0.0
    %1354 = vmatprep.subr.mxu0 0.0
    %1355 = vmatpush1.msra.mxu0 0.0
    %1356 = vmatprep.subr.mxu0 0.0
    %1357 = vmatpush1.msra.mxu0 0.0
    %1358 = vmatprep.subr.mxu0 0.0
    %1359 = vmatpush1.msra.mxu0 0.0
    %1360 = vmatprep.subr.mxu0 0.0
    %1361 = vmatpush1.msra.mxu0 0.0
    %1362 = vmatprep.subr.mxu0 0.0
    %1363 = vmatpush1.msra.mxu0 0.0
    %1364 = vmatprep.subr.mxu0 0.0
    %1365 = vmatpush1.msra.mxu0 0.0
    %1366 = vmatprep.subr.mxu0 0.0
    %1367 = vmatpush1.msra.mxu0 0.0
    %1368 = vmatprep.subr.mxu0 0.0
    %1369 = vmatpush1.msra.mxu0 0.0
    %1370 = vmatprep.subr.mxu0 0.0
    %1371 = vmatpush1.msra.mxu0 0.0
    %1372 = vmatprep.subr.mxu0 0.0
    %1373 = vmatpush1.msra.mxu0 0.0
    %1374 = vmatprep.subr.mxu0 0.0
    %1375 = vmatpush1.msra.mxu0 0.0
    %1376 = vmatprep.subr.mxu0 0.0
    %1377 = vmatpush1.msra.mxu0 0.0
    %1378 = vmatprep.subr.mxu0 0.0
    %1379 = vmatpush1.msra.mxu0 0.0
    %1380 = vmatprep.subr.mxu0 0.0
    %1381 = vmatpush1.msra.mxu0 0.0
    %1382 = vmatprep.subr.mxu0 0.0
    %1383 = vmatpush1.msra.mxu0 0.0
    %1384 = vmatprep.subr.mxu0 0.0
    %1385 = vmatpush1.msra.mxu0 0.0
    %1386 = vmatprep.subr.mxu0 0.0
    %1387 = vmatpush1.msra.mxu0 0.0
    %1388 = vmatprep.subr.mxu0 0.0
    %1389 = vmatpush1.msra.mxu0 0.0
    %1390 = vmatprep.subr.mxu0 0.0
    %1391 = vmatpush1.msra.mxu0 0.0
    %1392 = vmatprep.subr.mxu0 0.0
    %1393 = vmatpush1.msra.mxu0 0.0
    %1394 = vmatprep.subr.mxu0 0.0
    %1395 = vmatpush1.msra.mxu0 0.0
    %1396 = vmatprep.mubr.f32.mxu0 0.0
    %1397 = vmatmul.mubr.f32.gmra.mrb[0].mxu0 %v1330
    %v1398 = vpop.f32.mrb[0].mxu0
    %v1399 = vadd.f32 0.0, %v1398
    %v1400 = vpop.f32.mrb[0].mxu0
    %1401 = vdwg.mxu0
    %1403 = vset.pattern.permute.xlu0 0
    %1404 = vperm.xlu0 %1403, %v498
    %v1405 = vpop.permute.xlu0 %1404
    %v1407 = vadd.f32 %v1405, %v344
    %v1408 = vmul.f32 %v1399, 2.0
    %1410 = vrot.lane.b32.xlu0 %v1408, 48
    %v1411 = vpop.permute.xlu0 %1410
    %v1413 = vsub.f32 %v1407, %v1411
    %v1414 = vmax.f32 %v1413, 0.0
    %v1415 = vrsqrt.pop %v1414
    %v1416 = vmul.f32 %v1414, %v1415
    %vm1417 = vcmp.eq.f32.partialorder %v1414, inf
    %v1418 = vsel %vm1417, %v1414, %v1416
    %vm1419 = vcmp.eq.f32.partialorder %v1414, 0.0
    %v1420 = vand.u32 %v1414, 2147483648
    %v1421 = vsel %vm1419, %v1420, %v1418
    %1423 = vrot.lane.b32.xlu0 %v1421, 80
    %v1424 = vpop.permute.xlu0 %1423
    %v1426 = vadd.f32 %v1293, %v1424
    %1427 = vrot.lane.b32.xlu0 %v335, 72
    %v1428 = vpop.permute.xlu0 %1427
    %1430 = vxpose.xlu0.b32.start [1/16] %v1428, 128
    %1431 = vxpose.xlu0.b32.cont [2/16] 0.0, 128
    %1432 = vxpose.xlu0.b32.cont [3/16] 0.0, 128
    %1433 = vxpose.xlu0.b32.cont [4/16] 0.0, 128
    %1434 = vxpose.xlu0.b32.cont [5/16] 0.0, 128
    %1435 = vxpose.xlu0.b32.cont [6/16] 0.0, 128
    %1436 = vxpose.xlu0.b32.cont [7/16] 0.0, 128
    %1437 = vxpose.xlu0.b32.cont [8/16] 0.0, 128
    %1438 = vxpose.xlu0.b32.cont [9/16] 0.0, 128
    %1439 = vxpose.xlu0.b32.cont [10/16] 0.0, 128
    %1440 = vxpose.xlu0.b32.cont [11/16] 0.0, 128
    %1441 = vxpose.xlu0.b32.cont [12/16] 0.0, 128
    %1442 = vxpose.xlu0.b32.cont [13/16] 0.0, 128
    %1443 = vxpose.xlu0.b32.cont [14/16] 0.0, 128
    %1444 = vxpose.xlu0.b32.cont [15/16] 0.0, 128
    %1445 = vxpose.xlu0.b32.end [16/16] 0.0, 128
    %v1446 = vpop.trf.xlu0
    %v1447 = vpop.trf.xlu0
    %v1448 = vpop.trf.xlu0
    %v1449 = vpop.trf.xlu0
    %v1450 = vpop.trf.xlu0
    %v1451 = vpop.trf.xlu0
    %v1452 = vpop.trf.xlu0
    %v1453 = vpop.trf.xlu0
    %v1454 = vpop.trf.xlu0
    %v1455 = vpop.trf.xlu0
    %v1456 = vpop.trf.xlu0
    %v1457 = vpop.trf.xlu0
    %v1458 = vpop.trf.xlu0
    %v1459 = vpop.trf.xlu0
    %v1460 = vpop.trf.xlu0
    %v1461 = vpop.trf.xlu0
    %v1463 = vsel %vm89, %v1446, 0
    %1465 = vmatprep.subr.mxu0 0.0
    %1466 = vmatpush1.msra.mxu0 %v1428
    %1467 = vmatprep.subr.mxu0 0.0
    %1468 = vmatpush1.msra.mxu0 0.0
    %1469 = vmatprep.subr.mxu0 0.0
    %1470 = vmatpush1.msra.mxu0 0.0
    %1471 = vmatprep.subr.mxu0 0.0
    %1472 = vmatpush1.msra.mxu0 0.0
    %1473 = vmatprep.subr.mxu0 0.0
    %1474 = vmatpush1.msra.mxu0 0.0
    %1475 = vmatprep.subr.mxu0 0.0
    %1476 = vmatpush1.msra.mxu0 0.0
    %1477 = vmatprep.subr.mxu0 0.0
    %1478 = vmatpush1.msra.mxu0 0.0
    %1479 = vmatprep.subr.mxu0 0.0
    %1480 = vmatpush1.msra.mxu0 0.0
    %1481 = vmatprep.subr.mxu0 0.0
    %1482 = vmatpush1.msra.mxu0 0.0
    %1483 = vmatprep.subr.mxu0 0.0
    %1484 = vmatpush1.msra.mxu0 0.0
    %1485 = vmatprep.subr.mxu0 0.0
    %1486 = vmatpush1.msra.mxu0 0.0
    %1487 = vmatprep.subr.mxu0 0.0
    %1488 = vmatpush1.msra.mxu0 0.0
    %1489 = vmatprep.subr.mxu0 0.0
    %1490 = vmatpush1.msra.mxu0 0.0
    %1491 = vmatprep.subr.mxu0 0.0
    %1492 = vmatpush1.msra.mxu0 0.0
    %1493 = vmatprep.subr.mxu0 0.0
    %1494 = vmatpush1.msra.mxu0 0.0
    %1495 = vmatprep.subr.mxu0 0.0
    %1496 = vmatpush1.msra.mxu0 0.0
    %1497 = vmatprep.subr.mxu0 0.0
    %1498 = vmatpush1.msra.mxu0 0.0
    %1499 = vmatprep.subr.mxu0 0.0
    %1500 = vmatpush1.msra.mxu0 0.0
    %1501 = vmatprep.subr.mxu0 0.0
    %1502 = vmatpush1.msra.mxu0 0.0
    %1503 = vmatprep.subr.mxu0 0.0
    %1504 = vmatpush1.msra.mxu0 0.0
    %1505 = vmatprep.subr.mxu0 0.0
    %1506 = vmatpush1.msra.mxu0 0.0
    %1507 = vmatprep.subr.mxu0 0.0
    %1508 = vmatpush1.msra.mxu0 0.0
    %1509 = vmatprep.subr.mxu0 0.0
    %1510 = vmatpush1.msra.mxu0 0.0
    %1511 = vmatprep.subr.mxu0 0.0
    %1512 = vmatpush1.msra.mxu0 0.0
    %1513 = vmatprep.subr.mxu0 0.0
    %1514 = vmatpush1.msra.mxu0 0.0
    %1515 = vmatprep.subr.mxu0 0.0
    %1516 = vmatpush1.msra.mxu0 0.0
    %1517 = vmatprep.subr.mxu0 0.0
    %1518 = vmatpush1.msra.mxu0 0.0
    %1519 = vmatprep.subr.mxu0 0.0
    %1520 = vmatpush1.msra.mxu0 0.0
    %1521 = vmatprep.subr.mxu0 0.0
    %1522 = vmatpush1.msra.mxu0 0.0
    %1523 = vmatprep.subr.mxu0 0.0
    %1524 = vmatpush1.msra.mxu0 0.0
    %1525 = vmatprep.subr.mxu0 0.0
    %1526 = vmatpush1.msra.mxu0 0.0
    %1527 = vmatprep.subr.mxu0 0.0
    %1528 = vmatpush1.msra.mxu0 0.0
    %1529 = vmatprep.mubr.f32.mxu0 0.0
    %1530 = vmatmul.mubr.f32.gmra.mrb[0].mxu0 %v1463
    %v1531 = vpop.f32.mrb[0].mxu0
    %v1532 = vadd.f32 0.0, %v1531
    %v1533 = vpop.f32.mrb[0].mxu0
    %1534 = vdwg.mxu0
    %1536 = vset.pattern.permute.xlu0 0
    %1537 = vperm.xlu0 %1536, %v503
    %v1538 = vpop.permute.xlu0 %1537
    %v1540 = vadd.f32 %v1538, %v344
    %v1541 = vmul.f32 %v1532, 2.0
    %1543 = vrot.lane.b32.xlu0 %v1541, 56
    %v1544 = vpop.permute.xlu0 %1543
    %v1546 = vsub.f32 %v1540, %v1544
    %v1547 = vmax.f32 %v1546, 0.0
    %v1548 = vrsqrt.pop %v1547
    %v1549 = vmul.f32 %v1547, %v1548
    %vm1550 = vcmp.eq.f32.partialorder %v1547, inf
    %v1551 = vsel %vm1550, %v1547, %v1549
    %vm1552 = vcmp.eq.f32.partialorder %v1547, 0.0
    %v1553 = vand.u32 %v1547, 2147483648
    %v1554 = vsel %vm1552, %v1553, %v1551
    %1556 = vrot.lane.b32.xlu0 %v1554, 72
    %v1557 = vpop.permute.xlu0 %1556
    %v1559 = vadd.f32 %v1426, %v1557
    %v1560 = vmul.f32 %v1559, 0.125
    %1561 = vst.msk [vmem:[#allocation2] sm:$0xff] %vm89, %v1560
    %v1562 = vld [vmem:[#allocation2 + $0x1] sm:$0x1]
    %s1563 = vtos %v1562
    %p1564 = scmp.le.f32.partialorder %s1563, %s82
    %v1565 = vld [vmem:[#allocation2 + $0x2] sm:$0x1]
    %s1566 = vtos %v1565
    %p1567 = scmp.le.f32.partialorder %s1566, %s82
    %1569 = vrot.lane.b32.xlu0 %v1565, 127
    %v1570 = vpop.permute.xlu0 %1569
    %s1572 = vtos %v1570
    %p1573 = scmp.le.f32.partialorder %s1572, %s82
    %v1574 = vld [vmem:[#allocation2 + $0x3] sm:$0x1]
    %s1575 = vtos %v1574
    %p1576 = scmp.le.f32.partialorder %s1575, %s82
    %1578 = vrot.lane.b32.xlu0 %v1574, 127
    %v1579 = vpop.permute.xlu0 %1578
    %s1581 = vtos %v1579
    %p1582 = scmp.le.f32.partialorder %s1581, %s82
    %1583 = vrot.lane.b32.xlu0 %v1574, 126
    %v1584 = vpop.permute.xlu0 %1583
    %s1586 = vtos %v1584
    %p1587 = scmp.le.f32.partialorder %s1586, %s82
    %v1588 = vld [vmem:[#allocation2 + $0x4] sm:$0x1]
    %s1589 = vtos %v1588
    %p1590 = scmp.le.f32.partialorder %s1589, %s82
    %1592 = vrot.lane.b32.xlu0 %v1588, 127
    %v1593 = vpop.permute.xlu0 %1592
    %s1595 = vtos %v1593
    %p1596 = scmp.le.f32.partialorder %s1595, %s82
    %1597 = vrot.lane.b32.xlu0 %v1588, 126
    %v1598 = vpop.permute.xlu0 %1597
    %s1600 = vtos %v1598
    %p1601 = scmp.le.f32.partialorder %s1600, %s82
    %1602 = vrot.lane.b32.xlu0 %v1588, 125
    %v1603 = vpop.permute.xlu0 %1602
    %s1605 = vtos %v1603
    %p1606 = scmp.le.f32.partialorder %s1605, %s82
    %v1607 = vld [vmem:[#allocation2 + $0x5] sm:$0x1]
    %s1608 = vtos %v1607
    %p1609 = scmp.le.f32.partialorder %s1608, %s82
    %1611 = vrot.lane.b32.xlu0 %v1607, 127
    %v1612 = vpop.permute.xlu0 %1611
    %s1614 = vtos %v1612
    %p1615 = scmp.le.f32.partialorder %s1614, %s82
    %1616 = vrot.lane.b32.xlu0 %v1607, 126
    %v1617 = vpop.permute.xlu0 %1616
    %s1619 = vtos %v1617
    %p1620 = scmp.le.f32.partialorder %s1619, %s82
    %1621 = vrot.lane.b32.xlu0 %v1607, 125
    %v1622 = vpop.permute.xlu0 %1621
    %s1624 = vtos %v1622
    %p1625 = scmp.le.f32.partialorder %s1624, %s82
    %1626 = vrot.lane.b32.xlu0 %v1607, 124
    %v1627 = vpop.permute.xlu0 %1626
    %s1629 = vtos %v1627
    %p1630 = scmp.le.f32.partialorder %s1629, %s82
    %v1631 = vld [vmem:[#allocation2 + $0x6] sm:$0x1]
    %s1632 = vtos %v1631
    %p1633 = scmp.le.f32.partialorder %s1632, %s82
    %1635 = vrot.lane.b32.xlu0 %v1631, 127
    %v1636 = vpop.permute.xlu0 %1635
    %s1638 = vtos %v1636
    %p1639 = scmp.le.f32.partialorder %s1638, %s82
    %1640 = vrot.lane.b32.xlu0 %v1631, 126
    %v1641 = vpop.permute.xlu0 %1640
    %s1643 = vtos %v1641
    %p1644 = scmp.le.f32.partialorder %s1643, %s82
    %1645 = vrot.lane.b32.xlu0 %v1631, 125
    %v1646 = vpop.permute.xlu0 %1645
    %s1648 = vtos %v1646
    %p1649 = scmp.le.f32.partialorder %s1648, %s82
    %1650 = vrot.lane.b32.xlu0 %v1631, 124
    %v1651 = vpop.permute.xlu0 %1650
    %s1653 = vtos %v1651
    %p1654 = scmp.le.f32.partialorder %s1653, %s82
    %1655 = vrot.lane.b32.xlu0 %v1631, 123
    %v1656 = vpop.permute.xlu0 %1655
    %s1658 = vtos %v1656
    %p1659 = scmp.le.f32.partialorder %s1658, %s82
    %v1660 = vld [vmem:[#allocation2 + $0x7] sm:$0x1]
    %s1661 = vtos %v1660
    %p1662 = scmp.le.f32.partialorder %s1661, %s82
    %1664 = vrot.lane.b32.xlu0 %v1660, 127
    %v1665 = vpop.permute.xlu0 %1664
    %s1667 = vtos %v1665
    %p1668 = scmp.le.f32.partialorder %s1667, %s82
    %1669 = vrot.lane.b32.xlu0 %v1660, 126
    %v1670 = vpop.permute.xlu0 %1669
    %s1672 = vtos %v1670
    %p1673 = scmp.le.f32.partialorder %s1672, %s82
    %1674 = vrot.lane.b32.xlu0 %v1660, 125
    %v1675 = vpop.permute.xlu0 %1674
    %s1677 = vtos %v1675
    %p1678 = scmp.le.f32.partialorder %s1677, %s82
    %1679 = vrot.lane.b32.xlu0 %v1660, 124
    %v1680 = vpop.permute.xlu0 %1679
    %s1682 = vtos %v1680
    %p1683 = scmp.le.f32.partialorder %s1682, %s82
    %1684 = vrot.lane.b32.xlu0 %v1660, 123
    %v1685 = vpop.permute.xlu0 %1684
    %s1687 = vtos %v1685
    %p1688 = scmp.le.f32.partialorder %s1687, %s82
    %1689 = vrot.lane.b32.xlu0 %v1660, 122
    %v1690 = vpop.permute.xlu0 %1689
    %s1692 = vtos %v1690
    %p1693 = scmp.le.f32.partialorder %s1692, %s82
    %p1694 = pneg %p1564
    %s1695 = scalar_select %p1694, 1, 0
    %p1696 = scmp.eq.s32.totalorder %s1695, 2
    %p1697 = pnand %p1567, %p1696
    %p1698 = pneg %p1697
    %s1699 = scalar_select %p1698, 0, %s1695
    %s1700 = scalar_select %p1567, 0, 2
    %p1701 = scmp.eq.s32.totalorder %s1700, 0
    %p1702 = pnand %p1573, %p1701
    %p1703 = pneg %p1702
    %s1704 = scalar_select %p1703, 1, 0
    %p1705 = scmp.eq.s32.totalorder %s1699, %s1700
    %p1706 = pnand %p1573, %p1705
    %p1707 = pneg %p1706
    %s1708 = scalar_select %p1707, 1, %s1699
    %s1709 = scalar_select %p1573, 1, %s1700
    %p1710 = scmp.eq.s32.totalorder %s1700, 3
    %p1711 = pnand %p1573, %p1710
    %p1712 = pneg %p1711
    %s1713 = scalar_select %p1712, 1, 3
    %p1714 = scmp.eq.s32.totalorder %s1700, 4
    %p1715 = pnand %p1573, %p1714
    %p1716 = pneg %p1715
    %s1717 = scalar_select %p1716, 1, 4
    %p1718 = scmp.eq.s32.totalorder %s1700, 5
    %p1719 = pnand %p1573, %p1718
    %p1720 = pneg %p1719
    %s1721 = scalar_select %p1720, 1, 5
    %p1722 = scmp.eq.s32.totalorder %s1700, 6
    %p1723 = pnand %p1573, %p1722
    %p1724 = pneg %p1723
    %s1725 = scalar_select %p1724, 1, 6
    %p1726 = scmp.eq.s32.totalorder %s1700, 7
    %p1727 = pnand %p1573, %p1726
    %p1728 = pneg %p1727
    %s1729 = scalar_select %p1728, 1, 7
    %p1730 = scmp.eq.s32.totalorder %s1704, %s1713
    %p1731 = pnand %p1576, %p1730
    %p1732 = pneg %p1731
    %s1733 = scalar_select %p1732, 0, %s1704
    %p1734 = scmp.eq.s32.totalorder %s1708, %s1713
    %p1735 = pnand %p1576, %p1734
    %p1736 = pneg %p1735
    %s1737 = scalar_select %p1736, 0, %s1708
    %p1738 = scmp.eq.s32.totalorder %s1709, %s1713
    %p1739 = pnand %p1576, %p1738
    %p1740 = pneg %p1739
    %s1741 = scalar_select %p1740, 0, %s1709
    %s1742 = scalar_select %p1576, 0, %s1713
    %p1743 = scmp.eq.s32.totalorder %s1717, %s1713
    %p1744 = pnand %p1576, %p1743
    %p1745 = pneg %p1744
    %s1746 = scalar_select %p1745, 0, %s1717
    %p1747 = scmp.eq.s32.totalorder %s1721, %s1713
    %p1748 = pnand %p1576, %p1747
    %p1749 = pneg %p1748
    %s1750 = scalar_select %p1749, 0, %s1721
    %p1751 = scmp.eq.s32.totalorder %s1725, %s1713
    %p1752 = pnand %p1576, %p1751
    %p1753 = pneg %p1752
    %s1754 = scalar_select %p1753, 0, %s1725
    %p1755 = scmp.eq.s32.totalorder %s1729, %s1713
    %p1756 = pnand %p1576, %p1755
    %p1757 = pneg %p1756
    %s1758 = scalar_select %p1757, 0, %s1729
    %p1759 = scmp.eq.s32.totalorder %s1733, %s1742
    %p1760 = pnand %p1582, %p1759
    %p1761 = pneg %p1760
    %s1762 = scalar_select %p1761, 1, %s1733
    %p1763 = scmp.eq.s32.totalorder %s1737, %s1742
    %p1764 = pnand %p1582, %p1763
    %p1765 = pneg %p1764
    %s1766 = scalar_select %p1765, 1, %s1737
    %p1767 = scmp.eq.s32.totalorder %s1741, %s1742
    %p1768 = pnand %p1582, %p1767
    %p1769 = pneg %p1768
    %s1770 = scalar_select %p1769, 1, %s1741
    %s1771 = scalar_select %p1582, 1, %s1742
    %p1772 = scmp.eq.s32.totalorder %s1746, %s1742
    %p1773 = pnand %p1582, %p1772
    %p1774 = pneg %p1773
    %s1775 = scalar_select %p1774, 1, %s1746
    %p1776 = scmp.eq.s32.totalorder %s1750, %s1742
    %p1777 = pnand %p1582, %p1776
    %p1778 = pneg %p1777
    %s1779 = scalar_select %p1778, 1, %s1750
    %p1780 = scmp.eq.s32.totalorder %s1754, %s1742
    %p1781 = pnand %p1582, %p1780
    %p1782 = pneg %p1781
    %s1783 = scalar_select %p1782, 1, %s1754
    %p1784 = scmp.eq.s32.totalorder %s1758, %s1742
    %p1785 = pnand %p1582, %p1784
    %p1786 = pneg %p1785
    %s1787 = scalar_select %p1786, 1, %s1758
    %p1788 = scmp.eq.s32.totalorder %s1762, %s1771
    %p1789 = pnand %p1587, %p1788
    %p1790 = pneg %p1789
    %s1791 = scalar_select %p1790, 2, %s1762
    %p1792 = scmp.eq.s32.totalorder %s1766, %s1771
    %p1793 = pnand %p1587, %p1792
    %p1794 = pneg %p1793
    %s1795 = scalar_select %p1794, 2, %s1766
    %p1796 = scmp.eq.s32.totalorder %s1770, %s1771
    %p1797 = pnand %p1587, %p1796
    %p1798 = pneg %p1797
    %s1799 = scalar_select %p1798, 2, %s1770
    %s1800 = scalar_select %p1587, 2, %s1771
    %p1801 = scmp.eq.s32.totalorder %s1775, %s1771
    %p1802 = pnand %p1587, %p1801
    %p1803 = pneg %p1802
    %s1804 = scalar_select %p1803, 2, %s1775
    %p1805 = scmp.eq.s32.totalorder %s1779, %s1771
    %p1806 = pnand %p1587, %p1805
    %p1807 = pneg %p1806
    %s1808 = scalar_select %p1807, 2, %s1779
    %p1809 = scmp.eq.s32.totalorder %s1783, %s1771
    %p1810 = pnand %p1587, %p1809
    %p1811 = pneg %p1810
    %s1812 = scalar_select %p1811, 2, %s1783
    %p1813 = scmp.eq.s32.totalorder %s1787, %s1771
    %p1814 = pnand %p1587, %p1813
    %p1815 = pneg %p1814
    %s1816 = scalar_select %p1815, 2, %s1787
    %p1817 = scmp.eq.s32.totalorder %s1791, %s1804
    %p1818 = pnand %p1590, %p1817
    %p1819 = pneg %p1818
    %s1820 = scalar_select %p1819, 0, %s1791
    %p1821 = scmp.eq.s32.totalorder %s1795, %s1804
    %p1822 = pnand %p1590, %p1821
    %p1823 = pneg %p1822
    %s1824 = scalar_select %p1823, 0, %s1795
    %p1825 = scmp.eq.s32.totalorder %s1799, %s1804
    %p1826 = pnand %p1590, %p1825
    %p1827 = pneg %p1826
    %s1828 = scalar_select %p1827, 0, %s1799
    %p1829 = scmp.eq.s32.totalorder %s1800, %s1804
    %p1830 = pnand %p1590, %p1829
    %p1831 = pneg %p1830
    %s1832 = scalar_select %p1831, 0, %s1800
    %s1833 = scalar_select %p1590, 0, %s1804
    %p1834 = scmp.eq.s32.totalorder %s1808, %s1804
    %p1835 = pnand %p1590, %p1834
    %p1836 = pneg %p1835
    %s1837 = scalar_select %p1836, 0, %s1808
    %p1838 = scmp.eq.s32.totalorder %s1812, %s1804
    %p1839 = pnand %p1590, %p1838
    %p1840 = pneg %p1839
    %s1841 = scalar_select %p1840, 0, %s1812
    %p1842 = scmp.eq.s32.totalorder %s1816, %s1804
    %p1843 = pnand %p1590, %p1842
    %p1844 = pneg %p1843
    %s1845 = scalar_select %p1844, 0, %s1816
    %p1846 = scmp.eq.s32.totalorder %s1820, %s1833
    %p1847 = pnand %p1596, %p1846
    %p1848 = pneg %p1847
    %s1849 = scalar_select %p1848, 1, %s1820
    %p1850 = scmp.eq.s32.totalorder %s1824, %s1833
    %p1851 = pnand %p1596, %p1850
    %p1852 = pneg %p1851
    %s1853 = scalar_select %p1852, 1, %s1824
    %p1854 = scmp.eq.s32.totalorder %s1828, %s1833
    %p1855 = pnand %p1596, %p1854
    %p1856 = pneg %p1855
    %s1857 = scalar_select %p1856, 1, %s1828
    %p1858 = scmp.eq.s32.totalorder %s1832, %s1833
    %p1859 = pnand %p1596, %p1858
    %p1860 = pneg %p1859
    %s1861 = scalar_select %p1860, 1, %s1832
    %s1862 = scalar_select %p1596, 1, %s1833
    %p1863 = scmp.eq.s32.totalorder %s1837, %s1833
    %p1864 = pnand %p1596, %p1863
    %p1865 = pneg %p1864
    %s1866 = scalar_select %p1865, 1, %s1837
    %p1867 = scmp.eq.s32.totalorder %s1841, %s1833
    %p1868 = pnand %p1596, %p1867
    %p1869 = pneg %p1868
    %s1870 = scalar_select %p1869, 1, %s1841
    %p1871 = scmp.eq.s32.totalorder %s1845, %s1833
    %p1872 = pnand %p1596, %p1871
    %p1873 = pneg %p1872
    %s1874 = scalar_select %p1873, 1, %s1845
    %p1875 = scmp.eq.s32.totalorder %s1849, %s1862
    %p1876 = pnand %p1601, %p1875
    %p1877 = pneg %p1876
    %s1878 = scalar_select %p1877, 2, %s1849
    %p1879 = scmp.eq.s32.totalorder %s1853, %s1862
    %p1880 = pnand %p1601, %p1879
    %p1881 = pneg %p1880
    %s1882 = scalar_select %p1881, 2, %s1853
    %p1883 = scmp.eq.s32.totalorder %s1857, %s1862
    %p1884 = pnand %p1601, %p1883
    %p1885 = pneg %p1884
    %s1886 = scalar_select %p1885, 2, %s1857
    %p1887 = scmp.eq.s32.totalorder %s1861, %s1862
    %p1888 = pnand %p1601, %p1887
    %p1889 = pneg %p1888
    %s1890 = scalar_select %p1889, 2, %s1861
    %s1891 = scalar_select %p1601, 2, %s1862
    %p1892 = scmp.eq.s32.totalorder %s1866, %s1862
    %p1893 = pnand %p1601, %p1892
    %p1894 = pneg %p1893
    %s1895 = scalar_select %p1894, 2, %s1866
    %p1896 = scmp.eq.s32.totalorder %s1870, %s1862
    %p1897 = pnand %p1601, %p1896
    %p1898 = pneg %p1897
    %s1899 = scalar_select %p1898, 2, %s1870
    %p1900 = scmp.eq.s32.totalorder %s1874, %s1862
    %p1901 = pnand %p1601, %p1900
    %p1902 = pneg %p1901
    %s1903 = scalar_select %p1902, 2, %s1874
    %p1904 = scmp.eq.s32.totalorder %s1878, %s1891
    %p1905 = pnand %p1606, %p1904
    %p1906 = pneg %p1905
    %s1907 = scalar_select %p1906, 3, %s1878
    %p1908 = scmp.eq.s32.totalorder %s1882, %s1891
    %p1909 = pnand %p1606, %p1908
    %p1910 = pneg %p1909
    %s1911 = scalar_select %p1910, 3, %s1882
    %p1912 = scmp.eq.s32.totalorder %s1886, %s1891
    %p1913 = pnand %p1606, %p1912
    %p1914 = pneg %p1913
    %s1915 = scalar_select %p1914, 3, %s1886
    %p1916 = scmp.eq.s32.totalorder %s1890, %s1891
    %p1917 = pnand %p1606, %p1916
    %p1918 = pneg %p1917
    %s1919 = scalar_select %p1918, 3, %s1890
    %s1920 = scalar_select %p1606, 3, %s1891
    %p1921 = scmp.eq.s32.totalorder %s1895, %s1891
    %p1922 = pnand %p1606, %p1921
    %p1923 = pneg %p1922
    %s1924 = scalar_select %p1923, 3, %s1895
    %p1925 = scmp.eq.s32.totalorder %s1899, %s1891
    %p1926 = pnand %p1606, %p1925
    %p1927 = pneg %p1926
    %s1928 = scalar_select %p1927, 3, %s1899
    %p1929 = scmp.eq.s32.totalorder %s1903, %s1891
    %p1930 = pnand %p1606, %p1929
    %p1931 = pneg %p1930
    %s1932 = scalar_select %p1931, 3, %s1903
    %p1933 = scmp.eq.s32.totalorder %s1907, %s1924
    %p1934 = pnand %p1609, %p1933
    %p1935 = pneg %p1934
    %s1936 = scalar_select %p1935, 0, %s1907
    %p1937 = scmp.eq.s32.totalorder %s1911, %s1924
    %p1938 = pnand %p1609, %p1937
    %p1939 = pneg %p1938
    %s1940 = scalar_select %p1939, 0, %s1911
    %p1941 = scmp.eq.s32.totalorder %s1915, %s1924
    %p1942 = pnand %p1609, %p1941
    %p1943 = pneg %p1942
    %s1944 = scalar_select %p1943, 0, %s1915
    %p1945 = scmp.eq.s32.totalorder %s1919, %s1924
    %p1946 = pnand %p1609, %p1945
    %p1947 = pneg %p1946
    %s1948 = scalar_select %p1947, 0, %s1919
    %p1949 = scmp.eq.s32.totalorder %s1920, %s1924
    %p1950 = pnand %p1609, %p1949
    %p1951 = pneg %p1950
    %s1952 = scalar_select %p1951, 0, %s1920
    %s1953 = scalar_select %p1609, 0, %s1924
    %p1954 = scmp.eq.s32.totalorder %s1928, %s1924
    %p1955 = pnand %p1609, %p1954
    %p1956 = pneg %p1955
    %s1957 = scalar_select %p1956, 0, %s1928
    %p1958 = scmp.eq.s32.totalorder %s1932, %s1924
    %p1959 = pnand %p1609, %p1958
    %p1960 = pneg %p1959
    %s1961 = scalar_select %p1960, 0, %s1932
    %p1962 = scmp.eq.s32.totalorder %s1936, %s1953
    %p1963 = pnand %p1615, %p1962
    %p1964 = pneg %p1963
    %s1965 = scalar_select %p1964, 1, %s1936
    %p1966 = scmp.eq.s32.totalorder %s1940, %s1953
    %p1967 = pnand %p1615, %p1966
    %p1968 = pneg %p1967
    %s1969 = scalar_select %p1968, 1, %s1940
    %p1970 = scmp.eq.s32.totalorder %s1944, %s1953
    %p1971 = pnand %p1615, %p1970
    %p1972 = pneg %p1971
    %s1973 = scalar_select %p1972, 1, %s1944
    %p1974 = scmp.eq.s32.totalorder %s1948, %s1953
    %p1975 = pnand %p1615, %p1974
    %p1976 = pneg %p1975
    %s1977 = scalar_select %p1976, 1, %s1948
    %p1978 = scmp.eq.s32.totalorder %s1952, %s1953
    %p1979 = pnand %p1615, %p1978
    %p1980 = pneg %p1979
    %s1981 = scalar_select %p1980, 1, %s1952
    %s1982 = scalar_select %p1615, 1, %s1953
    %p1983 = scmp.eq.s32.totalorder %s1957, %s1953
    %p1984 = pnand %p1615, %p1983
    %p1985 = pneg %p1984
    %s1986 = scalar_select %p1985, 1, %s1957
    %p1987 = scmp.eq.s32.totalorder %s1961, %s1953
    %p1988 = pnand %p1615, %p1987
    %p1989 = pneg %p1988
    %s1990 = scalar_select %p1989, 1, %s1961
    %p1991 = scmp.eq.s32.totalorder %s1965, %s1982
    %p1992 = pnand %p1620, %p1991
    %p1993 = pneg %p1992
    %s1994 = scalar_select %p1993, 2, %s1965
    %p1995 = scmp.eq.s32.totalorder %s1969, %s1982
    %p1996 = pnand %p1620, %p1995
    %p1997 = pneg %p1996
    %s1998 = scalar_select %p1997, 2, %s1969
    %p1999 = scmp.eq.s32.totalorder %s1973, %s1982
    %p2000 = pnand %p1620, %p1999
    %p2001 = pneg %p2000
    %s2002 = scalar_select %p2001, 2, %s1973
    %p2003 = scmp.eq.s32.totalorder %s1977, %s1982
    %p2004 = pnand %p1620, %p2003
    %p2005 = pneg %p2004
    %s2006 = scalar_select %p2005, 2, %s1977
    %p2007 = scmp.eq.s32.totalorder %s1981, %s1982
    %p2008 = pnand %p1620, %p2007
    %p2009 = pneg %p2008
    %s2010 = scalar_select %p2009, 2, %s1981
    %s2011 = scalar_select %p1620, 2, %s1982
    %p2012 = scmp.eq.s32.totalorder %s1986, %s1982
    %p2013 = pnand %p1620, %p2012
    %p2014 = pneg %p2013
    %s2015 = scalar_select %p2014, 2, %s1986
    %p2016 = scmp.eq.s32.totalorder %s1990, %s1982
    %p2017 = pnand %p1620, %p2016
    %p2018 = pneg %p2017
    %s2019 = scalar_select %p2018, 2, %s1990
    %p2020 = scmp.eq.s32.totalorder %s1994, %s2011
    %p2021 = pnand %p1625, %p2020
    %p2022 = pneg %p2021
    %s2023 = scalar_select %p2022, 3, %s1994
    %p2024 = scmp.eq.s32.totalorder %s1998, %s2011
    %p2025 = pnand %p1625, %p2024
    %p2026 = pneg %p2025
    %s2027 = scalar_select %p2026, 3, %s1998
    %p2028 = scmp.eq.s32.totalorder %s2002, %s2011
    %p2029 = pnand %p1625, %p2028
    %p2030 = pneg %p2029
    %s2031 = scalar_select %p2030, 3, %s2002
    %p2032 = scmp.eq.s32.totalorder %s2006, %s2011
    %p2033 = pnand %p1625, %p2032
    %p2034 = pneg %p2033
    %s2035 = scalar_select %p2034, 3, %s2006
    %p2036 = scmp.eq.s32.totalorder %s2010, %s2011
    %p2037 = pnand %p1625, %p2036
    %p2038 = pneg %p2037
    %s2039 = scalar_select %p2038, 3, %s2010
    %s2040 = scalar_select %p1625, 3, %s2011
    %p2041 = scmp.eq.s32.totalorder %s2015, %s2011
    %p2042 = pnand %p1625, %p2041
    %p2043 = pneg %p2042
    %s2044 = scalar_select %p2043, 3, %s2015
    %p2045 = scmp.eq.s32.totalorder %s2019, %s2011
    %p2046 = pnand %p1625, %p2045
    %p2047 = pneg %p2046
    %s2048 = scalar_select %p2047, 3, %s2019
    %p2049 = scmp.eq.s32.totalorder %s2023, %s2040
    %p2050 = pnand %p1630, %p2049
    %p2051 = pneg %p2050
    %s2052 = scalar_select %p2051, 4, %s2023
    %p2053 = scmp.eq.s32.totalorder %s2027, %s2040
    %p2054 = pnand %p1630, %p2053
    %p2055 = pneg %p2054
    %s2056 = scalar_select %p2055, 4, %s2027
    %p2057 = scmp.eq.s32.totalorder %s2031, %s2040
    %p2058 = pnand %p1630, %p2057
    %p2059 = pneg %p2058
    %s2060 = scalar_select %p2059, 4, %s2031
    %p2061 = scmp.eq.s32.totalorder %s2035, %s2040
    %p2062 = pnand %p1630, %p2061
    %p2063 = pneg %p2062
    %s2064 = scalar_select %p2063, 4, %s2035
    %p2065 = scmp.eq.s32.totalorder %s2039, %s2040
    %p2066 = pnand %p1630, %p2065
    %p2067 = pneg %p2066
    %s2068 = scalar_select %p2067, 4, %s2039
    %s2069 = scalar_select %p1630, 4, %s2040
    %p2070 = scmp.eq.s32.totalorder %s2044, %s2040
    %p2071 = pnand %p1630, %p2070
    %p2072 = pneg %p2071
    %s2073 = scalar_select %p2072, 4, %s2044
    %p2074 = scmp.eq.s32.totalorder %s2048, %s2040
    %p2075 = pnand %p1630, %p2074
    %p2076 = pneg %p2075
    %s2077 = scalar_select %p2076, 4, %s2048
    %p2078 = scmp.eq.s32.totalorder %s2052, %s2073
    %p2079 = pnand %p1633, %p2078
    %p2080 = pneg %p2079
    %s2081 = scalar_select %p2080, 0, %s2052
    %p2082 = scmp.eq.s32.totalorder %s2056, %s2073
    %p2083 = pnand %p1633, %p2082
    %p2084 = pneg %p2083
    %s2085 = scalar_select %p2084, 0, %s2056
    %p2086 = scmp.eq.s32.totalorder %s2060, %s2073
    %p2087 = pnand %p1633, %p2086
    %p2088 = pneg %p2087
    %s2089 = scalar_select %p2088, 0, %s2060
    %p2090 = scmp.eq.s32.totalorder %s2064, %s2073
    %p2091 = pnand %p1633, %p2090
    %p2092 = pneg %p2091
    %s2093 = scalar_select %p2092, 0, %s2064
    %p2094 = scmp.eq.s32.totalorder %s2068, %s2073
    %p2095 = pnand %p1633, %p2094
    %p2096 = pneg %p2095
    %s2097 = scalar_select %p2096, 0, %s2068
    %p2098 = scmp.eq.s32.totalorder %s2069, %s2073
    %p2099 = pnand %p1633, %p2098
    %p2100 = pneg %p2099
    %s2101 = scalar_select %p2100, 0, %s2069
    %s2102 = scalar_select %p1633, 0, %s2073
    %p2103 = scmp.eq.s32.totalorder %s2077, %s2073
    %p2104 = pnand %p1633, %p2103
    %p2105 = pneg %p2104
    %s2106 = scalar_select %p2105, 0, %s2077
    %p2107 = scmp.eq.s32.totalorder %s2081, %s2102
    %p2108 = pnand %p1639, %p2107
    %p2109 = pneg %p2108
    %s2110 = scalar_select %p2109, 1, %s2081
    %p2111 = scmp.eq.s32.totalorder %s2085, %s2102
    %p2112 = pnand %p1639, %p2111
    %p2113 = pneg %p2112
    %s2114 = scalar_select %p2113, 1, %s2085
    %p2115 = scmp.eq.s32.totalorder %s2089, %s2102
    %p2116 = pnand %p1639, %p2115
    %p2117 = pneg %p2116
    %s2118 = scalar_select %p2117, 1, %s2089
    %p2119 = scmp.eq.s32.totalorder %s2093, %s2102
    %p2120 = pnand %p1639, %p2119
    %p2121 = pneg %p2120
    %s2122 = scalar_select %p2121, 1, %s2093
    %p2123 = scmp.eq.s32.totalorder %s2097, %s2102
    %p2124 = pnand %p1639, %p2123
    %p2125 = pneg %p2124
    %s2126 = scalar_select %p2125, 1, %s2097
    %p2127 = scmp.eq.s32.totalorder %s2101, %s2102
    %p2128 = pnand %p1639, %p2127
    %p2129 = pneg %p2128
    %s2130 = scalar_select %p2129, 1, %s2101
    %s2131 = scalar_select %p1639, 1, %s2102
    %p2132 = scmp.eq.s32.totalorder %s2106, %s2102
    %p2133 = pnand %p1639, %p2132
    %p2134 = pneg %p2133
    %s2135 = scalar_select %p2134, 1, %s2106
    %p2136 = scmp.eq.s32.totalorder %s2110, %s2131
    %p2137 = pnand %p1644, %p2136
    %p2138 = pneg %p2137
    %s2139 = scalar_select %p2138, 2, %s2110
    %p2140 = scmp.eq.s32.totalorder %s2114, %s2131
    %p2141 = pnand %p1644, %p2140
    %p2142 = pneg %p2141
    %s2143 = scalar_select %p2142, 2, %s2114
    %p2144 = scmp.eq.s32.totalorder %s2118, %s2131
    %p2145 = pnand %p1644, %p2144
    %p2146 = pneg %p2145
    %s2147 = scalar_select %p2146, 2, %s2118
    %p2148 = scmp.eq.s32.totalorder %s2122, %s2131
    %p2149 = pnand %p1644, %p2148
    %p2150 = pneg %p2149
    %s2151 = scalar_select %p2150, 2, %s2122
    %p2152 = scmp.eq.s32.totalorder %s2126, %s2131
    %p2153 = pnand %p1644, %p2152
    %p2154 = pneg %p2153
    %s2155 = scalar_select %p2154, 2, %s2126
    %p2156 = scmp.eq.s32.totalorder %s2130, %s2131
    %p2157 = pnand %p1644, %p2156
    %p2158 = pneg %p2157
    %s2159 = scalar_select %p2158, 2, %s2130
    %s2160 = scalar_select %p1644, 2, %s2131
    %p2161 = scmp.eq.s32.totalorder %s2135, %s2131
    %p2162 = pnand %p1644, %p2161
    %p2163 = pneg %p2162
    %s2164 = scalar_select %p2163, 2, %s2135
    %p2165 = scmp.eq.s32.totalorder %s2139, %s2160
    %p2166 = pnand %p1649, %p2165
    %p2167 = pneg %p2166
    %s2168 = scalar_select %p2167, 3, %s2139
    %p2169 = scmp.eq.s32.totalorder %s2143, %s2160
    %p2170 = pnand %p1649, %p2169
    %p2171 = pneg %p2170
    %s2172 = scalar_select %p2171, 3, %s2143
    %p2173 = scmp.eq.s32.totalorder %s2147, %s2160
    %p2174 = pnand %p1649, %p2173
    %p2175 = pneg %p2174
    %s2176 = scalar_select %p2175, 3, %s2147
    %p2177 = scmp.eq.s32.totalorder %s2151, %s2160
    %p2178 = pnand %p1649, %p2177
    %p2179 = pneg %p2178
    %s2180 = scalar_select %p2179, 3, %s2151
    %p2181 = scmp.eq.s32.totalorder %s2155, %s2160
    %p2182 = pnand %p1649, %p2181
    %p2183 = pneg %p2182
    %s2184 = scalar_select %p2183, 3, %s2155
    %p2185 = scmp.eq.s32.totalorder %s2159, %s2160
    %p2186 = pnand %p1649, %p2185
    %p2187 = pneg %p2186
    %s2188 = scalar_select %p2187, 3, %s2159
    %s2189 = scalar_select %p1649, 3, %s2160
    %p2190 = scmp.eq.s32.totalorder %s2164, %s2160
    %p2191 = pnand %p1649, %p2190
    %p2192 = pneg %p2191
    %s2193 = scalar_select %p2192, 3, %s2164
    %p2194 = scmp.eq.s32.totalorder %s2168, %s2189
    %p2195 = pnand %p1654, %p2194
    %p2196 = pneg %p2195
    %s2197 = scalar_select %p2196, 4, %s2168
    %p2198 = scmp.eq.s32.totalorder %s2172, %s2189
    %p2199 = pnand %p1654, %p2198
    %p2200 = pneg %p2199
    %s2201 = scalar_select %p2200, 4, %s2172
    %p2202 = scmp.eq.s32.totalorder %s2176, %s2189
    %p2203 = pnand %p1654, %p2202
    %p2204 = pneg %p2203
    %s2205 = scalar_select %p2204, 4, %s2176
    %p2206 = scmp.eq.s32.totalorder %s2180, %s2189
    %p2207 = pnand %p1654, %p2206
    %p2208 = pneg %p2207
    %s2209 = scalar_select %p2208, 4, %s2180
    %p2210 = scmp.eq.s32.totalorder %s2184, %s2189
    %p2211 = pnand %p1654, %p2210
    %p2212 = pneg %p2211
    %s2213 = scalar_select %p2212, 4, %s2184
    %p2214 = scmp.eq.s32.totalorder %s2188, %s2189
    %p2215 = pnand %p1654, %p2214
    %p2216 = pneg %p2215
    %s2217 = scalar_select %p2216, 4, %s2188
    %s2218 = scalar_select %p1654, 4, %s2189
    %p2219 = scmp.eq.s32.totalorder %s2193, %s2189
    %p2220 = pnand %p1654, %p2219
    %p2221 = pneg %p2220
    %s2222 = scalar_select %p2221, 4, %s2193
    %p2223 = scmp.eq.s32.totalorder %s2197, %s2218
    %p2224 = pnand %p1659, %p2223
    %p2225 = pneg %p2224
    %s2226 = scalar_select %p2225, 5, %s2197
    %p2227 = scmp.eq.s32.totalorder %s2201, %s2218
    %p2228 = pnand %p1659, %p2227
    %p2229 = pneg %p2228
    %s2230 = scalar_select %p2229, 5, %s2201
    %p2231 = scmp.eq.s32.totalorder %s2205, %s2218
    %p2232 = pnand %p1659, %p2231
    %p2233 = pneg %p2232
    %s2234 = scalar_select %p2233, 5, %s2205
    %p2235 = scmp.eq.s32.totalorder %s2209, %s2218
    %p2236 = pnand %p1659, %p2235
    %p2237 = pneg %p2236
    %s2238 = scalar_select %p2237, 5, %s2209
    %p2239 = scmp.eq.s32.totalorder %s2213, %s2218
    %p2240 = pnand %p1659, %p2239
    %p2241 = pneg %p2240
    %s2242 = scalar_select %p2241, 5, %s2213
    %p2243 = scmp.eq.s32.totalorder %s2217, %s2218
    %p2244 = pnand %p1659, %p2243
    %p2245 = pneg %p2244
    %s2246 = scalar_select %p2245, 5, %s2217
    %s2247 = scalar_select %p1659, 5, %s2218
    %p2248 = scmp.eq.s32.totalorder %s2222, %s2218
    %p2249 = pnand %p1659, %p2248
    %p2250 = pneg %p2249
    %s2251 = scalar_select %p2250, 5, %s2222
    %p2252 = scmp.eq.s32.totalorder %s2226, %s2251
    %p2253 = pnand %p1662, %p2252
    %p2254 = pneg %p2253
    %s2255 = scalar_select %p2254, 0, %s2226
    %p2256 = scmp.eq.s32.totalorder %s2230, %s2251
    %p2257 = pnand %p1662, %p2256
    %p2258 = pneg %p2257
    %s2259 = scalar_select %p2258, 0, %s2230
    %p2260 = scmp.eq.s32.totalorder %s2234, %s2251
    %p2261 = pnand %p1662, %p2260
    %p2262 = pneg %p2261
    %s2263 = scalar_select %p2262, 0, %s2234
    %p2264 = scmp.eq.s32.totalorder %s2238, %s2251
    %p2265 = pnand %p1662, %p2264
    %p2266 = pneg %p2265
    %s2267 = scalar_select %p2266, 0, %s2238
    %p2268 = scmp.eq.s32.totalorder %s2242, %s2251
    %p2269 = pnand %p1662, %p2268
    %p2270 = pneg %p2269
    %s2271 = scalar_select %p2270, 0, %s2242
    %p2272 = scmp.eq.s32.totalorder %s2246, %s2251
    %p2273 = pnand %p1662, %p2272
    %p2274 = pneg %p2273
    %s2275 = scalar_select %p2274, 0, %s2246
    %p2276 = scmp.eq.s32.totalorder %s2247, %s2251
    %p2277 = pnand %p1662, %p2276
    %p2278 = pneg %p2277
    %s2279 = scalar_select %p2278, 0, %s2247
    %s2280 = scalar_select %p1662, 0, %s2251
    %p2281 = scmp.eq.s32.totalorder %s2255, %s2280
    %p2282 = pnand %p1668, %p2281
    %p2283 = pneg %p2282
    %s2284 = scalar_select %p2283, 1, %s2255
    %p2285 = scmp.eq.s32.totalorder %s2259, %s2280
    %p2286 = pnand %p1668, %p2285
    %p2287 = pneg %p2286
    %s2288 = scalar_select %p2287, 1, %s2259
    %p2289 = scmp.eq.s32.totalorder %s2263, %s2280
    %p2290 = pnand %p1668, %p2289
    %p2291 = pneg %p2290
    %s2292 = scalar_select %p2291, 1, %s2263
    %p2293 = scmp.eq.s32.totalorder %s2267, %s2280
    %p2294 = pnand %p1668, %p2293
    %p2295 = pneg %p2294
    %s2296 = scalar_select %p2295, 1, %s2267
    %p2297 = scmp.eq.s32.totalorder %s2271, %s2280
    %p2298 = pnand %p1668, %p2297
    %p2299 = pneg %p2298
    %s2300 = scalar_select %p2299, 1, %s2271
    %p2301 = scmp.eq.s32.totalorder %s2275, %s2280
    %p2302 = pnand %p1668, %p2301
    %p2303 = pneg %p2302
    %s2304 = scalar_select %p2303, 1, %s2275
    %p2305 = scmp.eq.s32.totalorder %s2279, %s2280
    %p2306 = pnand %p1668, %p2305
    %p2307 = pneg %p2306
    %s2308 = scalar_select %p2307, 1, %s2279
    %s2309 = scalar_select %p1668, 1, %s2280
    %p2310 = scmp.eq.s32.totalorder %s2284, %s2309
    %p2311 = pnand %p1673, %p2310
    %p2312 = pneg %p2311
    %s2313 = scalar_select %p2312, 2, %s2284
    %p2314 = scmp.eq.s32.totalorder %s2288, %s2309
    %p2315 = pnand %p1673, %p2314
    %p2316 = pneg %p2315
    %s2317 = scalar_select %p2316, 2, %s2288
    %p2318 = scmp.eq.s32.totalorder %s2292, %s2309
    %p2319 = pnand %p1673, %p2318
    %p2320 = pneg %p2319
    %s2321 = scalar_select %p2320, 2, %s2292
    %p2322 = scmp.eq.s32.totalorder %s2296, %s2309
    %p2323 = pnand %p1673, %p2322
    %p2324 = pneg %p2323
    %s2325 = scalar_select %p2324, 2, %s2296
    %p2326 = scmp.eq.s32.totalorder %s2300, %s2309
    %p2327 = pnand %p1673, %p2326
    %p2328 = pneg %p2327
    %s2329 = scalar_select %p2328, 2, %s2300
    %p2330 = scmp.eq.s32.totalorder %s2304, %s2309
    %p2331 = pnand %p1673, %p2330
    %p2332 = pneg %p2331
    %s2333 = scalar_select %p2332, 2, %s2304
    %p2334 = scmp.eq.s32.totalorder %s2308, %s2309
    %p2335 = pnand %p1673, %p2334
    %p2336 = pneg %p2335
    %s2337 = scalar_select %p2336, 2, %s2308
    %s2338 = scalar_select %p1673, 2, %s2309
    %p2339 = scmp.eq.s32.totalorder %s2313, %s2338
    %p2340 = pnand %p1678, %p2339
    %p2341 = pneg %p2340
    %s2342 = scalar_select %p2341, 3, %s2313
    %p2343 = scmp.eq.s32.totalorder %s2317, %s2338
    %p2344 = pnand %p1678, %p2343
    %p2345 = pneg %p2344
    %s2346 = scalar_select %p2345, 3, %s2317
    %p2347 = scmp.eq.s32.totalorder %s2321, %s2338
    %p2348 = pnand %p1678, %p2347
    %p2349 = pneg %p2348
    %s2350 = scalar_select %p2349, 3, %s2321
    %p2351 = scmp.eq.s32.totalorder %s2325, %s2338
    %p2352 = pnand %p1678, %p2351
    %p2353 = pneg %p2352
    %s2354 = scalar_select %p2353, 3, %s2325
    %p2355 = scmp.eq.s32.totalorder %s2329, %s2338
    %p2356 = pnand %p1678, %p2355
    %p2357 = pneg %p2356
    %s2358 = scalar_select %p2357, 3, %s2329
    %p2359 = scmp.eq.s32.totalorder %s2333, %s2338
    %p2360 = pnand %p1678, %p2359
    %p2361 = pneg %p2360
    %s2362 = scalar_select %p2361, 3, %s2333
    %p2363 = scmp.eq.s32.totalorder %s2337, %s2338
    %p2364 = pnand %p1678, %p2363
    %p2365 = pneg %p2364
    %s2366 = scalar_select %p2365, 3, %s2337
    %s2367 = scalar_select %p1678, 3, %s2338
    %p2368 = scmp.eq.s32.totalorder %s2342, %s2367
    %p2369 = pnand %p1683, %p2368
    %p2370 = pneg %p2369
    %s2371 = scalar_select %p2370, 4, %s2342
    %p2372 = scmp.eq.s32.totalorder %s2346, %s2367
    %p2373 = pnand %p1683, %p2372
    %p2374 = pneg %p2373
    %s2375 = scalar_select %p2374, 4, %s2346
    %p2376 = scmp.eq.s32.totalorder %s2350, %s2367
    %p2377 = pnand %p1683, %p2376
    %p2378 = pneg %p2377
    %s2379 = scalar_select %p2378, 4, %s2350
    %p2380 = scmp.eq.s32.totalorder %s2354, %s2367
    %p2381 = pnand %p1683, %p2380
    %p2382 = pneg %p2381
    %s2383 = scalar_select %p2382, 4, %s2354
    %p2384 = scmp.eq.s32.totalorder %s2358, %s2367
    %p2385 = pnand %p1683, %p2384
    %p2386 = pneg %p2385
    %s2387 = scalar_select %p2386, 4, %s2358
    %p2388 = scmp.eq.s32.totalorder %s2362, %s2367
    %p2389 = pnand %p1683, %p2388
    %p2390 = pneg %p2389
    %s2391 = scalar_select %p2390, 4, %s2362
    %p2392 = scmp.eq.s32.totalorder %s2366, %s2367
    %p2393 = pnand %p1683, %p2392
    %p2394 = pneg %p2393
    %s2395 = scalar_select %p2394, 4, %s2366
    %s2396 = scalar_select %p1683, 4, %s2367
    %p2397 = scmp.eq.s32.totalorder %s2371, %s2396
    %p2398 = pnand %p1688, %p2397
    %p2399 = pneg %p2398
    %s2400 = scalar_select %p2399, 5, %s2371
    %p2401 = scmp.eq.s32.totalorder %s2375, %s2396
    %p2402 = pnand %p1688, %p2401
    %p2403 = pneg %p2402
    %s2404 = scalar_select %p2403, 5, %s2375
    %p2405 = scmp.eq.s32.totalorder %s2379, %s2396
    %p2406 = pnand %p1688, %p2405
    %p2407 = pneg %p2406
    %s2408 = scalar_select %p2407, 5, %s2379
    %p2409 = scmp.eq.s32.totalorder %s2383, %s2396
    %p2410 = pnand %p1688, %p2409
    %p2411 = pneg %p2410
    %s2412 = scalar_select %p2411, 5, %s2383
    %p2413 = scmp.eq.s32.totalorder %s2387, %s2396
    %p2414 = pnand %p1688, %p2413
    %p2415 = pneg %p2414
    %s2416 = scalar_select %p2415, 5, %s2387
    %p2417 = scmp.eq.s32.totalorder %s2391, %s2396
    %p2418 = pnand %p1688, %p2417
    %p2419 = pneg %p2418
    %s2420 = scalar_select %p2419, 5, %s2391
    %p2421 = scmp.eq.s32.totalorder %s2395, %s2396
    %p2422 = pnand %p1688, %p2421
    %p2423 = pneg %p2422
    %s2424 = scalar_select %p2423, 5, %s2395
    %s2425 = scalar_select %p1688, 5, %s2396
    %p2426 = scmp.eq.s32.totalorder %s2400, %s2425
    %p2427 = pnand %p1693, %p2426
    %p2428 = pneg %p2427
    %s2429 = scalar_select %p2428, 6, %s2400
    %p2430 = scmp.eq.s32.totalorder %s2404, %s2425
    %p2431 = pnand %p1693, %p2430
    %p2432 = pneg %p2431
    %s2433 = scalar_select %p2432, 6, %s2404
    %p2434 = scmp.eq.s32.totalorder %s2408, %s2425
    %p2435 = pnand %p1693, %p2434
    %p2436 = pneg %p2435
    %s2437 = scalar_select %p2436, 6, %s2408
    %p2438 = scmp.eq.s32.totalorder %s2412, %s2425
    %p2439 = pnand %p1693, %p2438
    %p2440 = pneg %p2439
    %s2441 = scalar_select %p2440, 6, %s2412
    %p2442 = scmp.eq.s32.totalorder %s2416, %s2425
    %p2443 = pnand %p1693, %p2442
    %p2444 = pneg %p2443
    %s2445 = scalar_select %p2444, 6, %s2416
    %p2446 = scmp.eq.s32.totalorder %s2420, %s2425
    %p2447 = pnand %p1693, %p2446
    %p2448 = pneg %p2447
    %s2449 = scalar_select %p2448, 6, %s2420
    %p2450 = scmp.eq.s32.totalorder %s2424, %s2425
    %p2451 = pnand %p1693, %p2450
    %p2452 = pneg %p2451
    %s2453 = scalar_select %p2452, 6, %s2424
    %s2454 = scalar_select %p1693, 6, %s2425
    %v2455 = vlaneseq
    %v2456 = vand.u32 %v2455, 127
    %v2457 = vlaneseq
    %v2458 = vshrl.u32 %v2457, 7
    %vm2459 = vcmp.eq.s32.totalorder %v2456, 0
    %v2460 = vstv %s2429
    %v2461 = vsel %vm2459, %v2460, 0
    %vm2462 = vcmp.eq.s32.totalorder %v2458, 0
    %v2463 = vsel %vm2462, %v2460, 0
    %vm2464 = vcmp.eq.s32.totalorder %v2456, 1
    %v2465 = vstv %s2433
    %v2466 = vsel %vm2464, %v2465, 0
    %v2467 = vadd.s32 %v2461, %v2466
    %vm2468 = vcmp.eq.s32.totalorder %v2458, 1
    %v2469 = vsel %vm2468, %v2465, 0
    %v2470 = vadd.s32 %v2463, %v2469
    %vm2471 = vcmp.eq.s32.totalorder %v2456, 2
    %v2472 = vstv %s2437
    %v2473 = vsel %vm2471, %v2472, 0
    %v2474 = vadd.s32 %v2467, %v2473
    %vm2475 = vcmp.eq.s32.totalorder %v2458, 2
    %v2476 = vsel %vm2475, %v2472, 0
    %v2477 = vadd.s32 %v2470, %v2476
    %vm2478 = vcmp.eq.s32.totalorder %v2456, 3
    %v2479 = vstv %s2441
    %v2480 = vsel %vm2478, %v2479, 0
    %v2481 = vadd.s32 %v2474, %v2480
    %vm2482 = vcmp.eq.s32.totalorder %v2458, 3
    %v2483 = vsel %vm2482, %v2479, 0
    %v2484 = vadd.s32 %v2477, %v2483
    %vm2485 = vcmp.eq.s32.totalorder %v2456, 4
    %v2486 = vstv %s2445
    %v2487 = vsel %vm2485, %v2486, 0
    %v2488 = vadd.s32 %v2481, %v2487
    %vm2489 = vcmp.eq.s32.totalorder %v2458, 4
    %v2490 = vsel %vm2489, %v2486, 0
    %v2491 = vadd.s32 %v2484, %v2490
    %vm2492 = vcmp.eq.s32.totalorder %v2456, 5
    %v2493 = vstv %s2449
    %v2494 = vsel %vm2492, %v2493, 0
    %v2495 = vadd.s32 %v2488, %v2494
    %vm2496 = vcmp.eq.s32.totalorder %v2458, 5
    %v2497 = vsel %vm2496, %v2493, 0
    %v2498 = vadd.s32 %v2491, %v2497
    %vm2499 = vcmp.eq.s32.totalorder %v2456, 6
    %v2500 = vstv %s2453
    %v2501 = vsel %vm2499, %v2500, 0
    %v2502 = vadd.s32 %v2495, %v2501
    %vm2503 = vcmp.eq.s32.totalorder %v2458, 6
    %v2504 = vsel %vm2503, %v2500, 0
    %v2505 = vadd.s32 %v2498, %v2504
    %vm2506 = vcmp.eq.s32.totalorder %v2456, 7
    %v2507 = vstv %s2454
    %v2508 = vsel %vm2506, %v2507, 0
    %v2509 = vadd.s32 %v2502, %v2508
    %vm2510 = vcmp.eq.s32.totalorder %v2458, 7
    %v2511 = vsel %vm2510, %v2507, 0
    %v2512 = vadd.s32 %v2505, %v2511
    %vm2513 = vcmp.eq.s32.totalorder %v2509, %v2512
    %v2514 = vsel %vm2513, 1, 0
    %v2515 = vcvt.s32.f32 %v2514
    %v2516 = vsel %vm89, %v2515, 0.0
    %2517 = vadd.xlane.f32.xlu0 %v2516
    %v2518 = vpop.xlane.xlu0 %2517
    %v2519 = vrcp.pop %v2518
    %v2520 = vmul.f32 %v2515, %v2519
    %vm2521 = vcmp.eq.s32.totalorder %v2509, %v2458
    %v2522 = vsel %vm2521, 1, 0
    %v2523 = vcvt.s32.f32 %v2522
    %v2524 = vsel %vm89, %v2523, 0.0
    %2525 = vadd.xlane.f32.xlu0 %v2524
    %v2526 = vpop.xlane.xlu0 %2525
    %v2527 = vmin.f32 %v2526, 1.0
    %vm2528 = vcmp.lt.s32.totalorder %v2458, %v2509
    %v2529 = vsel %vm2528, 1, 0
    %v2530 = vcvt.s32.f32 %v2529
    %v2531 = vmul.f32 %v2527, %v2530
    %v2532 = vsel %vm89, %v2531, 0.0
    %v2533 = vrot.slane %v2532, 4
    %v2534 = vadd.f32 %v2532, %v2533
    %v2535 = vrot.slane %v2534, 2
    %v2536 = vadd.f32 %v2534, %v2535
    %v2537 = vrot.slane %v2536, 1
    %v2538 = vadd.f32 %v2536, %v2537
    %v2539 = vcvt.f32.s32.to.zero.pseudo %v2538
    %vm2540 = vcmask 57344
    %2541 = vst.msk [vmem:[#allocation11] sm:$0x1] %vm2540, %v2539
    %v2542 = vld [vmem:[%s3] sm:$0xff]
    %v2543 = vld [vmem:[%s3 + $0x8] sm:$0xff]
    %v2544 = vld [vmem:[%s6] sm:$0xff]
    %v2545 = vld [vmem:[%s6 + $0x8] sm:$0xff]
    %v2546 = vld [vmem:[%s7] sm:$0x1]
    %v2548 = vlaneseq
    %v2549 = vshrl.u32 %v2548, 7
    %v2550 = vsub.s32 0, %v2549
    %v2551 = vrot.slane %v2546, %v2550
    %2553 = vxpose.xlu0.b32.start [1/16] %v2542, 128
    %2554 = vxpose.xlu0.b32.cont [2/16] %v2543, 128
    %2555 = vxpose.xlu0.b32.cont [3/16] 0.0, 128
    %2556 = vxpose.xlu0.b32.cont [4/16] 0.0, 128
    %2557 = vxpose.xlu0.b32.cont [5/16] 0.0, 128
    %2558 = vxpose.xlu0.b32.cont [6/16] 0.0, 128
    %2559 = vxpose.xlu0.b32.cont [7/16] 0.0, 128
    %2560 = vxpose.xlu0.b32.cont [8/16] 0.0, 128
    %2561 = vxpose.xlu0.b32.cont [9/16] 0.0, 128
    %2562 = vxpose.xlu0.b32.cont [10/16] 0.0, 128
    %2563 = vxpose.xlu0.b32.cont [11/16] 0.0, 128
    %2564 = vxpose.xlu0.b32.cont [12/16] 0.0, 128
    %2565 = vxpose.xlu0.b32.cont [13/16] 0.0, 128
    %2566 = vxpose.xlu0.b32.cont [14/16] 0.0, 128
    %2567 = vxpose.xlu0.b32.cont [15/16] 0.0, 128
    %2568 = vxpose.xlu0.b32.end [16/16] 0.0, 128
    %v2569 = vpop.trf.xlu0
    %v2570 = vpop.trf.xlu0
    %v2571 = vpop.trf.xlu0
    %v2572 = vpop.trf.xlu0
    %v2573 = vpop.trf.xlu0
    %v2574 = vpop.trf.xlu0
    %v2575 = vpop.trf.xlu0
    %v2576 = vpop.trf.xlu0
    %v2577 = vpop.trf.xlu0
    %v2578 = vpop.trf.xlu0
    %v2579 = vpop.trf.xlu0
    %v2580 = vpop.trf.xlu0
    %v2581 = vpop.trf.xlu0
    %v2582 = vpop.trf.xlu0
    %v2583 = vpop.trf.xlu0
    %v2584 = vpop.trf.xlu0
    %vm2585 = vcmask 130048
    %v2587 = vsel %vm2585, %v2569, 0
    %2589 = vmatprep.subr.mxu0 0.0
    %2590 = vmatpush1.msra.mxu0 %v2544
    %2591 = vmatprep.subr.mxu0 0.0
    %2592 = vmatpush1.msra.mxu0 %v2545
    %2593 = vmatprep.subr.mxu0 0.0
    %2594 = vmatpush1.msra.mxu0 0.0
    %2595 = vmatprep.subr.mxu0 0.0
    %2596 = vmatpush1.msra.mxu0 0.0
    %2597 = vmatprep.subr.mxu0 0.0
    %2598 = vmatpush1.msra.mxu0 0.0
    %2599 = vmatprep.subr.mxu0 0.0
    %2600 = vmatpush1.msra.mxu0 0.0
    %2601 = vmatprep.subr.mxu0 0.0
    %2602 = vmatpush1.msra.mxu0 0.0
    %2603 = vmatprep.subr.mxu0 0.0
    %2604 = vmatpush1.msra.mxu0 0.0
    %2605 = vmatprep.subr.mxu0 0.0
    %2606 = vmatpush1.msra.mxu0 0.0
    %2607 = vmatprep.subr.mxu0 0.0
    %2608 = vmatpush1.msra.mxu0 0.0
    %2609 = vmatprep.subr.mxu0 0.0
    %2610 = vmatpush1.msra.mxu0 0.0
    %2611 = vmatprep.subr.mxu0 0.0
    %2612 = vmatpush1.msra.mxu0 0.0
    %2613 = vmatprep.subr.mxu0 0.0
    %2614 = vmatpush1.msra.mxu0 0.0
    %2615 = vmatprep.subr.mxu0 0.0
    %2616 = vmatpush1.msra.mxu0 0.0
    %2617 = vmatprep.subr.mxu0 0.0
    %2618 = vmatpush1.msra.mxu0 0.0
    %2619 = vmatprep.subr.mxu0 0.0
    %2620 = vmatpush1.msra.mxu0 0.0
    %2621 = vmatprep.subr.mxu0 0.0
    %2622 = vmatpush1.msra.mxu0 0.0
    %2623 = vmatprep.subr.mxu0 0.0
    %2624 = vmatpush1.msra.mxu0 0.0
    %2625 = vmatprep.subr.mxu0 0.0
    %2626 = vmatpush1.msra.mxu0 0.0
    %2627 = vmatprep.subr.mxu0 0.0
    %2628 = vmatpush1.msra.mxu0 0.0
    %2629 = vmatprep.subr.mxu0 0.0
    %2630 = vmatpush1.msra.mxu0 0.0
    %2631 = vmatprep.subr.mxu0 0.0
    %2632 = vmatpush1.msra.mxu0 0.0
    %2633 = vmatprep.subr.mxu0 0.0
    %2634 = vmatpush1.msra.mxu0 0.0
    %2635 = vmatprep.subr.mxu0 0.0
    %2636 = vmatpush1.msra.mxu0 0.0
    %2637 = vmatprep.subr.mxu0 0.0
    %2638 = vmatpush1.msra.mxu0 0.0
    %2639 = vmatprep.subr.mxu0 0.0
    %2640 = vmatpush1.msra.mxu0 0.0
    %2641 = vmatprep.subr.mxu0 0.0
    %2642 = vmatpush1.msra.mxu0 0.0
    %2643 = vmatprep.subr.mxu0 0.0
    %2644 = vmatpush1.msra.mxu0 0.0
    %2645 = vmatprep.subr.mxu0 0.0
    %2646 = vmatpush1.msra.mxu0 0.0
    %2647 = vmatprep.subr.mxu0 0.0
    %2648 = vmatpush1.msra.mxu0 0.0
    %2649 = vmatprep.subr.mxu0 0.0
    %2650 = vmatpush1.msra.mxu0 0.0
    %2651 = vmatprep.subr.mxu0 0.0
    %2652 = vmatpush1.msra.mxu0 0.0
    %2653 = vmatprep.mubr.f32.mxu0 0.0
    %2654 = vmatmul.mubr.f32.gmra.mrb[0].mxu0 %v2587
    %v2655 = vpop.f32.mrb[0].mxu0
    %v2656 = vadd.f32 %v2551, %v2655
    %v2657 = vpop.f32.mrb[0].mxu0
    %2658 = vdwg.mxu0
    %v2660 = vsel %vm89, %v2520, 0
    %2662 = vmatprep.subr.mxu0 0.0
    %2663 = vmatpush1.msra.mxu0 %v2656
    %2664 = vmatprep.subr.mxu0 0.0
    %2665 = vmatpush1.msra.mxu0 0.0
    %2666 = vmatprep.subr.mxu0 0.0
    %2667 = vmatpush1.msra.mxu0 0.0
    %2668 = vmatprep.subr.mxu0 0.0
    %2669 = vmatpush1.msra.mxu0 0.0
    %2670 = vmatprep.subr.mxu0 0.0
    %2671 = vmatpush1.msra.mxu0 0.0
    %2672 = vmatprep.subr.mxu0 0.0
    %2673 = vmatpush1.msra.mxu0 0.0
    %2674 = vmatprep.subr.mxu0 0.0
    %2675 = vmatpush1.msra.mxu0 0.0
    %2676 = vmatprep.subr.mxu0 0.0
    %2677 = vmatpush1.msra.mxu0 0.0
    %2678 = vmatprep.subr.mxu0 0.0
    %2679 = vmatpush1.msra.mxu0 0.0
    %2680 = vmatprep.subr.mxu0 0.0
    %2681 = vmatpush1.msra.mxu0 0.0
    %2682 = vmatprep.subr.mxu0 0.0
    %2683 = vmatpush1.msra.mxu0 0.0
    %2684 = vmatprep.subr.mxu0 0.0
    %2685 = vmatpush1.msra.mxu0 0.0
    %2686 = vmatprep.subr.mxu0 0.0
    %2687 = vmatpush1.msra.mxu0 0.0
    %2688 = vmatprep.subr.mxu0 0.0
    %2689 = vmatpush1.msra.mxu0 0.0
    %2690 = vmatprep.subr.mxu0 0.0
    %2691 = vmatpush1.msra.mxu0 0.0
    %2692 = vmatprep.subr.mxu0 0.0
    %2693 = vmatpush1.msra.mxu0 0.0
    %2694 = vmatprep.subr.mxu0 0.0
    %2695 = vmatpush1.msra.mxu0 0.0
    %2696 = vmatprep.subr.mxu0 0.0
    %2697 = vmatpush1.msra.mxu0 0.0
    %2698 = vmatprep.subr.mxu0 0.0
    %2699 = vmatpush1.msra.mxu0 0.0
    %2700 = vmatprep.subr.mxu0 0.0
    %2701 = vmatpush1.msra.mxu0 0.0
    %2702 = vmatprep.subr.mxu0 0.0
    %2703 = vmatpush1.msra.mxu0 0.0
    %2704 = vmatprep.subr.mxu0 0.0
    %2705 = vmatpush1.msra.mxu0 0.0
    %2706 = vmatprep.subr.mxu0 0.0
    %2707 = vmatpush1.msra.mxu0 0.0
    %2708 = vmatprep.subr.mxu0 0.0
    %2709 = vmatpush1.msra.mxu0 0.0
    %2710 = vmatprep.subr.mxu0 0.0
    %2711 = vmatpush1.msra.mxu0 0.0
    %2712 = vmatprep.subr.mxu0 0.0
    %2713 = vmatpush1.msra.mxu0 0.0
    %2714 = vmatprep.subr.mxu0 0.0
    %2715 = vmatpush1.msra.mxu0 0.0
    %2716 = vmatprep.subr.mxu0 0.0
    %2717 = vmatpush1.msra.mxu0 0.0
    %2718 = vmatprep.subr.mxu0 0.0
    %2719 = vmatpush1.msra.mxu0 0.0
    %2720 = vmatprep.subr.mxu0 0.0
    %2721 = vmatpush1.msra.mxu0 0.0
    %2722 = vmatprep.subr.mxu0 0.0
    %2723 = vmatpush1.msra.mxu0 0.0
    %2724 = vmatprep.subr.mxu0 0.0
    %2725 = vmatpush1.msra.mxu0 0.0
    %2726 = vmatprep.mubr.f32.mxu0 0.0
    %2727 = vmatmul.mubr.f32.gmra.mrb[0].mxu0 %v2660
    %v2728 = vpop.f32.mrb[0].mxu0
    %v2729 = vadd.f32 0.0, %v2728
    %v2730 = vpop.f32.mrb[0].mxu0
    %2731 = vdwg.mxu0
    %v2732 = vmul.f32 %v2729, 2.0
    %v2733 = vadd.f32 %v2656, %v2732
    %v2734 = vmul.f32 %v2733, 0.33333334
    %v2735 = vmax.f32 %v2656, 0.0
    %v2736 = vmin.f32 %v2656, 0.0
    %v2737 = vstv %s83
    %v2738 = vmul.f32 %v2737, %v2736
    %v2739 = vadd.f32 %v2735, %v2738
    %v2740 = vmax.f32 %v2729, 0.0
    %v2741 = vmin.f32 %v2729, 0.0
    %v2742 = vmul.f32 %v2737, %v2741
    %v2743 = vadd.f32 %v2740, %v2742
    %v2744 = vld [vmem:[#allocation5] sm:$0xff]
    %v2745 = vld [vmem:[#allocation5 + $0x8] sm:$0xff]
    %v2746 = vld [vmem:[#allocation5 + $0x10] sm:$0xff]
    %v2747 = vld [vmem:[#allocation5 + $0x18] sm:$0xff]
    %v2748 = vld [vmem:[#allocation5 + $0x20] sm:$0xff]
    %v2749 = vld [vmem:[#allocation5 + $0x28] sm:$0xff]
    %v2750 = vld [vmem:[#allocation5 + $0x30] sm:$0xff]
    %v2751 = vld [vmem:[#allocation5 + $0x38] sm:$0xff]
    %v2752 = vld [vmem:[#allocation5 + $0x40] sm:$0xff]
    %v2753 = vld [vmem:[#allocation5 + $0x48] sm:$0xff]
    %v2754 = vld [vmem:[#allocation5 + $0x50] sm:$0xff]
    %v2755 = vld [vmem:[#allocation5 + $0x58] sm:$0xff]
    %v2756 = vld [vmem:[#allocation5 + $0x60] sm:$0xff]
    %v2757 = vld [vmem:[#allocation5 + $0x68] sm:$0xff]
    %v2758 = vld [vmem:[#allocation5 + $0x70] sm:$0xff]
    %v2759 = vld [vmem:[#allocation5 + $0x78] sm:$0xff]
    %v2760 = vld [vmem:[#allocation8] sm:$0xff]
    %v2761 = vld [vmem:[#allocation8 + $0x8] sm:$0xff]
    %v2762 = vld [vmem:[#allocation8 + $0x10] sm:$0xff]
    %v2763 = vld [vmem:[#allocation8 + $0x18] sm:$0xff]
    %v2764 = vld [vmem:[#allocation8 + $0x20] sm:$0xff]
    %v2765 = vld [vmem:[#allocation8 + $0x28] sm:$0xff]
    %v2766 = vld [vmem:[#allocation8 + $0x30] sm:$0xff]
    %v2767 = vld [vmem:[#allocation8 + $0x38] sm:$0xff]
    %v2768 = vld [vmem:[#allocation8 + $0x40] sm:$0xff]
    %v2769 = vld [vmem:[#allocation8 + $0x48] sm:$0xff]
    %v2770 = vld [vmem:[#allocation8 + $0x50] sm:$0xff]
    %v2771 = vld [vmem:[#allocation8 + $0x58] sm:$0xff]
    %v2772 = vld [vmem:[#allocation8 + $0x60] sm:$0xff]
    %v2773 = vld [vmem:[#allocation8 + $0x68] sm:$0xff]
    %v2774 = vld [vmem:[#allocation8 + $0x70] sm:$0xff]
    %v2775 = vld [vmem:[#allocation8 + $0x78] sm:$0xff]
    %2776 = vmatprep.subr.mxu0 0.0
    %2777 = vmatpush1.msra.mxu0 %v2760
    %2778 = vmatprep.subr.mxu0 0.0
    %2779 = vmatpush1.msra.mxu0 %v2761
    %2780 = vmatprep.subr.mxu0 0.0
    %2781 = vmatpush1.msra.mxu0 %v2762
    %2782 = vmatprep.subr.mxu0 0.0
    %2783 = vmatpush1.msra.mxu0 %v2763
    %2784 = vmatprep.subr.mxu0 0.0
    %2785 = vmatpush1.msra.mxu0 %v2764
    %2786 = vmatprep.subr.mxu0 0.0
    %2787 = vmatpush1.msra.mxu0 %v2765
    %2788 = vmatprep.subr.mxu0 0.0
    %2789 = vmatpush1.msra.mxu0 %v2766
    %2790 = vmatprep.subr.mxu0 0.0
    %2791 = vmatpush1.msra.mxu0 %v2767
    %2792 = vmatprep.subr.mxu0 0.0
    %2793 = vmatpush1.msra.mxu0 %v2768
    %2794 = vmatprep.subr.mxu0 0.0
    %2795 = vmatpush1.msra.mxu0 %v2769
    %2796 = vmatprep.subr.mxu0 0.0
    %2797 = vmatpush1.msra.mxu0 %v2770
    %2798 = vmatprep.subr.mxu0 0.0
    %2799 = vmatpush1.msra.mxu0 %v2771
    %2800 = vmatprep.subr.mxu0 0.0
    %2801 = vmatpush1.msra.mxu0 %v2772
    %2802 = vmatprep.subr.mxu0 0.0
    %2803 = vmatpush1.msra.mxu0 %v2773
    %2804 = vmatprep.subr.mxu0 0.0
    %2805 = vmatpush1.msra.mxu0 %v2774
    %2806 = vmatprep.subr.mxu0 0.0
    %2807 = vmatpush1.msra.mxu0 %v2775
    %2808 = vmatprep.subr.mxu0 0.0
    %2809 = vmatpush1.msra.mxu0 0.0
    %2810 = vmatprep.subr.mxu0 0.0
    %2811 = vmatpush1.msra.mxu0 0.0
    %2812 = vmatprep.subr.mxu0 0.0
    %2813 = vmatpush1.msra.mxu0 0.0
    %2814 = vmatprep.subr.mxu0 0.0
    %2815 = vmatpush1.msra.mxu0 0.0
    %2816 = vmatprep.subr.mxu0 0.0
    %2817 = vmatpush1.msra.mxu0 0.0
    %2818 = vmatprep.subr.mxu0 0.0
    %2819 = vmatpush1.msra.mxu0 0.0
    %2820 = vmatprep.subr.mxu0 0.0
    %2821 = vmatpush1.msra.mxu0 0.0
    %2822 = vmatprep.subr.mxu0 0.0
    %2823 = vmatpush1.msra.mxu0 0.0
    %2824 = vmatprep.subr.mxu0 0.0
    %2825 = vmatpush1.msra.mxu0 0.0
    %2826 = vmatprep.subr.mxu0 0.0
    %2827 = vmatpush1.msra.mxu0 0.0
    %2828 = vmatprep.subr.mxu0 0.0
    %2829 = vmatpush1.msra.mxu0 0.0
    %2830 = vmatprep.subr.mxu0 0.0
    %2831 = vmatpush1.msra.mxu0 0.0
    %2832 = vmatprep.subr.mxu0 0.0
    %2833 = vmatpush1.msra.mxu0 0.0
    %2834 = vmatprep.subr.mxu0 0.0
    %2835 = vmatpush1.msra.mxu0 0.0
    %2836 = vmatprep.subr.mxu0 0.0
    %2837 = vmatpush1.msra.mxu0 0.0
    %2838 = vmatprep.subr.mxu0 0.0
    %2839 = vmatpush1.msra.mxu0 0.0
    %2840 = vmatprep.mubr.f32.mxu0 0.0
    %2841 = vmatmul.mubr.f32.gmra.mrb[0].mxu0 %v2743
    %v2842 = vpop.f32.mrb[0].mxu0
    %v2843 = vadd.f32 0.0, %v2842
    %v2844 = vpop.f32.mrb[0].mxu0
    %2845 = vdwg.mxu0
    %2846 = vmatprep.subr.mxu0 0.0
    %2847 = vmatpush1.msra.mxu0 %v2744
    %2848 = vmatprep.subr.mxu0 0.0
    %2849 = vmatpush1.msra.mxu0 %v2745
    %2850 = vmatprep.subr.mxu0 0.0
    %2851 = vmatpush1.msra.mxu0 %v2746
    %2852 = vmatprep.subr.mxu0 0.0
    %2853 = vmatpush1.msra.mxu0 %v2747
    %2854 = vmatprep.subr.mxu0 0.0
    %2855 = vmatpush1.msra.mxu0 %v2748
    %2856 = vmatprep.subr.mxu0 0.0
    %2857 = vmatpush1.msra.mxu0 %v2749
    %2858 = vmatprep.subr.mxu0 0.0
    %2859 = vmatpush1.msra.mxu0 %v2750
    %2860 = vmatprep.subr.mxu0 0.0
    %2861 = vmatpush1.msra.mxu0 %v2751
    %2862 = vmatprep.subr.mxu0 0.0
    %2863 = vmatpush1.msra.mxu0 %v2752
    %2864 = vmatprep.subr.mxu0 0.0
    %2865 = vmatpush1.msra.mxu0 %v2753
    %2866 = vmatprep.subr.mxu0 0.0
    %2867 = vmatpush1.msra.mxu0 %v2754
    %2868 = vmatprep.subr.mxu0 0.0
    %2869 = vmatpush1.msra.mxu0 %v2755
    %2870 = vmatprep.subr.mxu0 0.0
    %2871 = vmatpush1.msra.mxu0 %v2756
    %2872 = vmatprep.subr.mxu0 0.0
    %2873 = vmatpush1.msra.mxu0 %v2757
    %2874 = vmatprep.subr.mxu0 0.0
    %2875 = vmatpush1.msra.mxu0 %v2758
    %2876 = vmatprep.subr.mxu0 0.0
    %2877 = vmatpush1.msra.mxu0 %v2759
    %2878 = vmatprep.subr.mxu0 0.0
    %2879 = vmatpush1.msra.mxu0 0.0
    %2880 = vmatprep.subr.mxu0 0.0
    %2881 = vmatpush1.msra.mxu0 0.0
    %2882 = vmatprep.subr.mxu0 0.0
    %2883 = vmatpush1.msra.mxu0 0.0
    %2884 = vmatprep.subr.mxu0 0.0
    %2885 = vmatpush1.msra.mxu0 0.0
    %2886 = vmatprep.subr.mxu0 0.0
    %2887 = vmatpush1.msra.mxu0 0.0
    %2888 = vmatprep.subr.mxu0 0.0
    %2889 = vmatpush1.msra.mxu0 0.0
    %2890 = vmatprep.subr.mxu0 0.0
    %2891 = vmatpush1.msra.mxu0 0.0
    %2892 = vmatprep.subr.mxu0 0.0
    %2893 = vmatpush1.msra.mxu0 0.0
    %2894 = vmatprep.subr.mxu0 0.0
    %2895 = vmatpush1.msra.mxu0 0.0
    %2896 = vmatprep.subr.mxu0 0.0
    %2897 = vmatpush1.msra.mxu0 0.0
    %2898 = vmatprep.subr.mxu0 0.0
    %2899 = vmatpush1.msra.mxu0 0.0
    %2900 = vmatprep.subr.mxu0 0.0
    %2901 = vmatpush1.msra.mxu0 0.0
    %2902 = vmatprep.subr.mxu0 0.0
    %2903 = vmatpush1.msra.mxu0 0.0
    %2904 = vmatprep.subr.mxu0 0.0
    %2905 = vmatpush1.msra.mxu0 0.0
    %2906 = vmatprep.subr.mxu0 0.0
    %2907 = vmatpush1.msra.mxu0 0.0
    %2908 = vmatprep.subr.mxu0 0.0
    %2909 = vmatpush1.msra.mxu0 0.0
    %2910 = vmatprep.mubr.f32.mxu0 0.0
    %2911 = vmatmul.mubr.f32.gmra.mrb[0].mxu0 %v2739
    %v2912 = vpop.f32.mrb[0].mxu0
    %v2913 = vadd.f32 %v2843, %v2912
    %v2914 = vpop.f32.mrb[0].mxu0
    %2915 = vdwg.mxu0
    %v2916 = vld [vmem:[#allocation10] sm:$0x1]
    %v2918 = vlaneseq
    %v2919 = vshrl.u32 %v2918, 7
    %v2920 = vsub.s32 0, %v2919
    %v2921 = vrot.slane %v2916, %v2920
    %v2923 = vadd.f32 %v2913, %v2921
    %v2924 = vadd.f32 %v2734, %v2923
    %2925 = vst [vmem:[%s11] sm:$0xff] %v2924
    // Predicated region
    $region58: #{gpgraph_forward.1} parent=1 // pred_check
      _
    $region59: #{gpgraph_forward.1} parent=1 // pred_check_branch
      %2927 = sbr.rel (0) target = $region61
    $region60: #{gpgraph_forward.1} parent=1 // pred_region
      _
    $region61: #{gpgraph_forward.1} parent=1 // pred_fallthru
      _
    // Predicated region
    $region62: #{gpgraph_forward.1} parent=1 // pred_check
      _
    $region63: #{gpgraph_forward.1} parent=1 // pred_check_branch
      %2929 = sbr.rel (0) target = $region65
    $region64: #{gpgraph_forward.1} parent=1 // pred_region
      %s2931 = ssub.s32 16, 16
      %2932 = vsyncadd [#allocation7], %s2931
      %s2934 = sshll.u32 [#allocation11], 4
      %s2935 = int_to_ptr.vmem [resolvable:$true] %s2934
      %2937 = dma.vmem_to_hbm [thread:$0]  %s2935, 16, %s12, [#allocation7]
    $region65: #{gpgraph_forward.1} parent=1 // pred_fallthru
      _
    // Predicated region
    $region66: #{gpgraph_forward.1} parent=1 // pred_check
      _
    $region67: #{gpgraph_forward.1} parent=1 // pred_check_branch
      %2939 = sbr.rel (0) target = $region69
    $region68: #{gpgraph_forward.1} parent=1 // pred_region
      _
    $region69: #{gpgraph_forward.1} parent=1 // pred_fallthru
      _
    // Predicated region
    $region70: #{gpgraph_forward.1} parent=1 // pred_check
      _
    $region71: #{gpgraph_forward.1} parent=1 // pred_check_branch
      %2941 = sbr.rel (0) target = $region73
    $region72: #{gpgraph_forward.1} parent=1 // pred_region
      %2942 = dma.done [#allocation7], 16
    $region73: #{gpgraph_forward.1} parent=1 // pred_fallthru
      _
    %2943 = vsyncpa [#allocation6], 1
    %2944 = vsyncpa [#allocation9], 1
    %2945 = vsyncpa [#allocation7], 1

</llo_original>
